<compile_context>
chip_gen: v6e
topology: v6e:2x2x1
jax: 0.10.0
libtpu: 0.0.40
codegen_flags: <defaults>
</compile_context>

<pallas_src>
import numpy as np

import jax
import jax.numpy as jnp
from jax import lax
from jax.experimental import pallas as pl
from jax.experimental.pallas import tpu as pltpu  # noqa: F401  (TPU backend)

# Static network dimensions (GTSRBCNN expects 3x32x32 inputs -> 196 features).
C0, H0, W0 = 3, 32, 32           # input
C1, H1, W1 = 4, 15, 15           # after conv1 (3x3, stride 2, valid)
C2, H2, W2 = 4, 7, 7             # after conv2 (3x3, stride 2, valid)
KS = 3                           # conv kernel size
F_FC1, N_FC1 = H2 * W2 * C2, 20  # 196 -> 20
N_FC2 = 10                       # 20 -> 10


def gtsrb_fused_kernel(x_ref, s1_ref, m1_ref, b1_ref, s2_ref, m2_ref, b2_ref,
                       p_ref, v1_ref, bf1_ref, w2t_ref, bf2_ref, o_ref):
    """Whole GTSRBCNN forward on VMEM-resident operands (single grid step)."""
    f32 = jnp.float32
    x = x_ref[...]                                   # (N*C0*H0, W0)

    # conv1:  Y1[(n,oh),(ow,oc)] = sum_{i,c} (S1[i,c] @ X) @ M1[i,c] + B1
    y1 = None
    for t in range(KS * C0):                         # 9 static taps (kh x in_c)
        z = jnp.dot(s1_ref[t], x, preferred_element_type=f32)     # (N*H1, W0)
        term = jnp.dot(z, m1_ref[t], preferred_element_type=f32)  # (N*H1, W1*C1)
        y1 = term if y1 is None else y1 + term
    y1 = y1 + b1_ref[...]

    # conv2:  Y2[(n,oh),(ow,oc)] = sum_i (S2[i] @ Y1) @ M2[i] + B2
    y2 = None
    for t in range(KS):                              # 3 static taps (kh)
        z = jnp.dot(s2_ref[t], y1, preferred_element_type=f32)    # (N*H2, W1*C1)
        term = jnp.dot(z, m2_ref[t], preferred_element_type=f32)  # (N*H2, W2*C2)
        y2 = term if y2 is None else y2 + term
    y2 = y2 + b2_ref[...]

    # flatten(permute(0,2,3,1)) + fc1: contract over the 7 conv2 row blocks.
    h = None
    for r in range(H2):
        f = jnp.dot(p_ref[r], y2, preferred_element_type=f32)     # (N, W2*C2)
        term = jnp.dot(f, v1_ref[r], preferred_element_type=f32)  # (N, 20)
        h = term if h is None else h + term
    h = jnp.maximum(h + bf1_ref[...], 0.0)           # fc1 bias + ReLU

    out = jnp.dot(h, w2t_ref[...], preferred_element_type=f32) + bf2_ref[...]
    o_ref[...] = out.astype(o_ref.dtype)             # (N, 10)


def init_params(key):
    """PyTorch-style default init: U(-1/sqrt(fan_in), +1/sqrt(fan_in))."""
    ks = jax.random.split(key, 8)

    def u(k, shape, fan_in):
        bound = 1.0 / np.sqrt(float(fan_in))
        return jax.random.uniform(k, shape, jnp.float32, -bound, bound)

    return {
        "conv1_w": u(ks[0], (C1, C0, KS, KS), C0 * KS * KS),
        "conv1_b": u(ks[1], (C1,), C0 * KS * KS),
        "conv2_w": u(ks[2], (C2, C1, KS, KS), C1 * KS * KS),
        "conv2_b": u(ks[3], (C2,), C1 * KS * KS),
        "fc1_w": u(ks[4], (N_FC1, F_FC1), F_FC1),
        "fc1_b": u(ks[5], (N_FC1,), F_FC1),
        "fc2_w": u(ks[6], (N_FC2, N_FC1), N_FC1),
        "fc2_b": u(ks[7], (N_FC2,), N_FC1),
    }


def prepare_operands(params, batch):
    """One-time packing of the module's weights into the kernel operands."""
    n = batch
    w1, b1 = params["conv1_w"], params["conv1_b"]
    w2, b2 = params["conv2_w"], params["conv2_b"]
    wf1, bf1 = params["fc1_w"], params["fc1_b"]
    wf2, bf2 = params["fc2_w"], params["fc2_b"]

    # -------- data-independent 0/1 row selectors (batch + stride-2 rows) ----
    s1 = np.zeros((KS * C0, n * H1, n * C0 * H0), np.float32)
    for b in range(n):
        for oh in range(H1):
            for i in range(KS):
                for c in range(C0):
                    s1[i * C0 + c, b * H1 + oh,
                       b * C0 * H0 + c * H0 + 2 * oh + i] = 1.0

    s2 = np.zeros((KS, n * H2, n * H1), np.float32)
    for b in range(n):
        for oh in range(H2):
            for i in range(KS):
                s2[i, b * H2 + oh, b * H1 + 2 * oh + i] = 1.0

    p = np.zeros((H2, n, n * H2), np.float32)
    for oh in range(H2):
        for b in range(n):
            p[oh, b, b * H2 + oh] = 1.0

    # -------- conv weights as structured matrices (kw taps + stride cols) ---
    # M1[i*C0+c, 2*ow+j, ow*C1+oc] = w1[oc, c, i, j]
    i_, c_, j_, ow_, oc_ = np.meshgrid(np.arange(KS), np.arange(C0),
                                       np.arange(KS), np.arange(W1),
                                       np.arange(C1), indexing="ij")
    m1 = jnp.zeros((KS * C0, W0, W1 * C1), jnp.float32).at[
        (i_ * C0 + c_).ravel(), (2 * ow_ + j_).ravel(),
        (ow_ * C1 + oc_).ravel()].set(
        w1[oc_.ravel(), c_.ravel(), i_.ravel(), j_.ravel()])

    # M2[i, (2*ow+j)*C1+c, ow*C2+oc] = w2[oc, c, i, j]
    i_, j_, ow_, c_, oc_ = np.meshgrid(np.arange(KS), np.arange(KS),
                                       np.arange(W2), np.arange(C1),
                                       np.arange(C2), indexing="ij")
    m2 = jnp.zeros((KS, W1 * C1, W2 * C2), jnp.float32).at[
        i_.ravel(), ((2 * ow_ + j_) * C1 + c_).ravel(),
        (ow_ * C2 + oc_).ravel()].set(
        w2[oc_.ravel(), c_.ravel(), i_.ravel(), j_.ravel()])

    # Biases broadcast over the width axis of the row-matrix layout.
    bb1 = jnp.tile(b1, W1).reshape(1, W1 * C1)
    bb2 = jnp.tile(b2, W2).reshape(1, W2 * C2)

    # fc1 weight sliced per conv2 output row (flatten order is (h, w, c)).
    v1 = jnp.transpose(wf1.reshape(N_FC1, H2, W2 * C2), (1, 2, 0))  # (7,28,20)

    return {
        "s1": jnp.asarray(s1), "m1": m1, "b1": bb1,
        "s2": jnp.asarray(s2), "m2": m2, "b2": bb2,
        "p": jnp.asarray(p), "v1": v1,
        "bf1": bf1.reshape(1, N_FC1), "w2t": wf2.T,
        "bf2": bf2.reshape(1, N_FC2),
    }


def _full_vmem_spec(shape):
    # Full-array block (bypasses the (8,128) divisibility rule), grid-less.
    if len(shape) == 2:
        return pl.BlockSpec(shape, lambda: (0, 0))
    return pl.BlockSpec(shape, lambda: (0, 0, 0))


def gtsrb_cnn_forward(ops, x_nchw):
    n = x_nchw.shape[0]
    # (N, 3, 32, 32) -> (N*3*32, 32): pure metadata reshape, rows = (n, c, h).
    x2d = x_nchw.astype(jnp.float32).reshape(n * C0 * H0, W0)
    operands = (x2d, ops["s1"], ops["m1"], ops["b1"], ops["s2"], ops["m2"],
                ops["b2"], ops["p"], ops["v1"], ops["bf1"], ops["w2t"],
                ops["bf2"])
    return pl.pallas_call(
        gtsrb_fused_kernel,
        out_shape=jax.ShapeDtypeStruct((n, N_FC2), jnp.float32),
        in_specs=[_full_vmem_spec(tuple(op.shape)) for op in operands],
        out_specs=_full_vmem_spec((n, N_FC2)),
    )(*operands)


def gtsrb_cnn_reference(params, x_nchw):
    """Pure-JAX reference mirroring the PyTorch module (validation only)."""
    hi = lax.Precision.HIGHEST
    y = lax.conv_general_dilated(x_nchw, params["conv1_w"], (2, 2), "VALID",
                                 dimension_numbers=("NCHW", "OIHW", "NCHW"),
                                 precision=hi)
    y = y + params["conv1_b"].reshape(1, -1, 1, 1)
    y = lax.conv_general_dilated(y, params["conv2_w"], (2, 2), "VALID",
                                 dimension_numbers=("NCHW", "OIHW", "NCHW"),
                                 precision=hi)
    y = y + params["conv2_b"].reshape(1, -1, 1, 1)
    f = jnp.transpose(y, (0, 2, 3, 1)).reshape(y.shape[0], -1)   # (N, 196)
    h = jnp.maximum(jnp.dot(f, params["fc1_w"].T, precision=hi)
                    + params["fc1_b"], 0.0)
    return jnp.dot(h, params["fc2_w"].T, precision=hi) + params["fc2_b"]


if __name__ == "__main__":
    key = jax.random.PRNGKey(0)
    pkey, xkey = jax.random.split(key)
    params = init_params(pkey)
    x = jax.random.normal(xkey, (2, C0, H0, W0), jnp.float32)

    ops = prepare_operands(params, batch=x.shape[0])   # one-time weight packing
    out = gtsrb_cnn_forward(ops, x)
    jax.block_until_ready(out)
    assert out.shape == (2, N_FC2)

    ref = gtsrb_cnn_reference(params, x)
    max_diff = float(jnp.max(jnp.abs(out - ref)))
    assert jnp.allclose(out, ref, atol=2e-2, rtol=2e-2), max_diff
    print("KERNEL_OK")
</pallas_src>

<mosaic_0001>
module attributes {stable_mosaic.version = 11 : i64} {
  func.func @gtsrb_fused_kernel(%arg0: memref<192x32xf32, #tpu.memory_space<vmem>>, %arg1: memref<9x30x192xf32, #tpu.memory_space<vmem>>, %arg2: memref<9x32x60xf32, #tpu.memory_space<vmem>>, %arg3: memref<1x60xf32, #tpu.memory_space<vmem>>, %arg4: memref<3x14x30xf32, #tpu.memory_space<vmem>>, %arg5: memref<3x60x28xf32, #tpu.memory_space<vmem>>, %arg6: memref<1x28xf32, #tpu.memory_space<vmem>>, %arg7: memref<7x2x14xf32, #tpu.memory_space<vmem>>, %arg8: memref<7x28x20xf32, #tpu.memory_space<vmem>>, %arg9: memref<1x20xf32, #tpu.memory_space<vmem>>, %arg10: memref<20x10xf32, #tpu.memory_space<vmem>>, %arg11: memref<1x10xf32, #tpu.memory_space<vmem>>, %arg12: memref<2x10xf32, #tpu.memory_space<vmem>>) attributes {dimension_semantics = [], scalar_prefetch = 0 : i64, scratch_operands = 0 : i64, tpu.core_type = #tpu.core_type<tc>} {
    %c0 = arith.constant 0 : index
    %c0_0 = arith.constant 0 : index
    %0 = vector.load %arg0[%c0, %c0_0] : memref<192x32xf32, #tpu.memory_space<vmem>>, vector<192x32xf32>
    %c0_1 = arith.constant 0 : index
    %c0_2 = arith.constant 0 : index
    %c0_3 = arith.constant 0 : index
    %1 = vector.load %arg1[%c0_1, %c0_2, %c0_3] : memref<9x30x192xf32, #tpu.memory_space<vmem>>, vector<1x30x192xf32>
    %2 = vector.shape_cast %1 : vector<1x30x192xf32> to vector<30x192xf32>
    %cst = arith.constant dense<0.000000e+00> : vector<30x32xf32>
    %3 = tpu.matmul %2, %0, %cst {dimension_numbers = #tpu.dot_dimension_numbers<[1], [0], [0], [1], [0, 0, 1, 1], [], []>} : vector<30x192xf32>, vector<192x32xf32>, vector<30x32xf32> -> vector<30x32xf32>
    %c0_4 = arith.constant 0 : index
    %c0_5 = arith.constant 0 : index
    %c0_6 = arith.constant 0 : index
    %4 = vector.load %arg2[%c0_4, %c0_5, %c0_6] : memref<9x32x60xf32, #tpu.memory_space<vmem>>, vector<1x32x60xf32>
    %5 = vector.shape_cast %4 : vector<1x32x60xf32> to vector<32x60xf32>
    %cst_7 = arith.constant dense<0.000000e+00> : vector<30x60xf32>
    %6 = tpu.matmul %3, %5, %cst_7 {dimension_numbers = #tpu.dot_dimension_numbers<[1], [0], [0], [1], [0, 0, 1, 1], [], []>} : vector<30x32xf32>, vector<32x60xf32>, vector<30x60xf32> -> vector<30x60xf32>
    %c1 = arith.constant 1 : index
    %c0_8 = arith.constant 0 : index
    %c0_9 = arith.constant 0 : index
    %7 = vector.load %arg1[%c1, %c0_8, %c0_9] : memref<9x30x192xf32, #tpu.memory_space<vmem>>, vector<1x30x192xf32>
    %8 = vector.shape_cast %7 : vector<1x30x192xf32> to vector<30x192xf32>
    %cst_10 = arith.constant dense<0.000000e+00> : vector<30x32xf32>
    %9 = tpu.matmul %8, %0, %cst_10 {dimension_numbers = #tpu.dot_dimension_numbers<[1], [0], [0], [1], [0, 0, 1, 1], [], []>} : vector<30x192xf32>, vector<192x32xf32>, vector<30x32xf32> -> vector<30x32xf32>
    %c1_11 = arith.constant 1 : index
    %c0_12 = arith.constant 0 : index
    %c0_13 = arith.constant 0 : index
    %10 = vector.load %arg2[%c1_11, %c0_12, %c0_13] : memref<9x32x60xf32, #tpu.memory_space<vmem>>, vector<1x32x60xf32>
    %11 = vector.shape_cast %10 : vector<1x32x60xf32> to vector<32x60xf32>
    %cst_14 = arith.constant dense<0.000000e+00> : vector<30x60xf32>
    %12 = tpu.matmul %9, %11, %cst_14 {dimension_numbers = #tpu.dot_dimension_numbers<[1], [0], [0], [1], [0, 0, 1, 1], [], []>} : vector<30x32xf32>, vector<32x60xf32>, vector<30x60xf32> -> vector<30x60xf32>
    %13 = arith.addf %6, %12 : vector<30x60xf32>
    %c2 = arith.constant 2 : index
    %c0_15 = arith.constant 0 : index
    %c0_16 = arith.constant 0 : index
    %14 = vector.load %arg1[%c2, %c0_15, %c0_16] : memref<9x30x192xf32, #tpu.memory_space<vmem>>, vector<1x30x192xf32>
    %15 = vector.shape_cast %14 : vector<1x30x192xf32> to vector<30x192xf32>
    %cst_17 = arith.constant dense<0.000000e+00> : vector<30x32xf32>
    %16 = tpu.matmul %15, %0, %cst_17 {dimension_numbers = #tpu.dot_dimension_numbers<[1], [0], [0], [1], [0, 0, 1, 1], [], []>} : vector<30x192xf32>, vector<192x32xf32>, vector<30x32xf32> -> vector<30x32xf32>
    %c2_18 = arith.constant 2 : index
    %c0_19 = arith.constant 0 : index
    %c0_20 = arith.constant 0 : index
    %17 = vector.load %arg2[%c2_18, %c0_19, %c0_20] : memref<9x32x60xf32, #tpu.memory_space<vmem>>, vector<1x32x60xf32>
    %18 = vector.shape_cast %17 : vector<1x32x60xf32> to vector<32x60xf32>
    %cst_21 = arith.constant dense<0.000000e+00> : vector<30x60xf32>
    %19 = tpu.matmul %16, %18, %cst_21 {dimension_numbers = #tpu.dot_dimension_numbers<[1], [0], [0], [1], [0, 0, 1, 1], [], []>} : vector<30x32xf32>, vector<32x60xf32>, vector<30x60xf32> -> vector<30x60xf32>
    %20 = arith.addf %13, %19 : vector<30x60xf32>
    %c3 = arith.constant 3 : index
    %c0_22 = arith.constant 0 : index
    %c0_23 = arith.constant 0 : index
    %21 = vector.load %arg1[%c3, %c0_22, %c0_23] : memref<9x30x192xf32, #tpu.memory_space<vmem>>, vector<1x30x192xf32>
    %22 = vector.shape_cast %21 : vector<1x30x192xf32> to vector<30x192xf32>
    %cst_24 = arith.constant dense<0.000000e+00> : vector<30x32xf32>
    %23 = tpu.matmul %22, %0, %cst_24 {dimension_numbers = #tpu.dot_dimension_numbers<[1], [0], [0], [1], [0, 0, 1, 1], [], []>} : vector<30x192xf32>, vector<192x32xf32>, vector<30x32xf32> -> vector<30x32xf32>
    %c3_25 = arith.constant 3 : index
    %c0_26 = arith.constant 0 : index
    %c0_27 = arith.constant 0 : index
    %24 = vector.load %arg2[%c3_25, %c0_26, %c0_27] : memref<9x32x60xf32, #tpu.memory_space<vmem>>, vector<1x32x60xf32>
    %25 = vector.shape_cast %24 : vector<1x32x60xf32> to vector<32x60xf32>
    %cst_28 = arith.constant dense<0.000000e+00> : vector<30x60xf32>
    %26 = tpu.matmul %23, %25, %cst_28 {dimension_numbers = #tpu.dot_dimension_numbers<[1], [0], [0], [1], [0, 0, 1, 1], [], []>} : vector<30x32xf32>, vector<32x60xf32>, vector<30x60xf32> -> vector<30x60xf32>
    %27 = arith.addf %20, %26 : vector<30x60xf32>
    %c4 = arith.constant 4 : index
    %c0_29 = arith.constant 0 : index
    %c0_30 = arith.constant 0 : index
    %28 = vector.load %arg1[%c4, %c0_29, %c0_30] : memref<9x30x192xf32, #tpu.memory_space<vmem>>, vector<1x30x192xf32>
    %29 = vector.shape_cast %28 : vector<1x30x192xf32> to vector<30x192xf32>
    %cst_31 = arith.constant dense<0.000000e+00> : vector<30x32xf32>
    %30 = tpu.matmul %29, %0, %cst_31 {dimension_numbers = #tpu.dot_dimension_numbers<[1], [0], [0], [1], [0, 0, 1, 1], [], []>} : vector<30x192xf32>, vector<192x32xf32>, vector<30x32xf32> -> vector<30x32xf32>
    %c4_32 = arith.constant 4 : index
    %c0_33 = arith.constant 0 : index
    %c0_34 = arith.constant 0 : index
    %31 = vector.load %arg2[%c4_32, %c0_33, %c0_34] : memref<9x32x60xf32, #tpu.memory_space<vmem>>, vector<1x32x60xf32>
    %32 = vector.shape_cast %31 : vector<1x32x60xf32> to vector<32x60xf32>
    %cst_35 = arith.constant dense<0.000000e+00> : vector<30x60xf32>
    %33 = tpu.matmul %30, %32, %cst_35 {dimension_numbers = #tpu.dot_dimension_numbers<[1], [0], [0], [1], [0, 0, 1, 1], [], []>} : vector<30x32xf32>, vector<32x60xf32>, vector<30x60xf32> -> vector<30x60xf32>
    %34 = arith.addf %27, %33 : vector<30x60xf32>
    %c5 = arith.constant 5 : index
    %c0_36 = arith.constant 0 : index
    %c0_37 = arith.constant 0 : index
    %35 = vector.load %arg1[%c5, %c0_36, %c0_37] : memref<9x30x192xf32, #tpu.memory_space<vmem>>, vector<1x30x192xf32>
    %36 = vector.shape_cast %35 : vector<1x30x192xf32> to vector<30x192xf32>
    %cst_38 = arith.constant dense<0.000000e+00> : vector<30x32xf32>
    %37 = tpu.matmul %36, %0, %cst_38 {dimension_numbers = #tpu.dot_dimension_numbers<[1], [0], [0], [1], [0, 0, 1, 1], [], []>} : vector<30x192xf32>, vector<192x32xf32>, vector<30x32xf32> -> vector<30x32xf32>
    %c5_39 = arith.constant 5 : index
    %c0_40 = arith.constant 0 : index
    %c0_41 = arith.constant 0 : index
    %38 = vector.load %arg2[%c5_39, %c0_40, %c0_41] : memref<9x32x60xf32, #tpu.memory_space<vmem>>, vector<1x32x60xf32>
    %39 = vector.shape_cast %38 : vector<1x32x60xf32> to vector<32x60xf32>
    %cst_42 = arith.constant dense<0.000000e+00> : vector<30x60xf32>
    %40 = tpu.matmul %37, %39, %cst_42 {dimension_numbers = #tpu.dot_dimension_numbers<[1], [0], [0], [1], [0, 0, 1, 1], [], []>} : vector<30x32xf32>, vector<32x60xf32>, vector<30x60xf32> -> vector<30x60xf32>
    %41 = arith.addf %34, %40 : vector<30x60xf32>
    %c6 = arith.constant 6 : index
    %c0_43 = arith.constant 0 : index
    %c0_44 = arith.constant 0 : index
    %42 = vector.load %arg1[%c6, %c0_43, %c0_44] : memref<9x30x192xf32, #tpu.memory_space<vmem>>, vector<1x30x192xf32>
    %43 = vector.shape_cast %42 : vector<1x30x192xf32> to vector<30x192xf32>
    %cst_45 = arith.constant dense<0.000000e+00> : vector<30x32xf32>
    %44 = tpu.matmul %43, %0, %cst_45 {dimension_numbers = #tpu.dot_dimension_numbers<[1], [0], [0], [1], [0, 0, 1, 1], [], []>} : vector<30x192xf32>, vector<192x32xf32>, vector<30x32xf32> -> vector<30x32xf32>
    %c6_46 = arith.constant 6 : index
    %c0_47 = arith.constant 0 : index
    %c0_48 = arith.constant 0 : index
    %45 = vector.load %arg2[%c6_46, %c0_47, %c0_48] : memref<9x32x60xf32, #tpu.memory_space<vmem>>, vector<1x32x60xf32>
    %46 = vector.shape_cast %45 : vector<1x32x60xf32> to vector<32x60xf32>
    %cst_49 = arith.constant dense<0.000000e+00> : vector<30x60xf32>
    %47 = tpu.matmul %44, %46, %cst_49 {dimension_numbers = #tpu.dot_dimension_numbers<[1], [0], [0], [1], [0, 0, 1, 1], [], []>} : vector<30x32xf32>, vector<32x60xf32>, vector<30x60xf32> -> vector<30x60xf32>
    %48 = arith.addf %41, %47 : vector<30x60xf32>
    %c7 = arith.constant 7 : index
    %c0_50 = arith.constant 0 : index
    %c0_51 = arith.constant 0 : index
    %49 = vector.load %arg1[%c7, %c0_50, %c0_51] : memref<9x30x192xf32, #tpu.memory_space<vmem>>, vector<1x30x192xf32>
    %50 = vector.shape_cast %49 : vector<1x30x192xf32> to vector<30x192xf32>
    %cst_52 = arith.constant dense<0.000000e+00> : vector<30x32xf32>
    %51 = tpu.matmul %50, %0, %cst_52 {dimension_numbers = #tpu.dot_dimension_numbers<[1], [0], [0], [1], [0, 0, 1, 1], [], []>} : vector<30x192xf32>, vector<192x32xf32>, vector<30x32xf32> -> vector<30x32xf32>
    %c7_53 = arith.constant 7 : index
    %c0_54 = arith.constant 0 : index
    %c0_55 = arith.constant 0 : index
    %52 = vector.load %arg2[%c7_53, %c0_54, %c0_55] : memref<9x32x60xf32, #tpu.memory_space<vmem>>, vector<1x32x60xf32>
    %53 = vector.shape_cast %52 : vector<1x32x60xf32> to vector<32x60xf32>
    %cst_56 = arith.constant dense<0.000000e+00> : vector<30x60xf32>
    %54 = tpu.matmul %51, %53, %cst_56 {dimension_numbers = #tpu.dot_dimension_numbers<[1], [0], [0], [1], [0, 0, 1, 1], [], []>} : vector<30x32xf32>, vector<32x60xf32>, vector<30x60xf32> -> vector<30x60xf32>
    %55 = arith.addf %48, %54 : vector<30x60xf32>
    %c8 = arith.constant 8 : index
    %c0_57 = arith.constant 0 : index
    %c0_58 = arith.constant 0 : index
    %56 = vector.load %arg1[%c8, %c0_57, %c0_58] : memref<9x30x192xf32, #tpu.memory_space<vmem>>, vector<1x30x192xf32>
    %57 = vector.shape_cast %56 : vector<1x30x192xf32> to vector<30x192xf32>
    %cst_59 = arith.constant dense<0.000000e+00> : vector<30x32xf32>
    %58 = tpu.matmul %57, %0, %cst_59 {dimension_numbers = #tpu.dot_dimension_numbers<[1], [0], [0], [1], [0, 0, 1, 1], [], []>} : vector<30x192xf32>, vector<192x32xf32>, vector<30x32xf32> -> vector<30x32xf32>
    %c8_60 = arith.constant 8 : index
    %c0_61 = arith.constant 0 : index
    %c0_62 = arith.constant 0 : index
    %59 = vector.load %arg2[%c8_60, %c0_61, %c0_62] : memref<9x32x60xf32, #tpu.memory_space<vmem>>, vector<1x32x60xf32>
    %60 = vector.shape_cast %59 : vector<1x32x60xf32> to vector<32x60xf32>
    %cst_63 = arith.constant dense<0.000000e+00> : vector<30x60xf32>
    %61 = tpu.matmul %58, %60, %cst_63 {dimension_numbers = #tpu.dot_dimension_numbers<[1], [0], [0], [1], [0, 0, 1, 1], [], []>} : vector<30x32xf32>, vector<32x60xf32>, vector<30x60xf32> -> vector<30x60xf32>
    %62 = arith.addf %55, %61 : vector<30x60xf32>
    %c0_64 = arith.constant 0 : index
    %c0_65 = arith.constant 0 : index
    %63 = vector.load %arg3[%c0_64, %c0_65] : memref<1x60xf32, #tpu.memory_space<vmem>>, vector<1x60xf32>
    %64 = vector.broadcast %63 : vector<1x60xf32> to vector<30x60xf32>
    %65 = arith.addf %62, %64 : vector<30x60xf32>
    %c0_66 = arith.constant 0 : index
    %c0_67 = arith.constant 0 : index
    %c0_68 = arith.constant 0 : index
    %66 = vector.load %arg4[%c0_66, %c0_67, %c0_68] : memref<3x14x30xf32, #tpu.memory_space<vmem>>, vector<1x14x30xf32>
    %67 = vector.shape_cast %66 : vector<1x14x30xf32> to vector<14x30xf32>
    %cst_69 = arith.constant dense<0.000000e+00> : vector<14x60xf32>
    %68 = tpu.matmul %67, %65, %cst_69 {dimension_numbers = #tpu.dot_dimension_numbers<[1], [0], [0], [1], [0, 0, 1, 1], [], []>} : vector<14x30xf32>, vector<30x60xf32>, vector<14x60xf32> -> vector<14x60xf32>
    %c0_70 = arith.constant 0 : index
    %c0_71 = arith.constant 0 : index
    %c0_72 = arith.constant 0 : index
    %69 = vector.load %arg5[%c0_70, %c0_71, %c0_72] : memref<3x60x28xf32, #tpu.memory_space<vmem>>, vector<1x60x28xf32>
    %70 = vector.shape_cast %69 : vector<1x60x28xf32> to vector<60x28xf32>
    %cst_73 = arith.constant dense<0.000000e+00> : vector<14x28xf32>
    %71 = tpu.matmul %68, %70, %cst_73 {dimension_numbers = #tpu.dot_dimension_numbers<[1], [0], [0], [1], [0, 0, 1, 1], [], []>} : vector<14x60xf32>, vector<60x28xf32>, vector<14x28xf32> -> vector<14x28xf32>
    %c1_74 = arith.constant 1 : index
    %c0_75 = arith.constant 0 : index
    %c0_76 = arith.constant 0 : index
    %72 = vector.load %arg4[%c1_74, %c0_75, %c0_76] : memref<3x14x30xf32, #tpu.memory_space<vmem>>, vector<1x14x30xf32>
    %73 = vector.shape_cast %72 : vector<1x14x30xf32> to vector<14x30xf32>
    %cst_77 = arith.constant dense<0.000000e+00> : vector<14x60xf32>
    %74 = tpu.matmul %73, %65, %cst_77 {dimension_numbers = #tpu.dot_dimension_numbers<[1], [0], [0], [1], [0, 0, 1, 1], [], []>} : vector<14x30xf32>, vector<30x60xf32>, vector<14x60xf32> -> vector<14x60xf32>
    %c1_78 = arith.constant 1 : index
    %c0_79 = arith.constant 0 : index
    %c0_80 = arith.constant 0 : index
    %75 = vector.load %arg5[%c1_78, %c0_79, %c0_80] : memref<3x60x28xf32, #tpu.memory_space<vmem>>, vector<1x60x28xf32>
    %76 = vector.shape_cast %75 : vector<1x60x28xf32> to vector<60x28xf32>
    %cst_81 = arith.constant dense<0.000000e+00> : vector<14x28xf32>
    %77 = tpu.matmul %74, %76, %cst_81 {dimension_numbers = #tpu.dot_dimension_numbers<[1], [0], [0], [1], [0, 0, 1, 1], [], []>} : vector<14x60xf32>, vector<60x28xf32>, vector<14x28xf32> -> vector<14x28xf32>
    %78 = arith.addf %71, %77 : vector<14x28xf32>
    %c2_82 = arith.constant 2 : index
    %c0_83 = arith.constant 0 : index
    %c0_84 = arith.constant 0 : index
    %79 = vector.load %arg4[%c2_82, %c0_83, %c0_84] : memref<3x14x30xf32, #tpu.memory_space<vmem>>, vector<1x14x30xf32>
    %80 = vector.shape_cast %79 : vector<1x14x30xf32> to vector<14x30xf32>
    %cst_85 = arith.constant dense<0.000000e+00> : vector<14x60xf32>
    %81 = tpu.matmul %80, %65, %cst_85 {dimension_numbers = #tpu.dot_dimension_numbers<[1], [0], [0], [1], [0, 0, 1, 1], [], []>} : vector<14x30xf32>, vector<30x60xf32>, vector<14x60xf32> -> vector<14x60xf32>
    %c2_86 = arith.constant 2 : index
    %c0_87 = arith.constant 0 : index
    %c0_88 = arith.constant 0 : index
    %82 = vector.load %arg5[%c2_86, %c0_87, %c0_88] : memref<3x60x28xf32, #tpu.memory_space<vmem>>, vector<1x60x28xf32>
    %83 = vector.shape_cast %82 : vector<1x60x28xf32> to vector<60x28xf32>
    %cst_89 = arith.constant dense<0.000000e+00> : vector<14x28xf32>
    %84 = tpu.matmul %81, %83, %cst_89 {dimension_numbers = #tpu.dot_dimension_numbers<[1], [0], [0], [1], [0, 0, 1, 1], [], []>} : vector<14x60xf32>, vector<60x28xf32>, vector<14x28xf32> -> vector<14x28xf32>
    %85 = arith.addf %78, %84 : vector<14x28xf32>
    %c0_90 = arith.constant 0 : index
    %c0_91 = arith.constant 0 : index
    %86 = vector.load %arg6[%c0_90, %c0_91] : memref<1x28xf32, #tpu.memory_space<vmem>>, vector<1x28xf32>
    %87 = vector.broadcast %86 : vector<1x28xf32> to vector<14x28xf32>
    %88 = arith.addf %85, %87 : vector<14x28xf32>
    %c0_92 = arith.constant 0 : index
    %c0_93 = arith.constant 0 : index
    %c0_94 = arith.constant 0 : index
    %89 = vector.load %arg7[%c0_92, %c0_93, %c0_94] : memref<7x2x14xf32, #tpu.memory_space<vmem>>, vector<1x2x14xf32>
    %90 = vector.shape_cast %89 : vector<1x2x14xf32> to vector<2x14xf32>
    %cst_95 = arith.constant dense<0.000000e+00> : vector<2x28xf32>
    %91 = tpu.matmul %90, %88, %cst_95 {dimension_numbers = #tpu.dot_dimension_numbers<[1], [0], [0], [1], [0, 0, 1, 1], [], []>} : vector<2x14xf32>, vector<14x28xf32>, vector<2x28xf32> -> vector<2x28xf32>
    %c0_96 = arith.constant 0 : index
    %c0_97 = arith.constant 0 : index
    %c0_98 = arith.constant 0 : index
    %92 = vector.load %arg8[%c0_96, %c0_97, %c0_98] : memref<7x28x20xf32, #tpu.memory_space<vmem>>, vector<1x28x20xf32>
    %93 = vector.shape_cast %92 : vector<1x28x20xf32> to vector<28x20xf32>
    %cst_99 = arith.constant dense<0.000000e+00> : vector<2x20xf32>
    %94 = tpu.matmul %91, %93, %cst_99 {dimension_numbers = #tpu.dot_dimension_numbers<[1], [0], [0], [1], [0, 0, 1, 1], [], []>} : vector<2x28xf32>, vector<28x20xf32>, vector<2x20xf32> -> vector<2x20xf32>
    %c1_100 = arith.constant 1 : index
    %c0_101 = arith.constant 0 : index
    %c0_102 = arith.constant 0 : index
    %95 = vector.load %arg7[%c1_100, %c0_101, %c0_102] : memref<7x2x14xf32, #tpu.memory_space<vmem>>, vector<1x2x14xf32>
    %96 = vector.shape_cast %95 : vector<1x2x14xf32> to vector<2x14xf32>
    %cst_103 = arith.constant dense<0.000000e+00> : vector<2x28xf32>
    %97 = tpu.matmul %96, %88, %cst_103 {dimension_numbers = #tpu.dot_dimension_numbers<[1], [0], [0], [1], [0, 0, 1, 1], [], []>} : vector<2x14xf32>, vector<14x28xf32>, vector<2x28xf32> -> vector<2x28xf32>
    %c1_104 = arith.constant 1 : index
    %c0_105 = arith.constant 0 : index
    %c0_106 = arith.constant 0 : index
    %98 = vector.load %arg8[%c1_104, %c0_105, %c0_106] : memref<7x28x20xf32, #tpu.memory_space<vmem>>, vector<1x28x20xf32>
    %99 = vector.shape_cast %98 : vector<1x28x20xf32> to vector<28x20xf32>
    %cst_107 = arith.constant dense<0.000000e+00> : vector<2x20xf32>
    %100 = tpu.matmul %97, %99, %cst_107 {dimension_numbers = #tpu.dot_dimension_numbers<[1], [0], [0], [1], [0, 0, 1, 1], [], []>} : vector<2x28xf32>, vector<28x20xf32>, vector<2x20xf32> -> vector<2x20xf32>
    %101 = arith.addf %94, %100 : vector<2x20xf32>
    %c2_108 = arith.constant 2 : index
    %c0_109 = arith.constant 0 : index
    %c0_110 = arith.constant 0 : index
    %102 = vector.load %arg7[%c2_108, %c0_109, %c0_110] : memref<7x2x14xf32, #tpu.memory_space<vmem>>, vector<1x2x14xf32>
    %103 = vector.shape_cast %102 : vector<1x2x14xf32> to vector<2x14xf32>
    %cst_111 = arith.constant dense<0.000000e+00> : vector<2x28xf32>
    %104 = tpu.matmul %103, %88, %cst_111 {dimension_numbers = #tpu.dot_dimension_numbers<[1], [0], [0], [1], [0, 0, 1, 1], [], []>} : vector<2x14xf32>, vector<14x28xf32>, vector<2x28xf32> -> vector<2x28xf32>
    %c2_112 = arith.constant 2 : index
    %c0_113 = arith.constant 0 : index
    %c0_114 = arith.constant 0 : index
    %105 = vector.load %arg8[%c2_112, %c0_113, %c0_114] : memref<7x28x20xf32, #tpu.memory_space<vmem>>, vector<1x28x20xf32>
    %106 = vector.shape_cast %105 : vector<1x28x20xf32> to vector<28x20xf32>
    %cst_115 = arith.constant dense<0.000000e+00> : vector<2x20xf32>
    %107 = tpu.matmul %104, %106, %cst_115 {dimension_numbers = #tpu.dot_dimension_numbers<[1], [0], [0], [1], [0, 0, 1, 1], [], []>} : vector<2x28xf32>, vector<28x20xf32>, vector<2x20xf32> -> vector<2x20xf32>
    %108 = arith.addf %101, %107 : vector<2x20xf32>
    %c3_116 = arith.constant 3 : index
    %c0_117 = arith.constant 0 : index
    %c0_118 = arith.constant 0 : index
    %109 = vector.load %arg7[%c3_116, %c0_117, %c0_118] : memref<7x2x14xf32, #tpu.memory_space<vmem>>, vector<1x2x14xf32>
    %110 = vector.shape_cast %109 : vector<1x2x14xf32> to vector<2x14xf32>
    %cst_119 = arith.constant dense<0.000000e+00> : vector<2x28xf32>
    %111 = tpu.matmul %110, %88, %cst_119 {dimension_numbers = #tpu.dot_dimension_numbers<[1], [0], [0], [1], [0, 0, 1, 1], [], []>} : vector<2x14xf32>, vector<14x28xf32>, vector<2x28xf32> -> vector<2x28xf32>
    %c3_120 = arith.constant 3 : index
    %c0_121 = arith.constant 0 : index
    %c0_122 = arith.constant 0 : index
    %112 = vector.load %arg8[%c3_120, %c0_121, %c0_122] : memref<7x28x20xf32, #tpu.memory_space<vmem>>, vector<1x28x20xf32>
    %113 = vector.shape_cast %112 : vector<1x28x20xf32> to vector<28x20xf32>
    %cst_123 = arith.constant dense<0.000000e+00> : vector<2x20xf32>
    %114 = tpu.matmul %111, %113, %cst_123 {dimension_numbers = #tpu.dot_dimension_numbers<[1], [0], [0], [1], [0, 0, 1, 1], [], []>} : vector<2x28xf32>, vector<28x20xf32>, vector<2x20xf32> -> vector<2x20xf32>
    %115 = arith.addf %108, %114 : vector<2x20xf32>
    %c4_124 = arith.constant 4 : index
    %c0_125 = arith.constant 0 : index
    %c0_126 = arith.constant 0 : index
    %116 = vector.load %arg7[%c4_124, %c0_125, %c0_126] : memref<7x2x14xf32, #tpu.memory_space<vmem>>, vector<1x2x14xf32>
    %117 = vector.shape_cast %116 : vector<1x2x14xf32> to vector<2x14xf32>
    %cst_127 = arith.constant dense<0.000000e+00> : vector<2x28xf32>
    %118 = tpu.matmul %117, %88, %cst_127 {dimension_numbers = #tpu.dot_dimension_numbers<[1], [0], [0], [1], [0, 0, 1, 1], [], []>} : vector<2x14xf32>, vector<14x28xf32>, vector<2x28xf32> -> vector<2x28xf32>
    %c4_128 = arith.constant 4 : index
    %c0_129 = arith.constant 0 : index
    %c0_130 = arith.constant 0 : index
    %119 = vector.load %arg8[%c4_128, %c0_129, %c0_130] : memref<7x28x20xf32, #tpu.memory_space<vmem>>, vector<1x28x20xf32>
    %120 = vector.shape_cast %119 : vector<1x28x20xf32> to vector<28x20xf32>
    %cst_131 = arith.constant dense<0.000000e+00> : vector<2x20xf32>
    %121 = tpu.matmul %118, %120, %cst_131 {dimension_numbers = #tpu.dot_dimension_numbers<[1], [0], [0], [1], [0, 0, 1, 1], [], []>} : vector<2x28xf32>, vector<28x20xf32>, vector<2x20xf32> -> vector<2x20xf32>
    %122 = arith.addf %115, %121 : vector<2x20xf32>
    %c5_132 = arith.constant 5 : index
    %c0_133 = arith.constant 0 : index
    %c0_134 = arith.constant 0 : index
    %123 = vector.load %arg7[%c5_132, %c0_133, %c0_134] : memref<7x2x14xf32, #tpu.memory_space<vmem>>, vector<1x2x14xf32>
    %124 = vector.shape_cast %123 : vector<1x2x14xf32> to vector<2x14xf32>
    %cst_135 = arith.constant dense<0.000000e+00> : vector<2x28xf32>
    %125 = tpu.matmul %124, %88, %cst_135 {dimension_numbers = #tpu.dot_dimension_numbers<[1], [0], [0], [1], [0, 0, 1, 1], [], []>} : vector<2x14xf32>, vector<14x28xf32>, vector<2x28xf32> -> vector<2x28xf32>
    %c5_136 = arith.constant 5 : index
    %c0_137 = arith.constant 0 : index
    %c0_138 = arith.constant 0 : index
    %126 = vector.load %arg8[%c5_136, %c0_137, %c0_138] : memref<7x28x20xf32, #tpu.memory_space<vmem>>, vector<1x28x20xf32>
    %127 = vector.shape_cast %126 : vector<1x28x20xf32> to vector<28x20xf32>
    %cst_139 = arith.constant dense<0.000000e+00> : vector<2x20xf32>
    %128 = tpu.matmul %125, %127, %cst_139 {dimension_numbers = #tpu.dot_dimension_numbers<[1], [0], [0], [1], [0, 0, 1, 1], [], []>} : vector<2x28xf32>, vector<28x20xf32>, vector<2x20xf32> -> vector<2x20xf32>
    %129 = arith.addf %122, %128 : vector<2x20xf32>
    %c6_140 = arith.constant 6 : index
    %c0_141 = arith.constant 0 : index
    %c0_142 = arith.constant 0 : index
    %130 = vector.load %arg7[%c6_140, %c0_141, %c0_142] : memref<7x2x14xf32, #tpu.memory_space<vmem>>, vector<1x2x14xf32>
    %131 = vector.shape_cast %130 : vector<1x2x14xf32> to vector<2x14xf32>
    %cst_143 = arith.constant dense<0.000000e+00> : vector<2x28xf32>
    %132 = tpu.matmul %131, %88, %cst_143 {dimension_numbers = #tpu.dot_dimension_numbers<[1], [0], [0], [1], [0, 0, 1, 1], [], []>} : vector<2x14xf32>, vector<14x28xf32>, vector<2x28xf32> -> vector<2x28xf32>
    %c6_144 = arith.constant 6 : index
    %c0_145 = arith.constant 0 : index
    %c0_146 = arith.constant 0 : index
    %133 = vector.load %arg8[%c6_144, %c0_145, %c0_146] : memref<7x28x20xf32, #tpu.memory_space<vmem>>, vector<1x28x20xf32>
    %134 = vector.shape_cast %133 : vector<1x28x20xf32> to vector<28x20xf32>
    %cst_147 = arith.constant dense<0.000000e+00> : vector<2x20xf32>
    %135 = tpu.matmul %132, %134, %cst_147 {dimension_numbers = #tpu.dot_dimension_numbers<[1], [0], [0], [1], [0, 0, 1, 1], [], []>} : vector<2x28xf32>, vector<28x20xf32>, vector<2x20xf32> -> vector<2x20xf32>
    %136 = arith.addf %129, %135 : vector<2x20xf32>
    %c0_148 = arith.constant 0 : index
    %c0_149 = arith.constant 0 : index
    %137 = vector.load %arg9[%c0_148, %c0_149] : memref<1x20xf32, #tpu.memory_space<vmem>>, vector<1x20xf32>
    %138 = vector.broadcast %137 : vector<1x20xf32> to vector<2x20xf32>
    %139 = arith.addf %136, %138 : vector<2x20xf32>
    %cst_150 = arith.constant 0.000000e+00 : f32
    %140 = vector.broadcast %cst_150 : f32 to vector<2x20xf32>
    %141 = arith.maximumf %139, %140 : vector<2x20xf32>
    %c0_151 = arith.constant 0 : index
    %c0_152 = arith.constant 0 : index
    %142 = vector.load %arg10[%c0_151, %c0_152] : memref<20x10xf32, #tpu.memory_space<vmem>>, vector<20x10xf32>
    %cst_153 = arith.constant dense<0.000000e+00> : vector<2x10xf32>
    %143 = tpu.matmul %141, %142, %cst_153 {dimension_numbers = #tpu.dot_dimension_numbers<[1], [0], [0], [1], [0, 0, 1, 1], [], []>} : vector<2x20xf32>, vector<20x10xf32>, vector<2x10xf32> -> vector<2x10xf32>
    %c0_154 = arith.constant 0 : index
    %c0_155 = arith.constant 0 : index
    %144 = vector.load %arg11[%c0_154, %c0_155] : memref<1x10xf32, #tpu.memory_space<vmem>>, vector<1x10xf32>
    %145 = vector.broadcast %144 : vector<1x10xf32> to vector<2x10xf32>
    %146 = arith.addf %143, %145 : vector<2x10xf32>
    %c0_156 = arith.constant 0 : index
    %c0_157 = arith.constant 0 : index
    %147 = vector.load %arg12[%c0_156, %c0_157] : memref<2x10xf32, #tpu.memory_space<vmem>>, vector<2x10xf32>
    tpu.vector_store %arg12[%c0_156, %c0_157], %146 {strides = array<i32>} : memref<2x10xf32, #tpu.memory_space<vmem>>, vector<2x10xf32>,
    return
  }
}

</mosaic_0001>

<llo_original>
// kernel: tpu_custom_call.1
$region0: #{tpu_custom_call.1}
  #allocation0 [shape = 'u32[]', space=smem, size = 0x4, offset = 0x4, fixed_abs, tag = 'smem constant byte address 0x4 - core index']
  #allocation1 [shape = 'u32[144,128]{1,0:T(1,128)}', space=vmem, size = 0x12000, scoped, tag = 'internal scratch']
  %s0 = inlined_call_operand.vmem [shape: f32[192,32], index: 0, kind: input, shape index: {}]
  %s1 = inlined_call_operand.vmem [shape: f32[9,30,192], index: 1, kind: input, shape index: {}]
  %s2 = inlined_call_operand.vmem [shape: f32[9,32,60], index: 2, kind: input, shape index: {}]
  %s3 = inlined_call_operand.vmem [shape: f32[1,60], index: 3, kind: input, shape index: {}]
  %s4 = inlined_call_operand.hbm [shape: f32[3,14,30], index: 4, kind: input, shape index: {}]
  %s5 = inlined_call_operand.vmem [shape: f32[3,60,28], index: 5, kind: input, shape index: {}]
  %s6 = inlined_call_operand.vmem [shape: f32[1,28], index: 6, kind: input, shape index: {}]
  %s7 = inlined_call_operand.hbm [shape: f32[7,2,14], index: 7, kind: input, shape index: {}]
  %s8 = inlined_call_operand.vmem [shape: f32[7,28,20], index: 8, kind: input, shape index: {}]
  %s9 = inlined_call_operand.vmem [shape: f32[1,20], index: 9, kind: input, shape index: {}]
  %s10 = inlined_call_operand.vmem [shape: f32[20,10], index: 10, kind: input, shape index: {}]
  %s11 = inlined_call_operand.vmem [shape: f32[1,10], index: 11, kind: input, shape index: {}]
  %s12 = inlined_call_operand.hbm [shape: f32[2,10], index: 12, kind: output, shape index: {}]
  %s13 = sld [smem:[#allocation0]]
  $region66: #{tpu_custom_call.1} parent=0
    _
  %s15 = ssub.s32 1, %s13
  %s16 = scalar_select 0, %s15, %s13
  $region1: #{tpu_custom_call.1} parent=0
    #allocation2 [shape = 'u8[24576]{0}', space=vmem, size = 0x6000, scoped, tag = 'input window, operand 4, single buffered']
    #allocation3 [shape = 's32[1]{0}', space=sflag, size = 0x4, scoped, tag = 'scoped memory for tpu_custom_call.1']
    #allocation4 [shape = 's32[1]{0}', space=sflag, size = 0x4, scoped, tag = 'scoped memory for tpu_custom_call.1']
    #allocation5 [shape = 'u8[7168]{0}', space=vmem, size = 0x1c00, scoped, tag = 'input window, operand 7, single buffered']
    #allocation6 [shape = 's32[1]{0}', space=sflag, size = 0x4, scoped, tag = 'scoped memory for tpu_custom_call.1']
    #allocation7 [shape = 'u8[1024]{0}', space=vmem, size = 0x400, scoped, tag = 'output window, operand 0, single buffered']
    %17 = vsyncpa [#allocation3], 0
    %18 = vsyncpa [#allocation6], 0
    %19 = vsyncpa [#allocation4], 0
    // Predicated region
    $region2: #{tpu_custom_call.1} parent=1 // pred_check
      _
    $region3: #{tpu_custom_call.1} parent=1 // pred_check_branch
      %21 = sbr.rel (0) target = $region5
    $region4: #{tpu_custom_call.1} parent=1 // pred_region
      _
    $region5: #{tpu_custom_call.1} parent=1 // pred_fallthru
      _
    // Predicated region
    $region6: #{tpu_custom_call.1} parent=1 // pred_check
      _
    $region7: #{tpu_custom_call.1} parent=1 // pred_check_branch
      %23 = sbr.rel (0) target = $region9
    $region8: #{tpu_custom_call.1} parent=1 // pred_region
      _
    $region9: #{tpu_custom_call.1} parent=1 // pred_fallthru
      _
    // Predicated region
    $region10: #{tpu_custom_call.1} parent=1 // pred_check
      _
    $region11: #{tpu_custom_call.1} parent=1 // pred_check_branch
      %25 = sbr.rel (0) target = $region13
    $region12: #{tpu_custom_call.1} parent=1 // pred_region
      _
    $region13: #{tpu_custom_call.1} parent=1 // pred_fallthru
      _
    // Predicated region
    $region14: #{tpu_custom_call.1} parent=1 // pred_check
      _
    $region15: #{tpu_custom_call.1} parent=1 // pred_check_branch
      %27 = sbr.rel (0) target = $region17
    $region16: #{tpu_custom_call.1} parent=1 // pred_region
      _
    $region17: #{tpu_custom_call.1} parent=1 // pred_fallthru
      _
    // Predicated region
    $region18: #{tpu_custom_call.1} parent=1 // pred_check
      _
    $region19: #{tpu_custom_call.1} parent=1 // pred_check_branch
      %29 = sbr.rel (0) target = $region21
    $region20: #{tpu_custom_call.1} parent=1 // pred_region
      %s31 = ssub.s32 768, 768
      %32 = vsyncadd [#allocation3], %s31
      %s33 = sshll.u32 [#allocation2], 4
      %s34 = int_to_ptr.vmem [resolvable:$true] %s33
      %39 = dma.hbm_to_vmem [thread:$0]  %s4, 768, %s34, [#allocation3], 128, 128, 8
    $region21: #{tpu_custom_call.1} parent=1 // pred_fallthru
      _
    // Predicated region
    $region22: #{tpu_custom_call.1} parent=1 // pred_check
      _
    $region23: #{tpu_custom_call.1} parent=1 // pred_check_branch
      %41 = sbr.rel (0) target = $region25
    $region24: #{tpu_custom_call.1} parent=1 // pred_region
      _
    $region25: #{tpu_custom_call.1} parent=1 // pred_fallthru
      _
    // Predicated region
    $region26: #{tpu_custom_call.1} parent=1 // pred_check
      _
    $region27: #{tpu_custom_call.1} parent=1 // pred_check_branch
      %43 = sbr.rel (0) target = $region29
    $region28: #{tpu_custom_call.1} parent=1 // pred_region
      _
    $region29: #{tpu_custom_call.1} parent=1 // pred_fallthru
      _
    // Predicated region
    $region30: #{tpu_custom_call.1} parent=1 // pred_check
      _
    $region31: #{tpu_custom_call.1} parent=1 // pred_check_branch
      %45 = sbr.rel (0) target = $region33
    $region32: #{tpu_custom_call.1} parent=1 // pred_region
      %s47 = ssub.s32 224, 224
      %48 = vsyncadd [#allocation6], %s47
      %s49 = sshll.u32 [#allocation5], 4
      %s50 = int_to_ptr.vmem [resolvable:$true] %s49
      %55 = dma.hbm_to_vmem [thread:$0]  %s7, 224, %s50, [#allocation6], 32, 32, 2
    $region33: #{tpu_custom_call.1} parent=1 // pred_fallthru
      _
    // Predicated region
    $region34: #{tpu_custom_call.1} parent=1 // pred_check
      _
    $region35: #{tpu_custom_call.1} parent=1 // pred_check_branch
      %57 = sbr.rel (0) target = $region37
    $region36: #{tpu_custom_call.1} parent=1 // pred_region
      _
    $region37: #{tpu_custom_call.1} parent=1 // pred_fallthru
      _
    // Predicated region
    $region38: #{tpu_custom_call.1} parent=1 // pred_check
      _
    $region39: #{tpu_custom_call.1} parent=1 // pred_check_branch
      %59 = sbr.rel (0) target = $region41
    $region40: #{tpu_custom_call.1} parent=1 // pred_region
      _
    $region41: #{tpu_custom_call.1} parent=1 // pred_fallthru
      _
    // Predicated region
    $region42: #{tpu_custom_call.1} parent=1 // pred_check
      _
    $region43: #{tpu_custom_call.1} parent=1 // pred_check_branch
      %61 = sbr.rel (0) target = $region45
    $region44: #{tpu_custom_call.1} parent=1 // pred_region
      _
    $region45: #{tpu_custom_call.1} parent=1 // pred_fallthru
      _
    // Predicated region
    $region46: #{tpu_custom_call.1} parent=1 // pred_check
      _
    $region47: #{tpu_custom_call.1} parent=1 // pred_check_branch
      %63 = sbr.rel (0) target = $region49
    $region48: #{tpu_custom_call.1} parent=1 // pred_region
      _
    $region49: #{tpu_custom_call.1} parent=1 // pred_fallthru
      _
    // Predicated region
    $region50: #{tpu_custom_call.1} parent=1 // pred_check
      _
    $region51: #{tpu_custom_call.1} parent=1 // pred_check_branch
      %65 = sbr.rel (0) target = $region53
    $region52: #{tpu_custom_call.1} parent=1 // pred_region
      %66 = dma.done [#allocation3], 768
    $region53: #{tpu_custom_call.1} parent=1 // pred_fallthru
      _
    // Predicated region
    $region54: #{tpu_custom_call.1} parent=1 // pred_check
      _
    $region55: #{tpu_custom_call.1} parent=1 // pred_check_branch
      %68 = sbr.rel (0) target = $region57
    $region56: #{tpu_custom_call.1} parent=1 // pred_region
      %69 = dma.done [#allocation6], 224
    $region57: #{tpu_custom_call.1} parent=1 // pred_fallthru
      _
    %v70 = vld [vmem:[%s0] sm:$0xff]
    %v71 = vld [vmem:[%s0 + $0x8] sm:$0xff]
    %v72 = vld [vmem:[%s0 + $0x10] sm:$0xff]
    %v73 = vld [vmem:[%s0 + $0x18] sm:$0xff]
    %v74 = vld [vmem:[%s0 + $0x20] sm:$0xff]
    %v75 = vld [vmem:[%s0 + $0x28] sm:$0xff]
    %v76 = vld [vmem:[%s0 + $0x30] sm:$0xff]
    %v77 = vld [vmem:[%s0 + $0x38] sm:$0xff]
    %v78 = vld [vmem:[%s0 + $0x40] sm:$0xff]
    %v79 = vld [vmem:[%s0 + $0x48] sm:$0xff]
    %v80 = vld [vmem:[%s0 + $0x50] sm:$0xff]
    %v81 = vld [vmem:[%s0 + $0x58] sm:$0xff]
    %v82 = vld [vmem:[%s0 + $0x60] sm:$0xff]
    %v83 = vld [vmem:[%s0 + $0x68] sm:$0xff]
    %v84 = vld [vmem:[%s0 + $0x70] sm:$0xff]
    %v85 = vld [vmem:[%s0 + $0x78] sm:$0xff]
    %v86 = vld [vmem:[%s0 + $0x80] sm:$0xff]
    %v87 = vld [vmem:[%s0 + $0x88] sm:$0xff]
    %v88 = vld [vmem:[%s0 + $0x90] sm:$0xff]
    %v89 = vld [vmem:[%s0 + $0x98] sm:$0xff]
    %v90 = vld [vmem:[%s0 + $0xa0] sm:$0xff]
    %v91 = vld [vmem:[%s0 + $0xa8] sm:$0xff]
    %v92 = vld [vmem:[%s0 + $0xb0] sm:$0xff]
    %v93 = vld [vmem:[%s0 + $0xb8] sm:$0xff]
    %v94 = vld [vmem:[%s1] sm:$0xff]
    %v95 = vld [vmem:[%s1 + $0x8] sm:$0xff]
    %v96 = vld [vmem:[%s1 + $0x10] sm:$0xff]
    %v97 = vld [vmem:[%s1 + $0x18] sm:$0xff]
    %v98 = vld [vmem:[%s1 + $0x20] sm:$0xff]
    %v99 = vld [vmem:[%s1 + $0x28] sm:$0xff]
    %v100 = vld [vmem:[%s1 + $0x30] sm:$0x3f]
    %v101 = vld [vmem:[%s1 + $0x38] sm:$0x3f]
    %vm102 = vcmask 523264
    %v104 = vsel %vm102, %v95, 0
    %v107 = vsel %vm102, %v97, 0
    %v110 = vsel %vm102, %v99, 0
    %v113 = vsel %vm102, %v101, 0
    %115 = vmatprep.subr.mxu0 0.0
    %116 = vmatpush1.msra.mxu0 %v85
    %117 = vmatprep.subr.mxu0 0.0
    %118 = vmatpush1.msra.mxu0 %v84
    %119 = vmatprep.subr.mxu0 0.0
    %120 = vmatpush1.msra.mxu0 %v83
    %121 = vmatprep.subr.mxu0 0.0
    %122 = vmatpush1.msra.mxu0 %v82
    %123 = vmatprep.subr.mxu0 0.0
    %124 = vmatpush1.msra.mxu0 %v81
    %125 = vmatprep.subr.mxu0 0.0
    %126 = vmatpush1.msra.mxu0 %v80
    %127 = vmatprep.subr.mxu0 0.0
    %128 = vmatpush1.msra.mxu0 %v79
    %129 = vmatprep.subr.mxu0 0.0
    %130 = vmatpush1.msra.mxu0 %v78
    %131 = vmatprep.subr.mxu0 0.0
    %132 = vmatpush1.msra.mxu0 %v77
    %133 = vmatprep.subr.mxu0 0.0
    %134 = vmatpush1.msra.mxu0 %v76
    %135 = vmatprep.subr.mxu0 0.0
    %136 = vmatpush1.msra.mxu0 %v75
    %137 = vmatprep.subr.mxu0 0.0
    %138 = vmatpush1.msra.mxu0 %v74
    %139 = vmatprep.subr.mxu0 0.0
    %140 = vmatpush1.msra.mxu0 %v73
    %141 = vmatprep.subr.mxu0 0.0
    %142 = vmatpush1.msra.mxu0 %v72
    %143 = vmatprep.subr.mxu0 0.0
    %144 = vmatpush1.msra.mxu0 %v71
    %145 = vmatprep.subr.mxu0 0.0
    %146 = vmatpush1.msra.mxu0 %v70
    %147 = vmatprep.subr.mxu0 0.0
    %148 = vmatpush2.msra.mxu0 0.0
    %149 = vmatprep.subr.mxu0 0.0
    %150 = vmatpush2.msra.mxu0 0.0
    %151 = vmatprep.subr.mxu0 0.0
    %152 = vmatpush2.msra.mxu0 0.0
    %153 = vmatprep.subr.mxu0 0.0
    %154 = vmatpush2.msra.mxu0 0.0
    %155 = vmatprep.subr.mxu0 0.0
    %156 = vmatpush2.msra.mxu0 0.0
    %157 = vmatprep.subr.mxu0 0.0
    %158 = vmatpush2.msra.mxu0 0.0
    %159 = vmatprep.subr.mxu0 0.0
    %160 = vmatpush2.msra.mxu0 0.0
    %161 = vmatprep.subr.mxu0 0.0
    %162 = vmatpush2.msra.mxu0 0.0
    %163 = vmatprep.subr.mxu0 0.0
    %164 = vmatpush2.msra.mxu0 %v93
    %165 = vmatprep.subr.mxu0 0.0
    %166 = vmatpush2.msra.mxu0 %v92
    %167 = vmatprep.subr.mxu0 0.0
    %168 = vmatpush2.msra.mxu0 %v91
    %169 = vmatprep.subr.mxu0 0.0
    %170 = vmatpush2.msra.mxu0 %v90
    %171 = vmatprep.subr.mxu0 0.0
    %172 = vmatpush2.msra.mxu0 %v89
    %173 = vmatprep.subr.mxu0 0.0
    %174 = vmatpush2.msra.mxu0 %v88
    %175 = vmatprep.subr.mxu0 0.0
    %176 = vmatpush2.msra.mxu0 %v87
    %177 = vmatprep.subr.mxu0 0.0
    %178 = vmatpush2.msra.mxu0 %v86
    %179 = vmatprep.mubr.f32.mxu0 %v104
    %180 = vmatmul.mubr.f32.gmra.mxu0 %v94
    %v181 = vpop.f32.mrf.mxu0
    %v182 = vadd.f32 0.0, %v181
    %v183 = vpop.f32.mrf.mxu0
    %184 = vmatprep.mubr.f32.mxu0 %v107
    %185 = vmatmul.mubr.f32.gmra.mxu0 %v96
    %v186 = vpop.f32.mrf.mxu0
    %v187 = vadd.f32 0.0, %v186
    %v188 = vpop.f32.mrf.mxu0
    %189 = vmatprep.mubr.f32.mxu0 %v110
    %190 = vmatmul.mubr.f32.gmra.mxu0 %v98
    %v191 = vpop.f32.mrf.mxu0
    %v192 = vadd.f32 0.0, %v191
    %v193 = vpop.f32.mrf.mxu0
    %194 = vmatprep.mubr.f32.mxu0 %v113
    %195 = vmatmul.mubr.f32.gmra.mxu0 %v100
    %v196 = vpop.f32.mrf.mxu0
    %v197 = vadd.f32 0.0, %v196
    %v198 = vpop.f32.mrf.mxu0
    %199 = vdwg.mxu0
    %v200 = vld [vmem:[%s2] sm:$0xff]
    %v201 = vld [vmem:[%s2 + $0x8] sm:$0xff]
    %v202 = vld [vmem:[%s2 + $0x10] sm:$0xff]
    %v203 = vld [vmem:[%s2 + $0x18] sm:$0xff]
    %s204 = scalar_lea.vmem %s1, 64
    %v205 = vld [vmem:[%s204] sm:$0xff]
    %v206 = vld [vmem:[%s204 + $0x8] sm:$0xff]
    %v207 = vld [vmem:[%s204 + $0x10] sm:$0xff]
    %v208 = vld [vmem:[%s204 + $0x18] sm:$0xff]
    %v209 = vld [vmem:[%s204 + $0x20] sm:$0xff]
    %v210 = vld [vmem:[%s204 + $0x28] sm:$0xff]
    %v211 = vld [vmem:[%s204 + $0x30] sm:$0x3f]
    %v212 = vld [vmem:[%s204 + $0x38] sm:$0x3f]
    %v214 = vsel %vm102, %v206, 0
    %v217 = vsel %vm102, %v208, 0
    %v220 = vsel %vm102, %v210, 0
    %v223 = vsel %vm102, %v212, 0
    %225 = vmatprep.subr.mxu0 0.0
    %226 = vmatpush1.msra.mxu0 %v85
    %227 = vmatprep.subr.mxu0 0.0
    %228 = vmatpush1.msra.mxu0 %v84
    %229 = vmatprep.subr.mxu0 0.0
    %230 = vmatpush1.msra.mxu0 %v83
    %231 = vmatprep.subr.mxu0 0.0
    %232 = vmatpush1.msra.mxu0 %v82
    %233 = vmatprep.subr.mxu0 0.0
    %234 = vmatpush1.msra.mxu0 %v81
    %235 = vmatprep.subr.mxu0 0.0
    %236 = vmatpush1.msra.mxu0 %v80
    %237 = vmatprep.subr.mxu0 0.0
    %238 = vmatpush1.msra.mxu0 %v79
    %239 = vmatprep.subr.mxu0 0.0
    %240 = vmatpush1.msra.mxu0 %v78
    %241 = vmatprep.subr.mxu0 0.0
    %242 = vmatpush1.msra.mxu0 %v77
    %243 = vmatprep.subr.mxu0 0.0
    %244 = vmatpush1.msra.mxu0 %v76
    %245 = vmatprep.subr.mxu0 0.0
    %246 = vmatpush1.msra.mxu0 %v75
    %247 = vmatprep.subr.mxu0 0.0
    %248 = vmatpush1.msra.mxu0 %v74
    %249 = vmatprep.subr.mxu0 0.0
    %250 = vmatpush1.msra.mxu0 %v73
    %251 = vmatprep.subr.mxu0 0.0
    %252 = vmatpush1.msra.mxu0 %v72
    %253 = vmatprep.subr.mxu0 0.0
    %254 = vmatpush1.msra.mxu0 %v71
    %255 = vmatprep.subr.mxu0 0.0
    %256 = vmatpush1.msra.mxu0 %v70
    %257 = vmatprep.subr.mxu0 0.0
    %258 = vmatpush2.msra.mxu0 0.0
    %259 = vmatprep.subr.mxu0 0.0
    %260 = vmatpush2.msra.mxu0 0.0
    %261 = vmatprep.subr.mxu0 0.0
    %262 = vmatpush2.msra.mxu0 0.0
    %263 = vmatprep.subr.mxu0 0.0
    %264 = vmatpush2.msra.mxu0 0.0
    %265 = vmatprep.subr.mxu0 0.0
    %266 = vmatpush2.msra.mxu0 0.0
    %267 = vmatprep.subr.mxu0 0.0
    %268 = vmatpush2.msra.mxu0 0.0
    %269 = vmatprep.subr.mxu0 0.0
    %270 = vmatpush2.msra.mxu0 0.0
    %271 = vmatprep.subr.mxu0 0.0
    %272 = vmatpush2.msra.mxu0 0.0
    %273 = vmatprep.subr.mxu0 0.0
    %274 = vmatpush2.msra.mxu0 %v93
    %275 = vmatprep.subr.mxu0 0.0
    %276 = vmatpush2.msra.mxu0 %v92
    %277 = vmatprep.subr.mxu0 0.0
    %278 = vmatpush2.msra.mxu0 %v91
    %279 = vmatprep.subr.mxu0 0.0
    %280 = vmatpush2.msra.mxu0 %v90
    %281 = vmatprep.subr.mxu0 0.0
    %282 = vmatpush2.msra.mxu0 %v89
    %283 = vmatprep.subr.mxu0 0.0
    %284 = vmatpush2.msra.mxu0 %v88
    %285 = vmatprep.subr.mxu0 0.0
    %286 = vmatpush2.msra.mxu0 %v87
    %287 = vmatprep.subr.mxu0 0.0
    %288 = vmatpush2.msra.mxu0 %v86
    %289 = vmatprep.mubr.f32.mxu0 %v214
    %290 = vmatmul.mubr.f32.gmra.mxu0 %v205
    %v291 = vpop.f32.mrf.mxu0
    %v292 = vadd.f32 0.0, %v291
    %v293 = vpop.f32.mrf.mxu0
    %294 = vmatprep.mubr.f32.mxu0 %v217
    %295 = vmatmul.mubr.f32.gmra.mxu0 %v207
    %v296 = vpop.f32.mrf.mxu0
    %v297 = vadd.f32 0.0, %v296
    %v298 = vpop.f32.mrf.mxu0
    %299 = vmatprep.mubr.f32.mxu0 %v220
    %300 = vmatmul.mubr.f32.gmra.mxu0 %v209
    %v301 = vpop.f32.mrf.mxu0
    %v302 = vadd.f32 0.0, %v301
    %v303 = vpop.f32.mrf.mxu0
    %304 = vmatprep.mubr.f32.mxu0 %v223
    %305 = vmatmul.mubr.f32.gmra.mxu0 %v211
    %v306 = vpop.f32.mrf.mxu0
    %v307 = vadd.f32 0.0, %v306
    %v308 = vpop.f32.mrf.mxu0
    %309 = vdwg.mxu0
    %s310 = scalar_lea.vmem %s2, 32
    %v311 = vld [vmem:[%s310] sm:$0xff]
    %v312 = vld [vmem:[%s310 + $0x8] sm:$0xff]
    %v313 = vld [vmem:[%s310 + $0x10] sm:$0xff]
    %v314 = vld [vmem:[%s310 + $0x18] sm:$0xff]
    %vm315 = vcmask 261120
    %v317 = vsel %vm315, %v292, 0
    %v320 = vsel %vm315, %v297, 0
    %v323 = vsel %vm315, %v302, 0
    %v326 = vsel %vm315, %v307, 0
    %328 = vmatprep.subr.mxu0 0.0
    %329 = vmatpush1.msra.mxu0 0.0
    %330 = vmatprep.subr.mxu0 0.0
    %331 = vmatpush1.msra.mxu0 0.0
    %332 = vmatprep.subr.mxu0 0.0
    %333 = vmatpush1.msra.mxu0 0.0
    %334 = vmatprep.subr.mxu0 0.0
    %335 = vmatpush1.msra.mxu0 0.0
    %336 = vmatprep.subr.mxu0 0.0
    %337 = vmatpush1.msra.mxu0 0.0
    %338 = vmatprep.subr.mxu0 0.0
    %339 = vmatpush1.msra.mxu0 0.0
    %340 = vmatprep.subr.mxu0 0.0
    %341 = vmatpush1.msra.mxu0 0.0
    %342 = vmatprep.subr.mxu0 0.0
    %343 = vmatpush1.msra.mxu0 0.0
    %344 = vmatprep.subr.mxu0 0.0
    %345 = vmatpush1.msra.mxu0 0.0
    %346 = vmatprep.subr.mxu0 0.0
    %347 = vmatpush1.msra.mxu0 0.0
    %348 = vmatprep.subr.mxu0 0.0
    %349 = vmatpush1.msra.mxu0 0.0
    %350 = vmatprep.subr.mxu0 0.0
    %351 = vmatpush1.msra.mxu0 0.0
    %352 = vmatprep.subr.mxu0 0.0
    %353 = vmatpush1.msra.mxu0 %v314
    %354 = vmatprep.subr.mxu0 0.0
    %355 = vmatpush1.msra.mxu0 %v313
    %356 = vmatprep.subr.mxu0 0.0
    %357 = vmatpush1.msra.mxu0 %v312
    %358 = vmatprep.subr.mxu0 0.0
    %359 = vmatpush1.msra.mxu0 %v311
    %360 = vmatprep.subr.mxu0 0.0
    %361 = vmatpush2.msra.mxu0 0.0
    %362 = vmatprep.subr.mxu0 0.0
    %363 = vmatpush2.msra.mxu0 0.0
    %364 = vmatprep.subr.mxu0 0.0
    %365 = vmatpush2.msra.mxu0 0.0
    %366 = vmatprep.subr.mxu0 0.0
    %367 = vmatpush2.msra.mxu0 0.0
    %368 = vmatprep.subr.mxu0 0.0
    %369 = vmatpush2.msra.mxu0 0.0
    %370 = vmatprep.subr.mxu0 0.0
    %371 = vmatpush2.msra.mxu0 0.0
    %372 = vmatprep.subr.mxu0 0.0
    %373 = vmatpush2.msra.mxu0 0.0
    %374 = vmatprep.subr.mxu0 0.0
    %375 = vmatpush2.msra.mxu0 0.0
    %376 = vmatprep.subr.mxu0 0.0
    %377 = vmatpush2.msra.mxu0 0.0
    %378 = vmatprep.subr.mxu0 0.0
    %379 = vmatpush2.msra.mxu0 0.0
    %380 = vmatprep.subr.mxu0 0.0
    %381 = vmatpush2.msra.mxu0 0.0
    %382 = vmatprep.subr.mxu0 0.0
    %383 = vmatpush2.msra.mxu0 0.0
    %384 = vmatprep.subr.mxu0 0.0
    %385 = vmatpush2.msra.mxu0 0.0
    %386 = vmatprep.subr.mxu0 0.0
    %387 = vmatpush2.msra.mxu0 0.0
    %388 = vmatprep.subr.mxu0 0.0
    %389 = vmatpush2.msra.mxu0 0.0
    %390 = vmatprep.subr.mxu0 0.0
    %391 = vmatpush2.msra.mxu0 0.0
    %392 = vmatprep.mubr.f32.mxu0 0.0
    %393 = vmatmul.mubr.f32.gmra.mxu0 %v317
    %v394 = vpop.f32.mrf.mxu0
    %v395 = vadd.f32 0.0, %v394
    %v396 = vpop.f32.mrf.mxu0
    %397 = vmatprep.mubr.f32.mxu0 0.0
    %398 = vmatmul.mubr.f32.gmra.mxu0 %v320
    %v399 = vpop.f32.mrf.mxu0
    %v400 = vadd.f32 0.0, %v399
    %v401 = vpop.f32.mrf.mxu0
    %402 = vmatprep.mubr.f32.mxu0 0.0
    %403 = vmatmul.mubr.f32.gmra.mxu0 %v323
    %v404 = vpop.f32.mrf.mxu0
    %v405 = vadd.f32 0.0, %v404
    %v406 = vpop.f32.mrf.mxu0
    %407 = vmatprep.mubr.f32.mxu0 0.0
    %408 = vmatmul.mubr.f32.gmra.mxu0 %v326
    %v409 = vpop.f32.mrf.mxu0
    %v410 = vadd.f32 0.0, %v409
    %v411 = vpop.f32.mrf.mxu0
    %412 = vdwg.mxu0
    %v414 = vsel %vm315, %v182, 0
    %v417 = vsel %vm315, %v187, 0
    %v420 = vsel %vm315, %v192, 0
    %v423 = vsel %vm315, %v197, 0
    %425 = vmatprep.subr.mxu0 0.0
    %426 = vmatpush1.msra.mxu0 0.0
    %427 = vmatprep.subr.mxu0 0.0
    %428 = vmatpush1.msra.mxu0 0.0
    %429 = vmatprep.subr.mxu0 0.0
    %430 = vmatpush1.msra.mxu0 0.0
    %431 = vmatprep.subr.mxu0 0.0
    %432 = vmatpush1.msra.mxu0 0.0
    %433 = vmatprep.subr.mxu0 0.0
    %434 = vmatpush1.msra.mxu0 0.0
    %435 = vmatprep.subr.mxu0 0.0
    %436 = vmatpush1.msra.mxu0 0.0
    %437 = vmatprep.subr.mxu0 0.0
    %438 = vmatpush1.msra.mxu0 0.0
    %439 = vmatprep.subr.mxu0 0.0
    %440 = vmatpush1.msra.mxu0 0.0
    %441 = vmatprep.subr.mxu0 0.0
    %442 = vmatpush1.msra.mxu0 0.0
    %443 = vmatprep.subr.mxu0 0.0
    %444 = vmatpush1.msra.mxu0 0.0
    %445 = vmatprep.subr.mxu0 0.0
    %446 = vmatpush1.msra.mxu0 0.0
    %447 = vmatprep.subr.mxu0 0.0
    %448 = vmatpush1.msra.mxu0 0.0
    %449 = vmatprep.subr.mxu0 0.0
    %450 = vmatpush1.msra.mxu0 %v203
    %451 = vmatprep.subr.mxu0 0.0
    %452 = vmatpush1.msra.mxu0 %v202
    %453 = vmatprep.subr.mxu0 0.0
    %454 = vmatpush1.msra.mxu0 %v201
    %455 = vmatprep.subr.mxu0 0.0
    %456 = vmatpush1.msra.mxu0 %v200
    %457 = vmatprep.subr.mxu0 0.0
    %458 = vmatpush2.msra.mxu0 0.0
    %459 = vmatprep.subr.mxu0 0.0
    %460 = vmatpush2.msra.mxu0 0.0
    %461 = vmatprep.subr.mxu0 0.0
    %462 = vmatpush2.msra.mxu0 0.0
    %463 = vmatprep.subr.mxu0 0.0
    %464 = vmatpush2.msra.mxu0 0.0
    %465 = vmatprep.subr.mxu0 0.0
    %466 = vmatpush2.msra.mxu0 0.0
    %467 = vmatprep.subr.mxu0 0.0
    %468 = vmatpush2.msra.mxu0 0.0
    %469 = vmatprep.subr.mxu0 0.0
    %470 = vmatpush2.msra.mxu0 0.0
    %471 = vmatprep.subr.mxu0 0.0
    %472 = vmatpush2.msra.mxu0 0.0
    %473 = vmatprep.subr.mxu0 0.0
    %474 = vmatpush2.msra.mxu0 0.0
    %475 = vmatprep.subr.mxu0 0.0
    %476 = vmatpush2.msra.mxu0 0.0
    %477 = vmatprep.subr.mxu0 0.0
    %478 = vmatpush2.msra.mxu0 0.0
    %479 = vmatprep.subr.mxu0 0.0
    %480 = vmatpush2.msra.mxu0 0.0
    %481 = vmatprep.subr.mxu0 0.0
    %482 = vmatpush2.msra.mxu0 0.0
    %483 = vmatprep.subr.mxu0 0.0
    %484 = vmatpush2.msra.mxu0 0.0
    %485 = vmatprep.subr.mxu0 0.0
    %486 = vmatpush2.msra.mxu0 0.0
    %487 = vmatprep.subr.mxu0 0.0
    %488 = vmatpush2.msra.mxu0 0.0
    %489 = vmatprep.mubr.f32.mxu0 0.0
    %490 = vmatmul.mubr.f32.gmra.mxu0 %v414
    %v491 = vpop.f32.mrf.mxu0
    %v492 = vadd.f32 %v395, %v491
    %v493 = vpop.f32.mrf.mxu0
    %494 = vmatprep.mubr.f32.mxu0 0.0
    %495 = vmatmul.mubr.f32.gmra.mxu0 %v417
    %v496 = vpop.f32.mrf.mxu0
    %v497 = vadd.f32 %v400, %v496
    %v498 = vpop.f32.mrf.mxu0
    %499 = vmatprep.mubr.f32.mxu0 0.0
    %500 = vmatmul.mubr.f32.gmra.mxu0 %v420
    %v501 = vpop.f32.mrf.mxu0
    %v502 = vadd.f32 %v405, %v501
    %v503 = vpop.f32.mrf.mxu0
    %504 = vmatprep.mubr.f32.mxu0 0.0
    %505 = vmatmul.mubr.f32.gmra.mxu0 %v423
    %v506 = vpop.f32.mrf.mxu0
    %v507 = vadd.f32 %v410, %v506
    %v508 = vpop.f32.mrf.mxu0
    %509 = vdwg.mxu0
    %s510 = scalar_lea.vmem %s1, 128
    %v511 = vld [vmem:[%s510] sm:$0xff]
    %v512 = vld [vmem:[%s510 + $0x8] sm:$0xff]
    %v513 = vld [vmem:[%s510 + $0x10] sm:$0xff]
    %v514 = vld [vmem:[%s510 + $0x18] sm:$0xff]
    %v515 = vld [vmem:[%s510 + $0x20] sm:$0xff]
    %v516 = vld [vmem:[%s510 + $0x28] sm:$0xff]
    %v517 = vld [vmem:[%s510 + $0x30] sm:$0x3f]
    %v518 = vld [vmem:[%s510 + $0x38] sm:$0x3f]
    %v520 = vsel %vm102, %v512, 0
    %v523 = vsel %vm102, %v514, 0
    %v526 = vsel %vm102, %v516, 0
    %v529 = vsel %vm102, %v518, 0
    %531 = vmatprep.subr.mxu0 0.0
    %532 = vmatpush1.msra.mxu0 %v85
    %533 = vmatprep.subr.mxu0 0.0
    %534 = vmatpush1.msra.mxu0 %v84
    %535 = vmatprep.subr.mxu0 0.0
    %536 = vmatpush1.msra.mxu0 %v83
    %537 = vmatprep.subr.mxu0 0.0
    %538 = vmatpush1.msra.mxu0 %v82
    %539 = vmatprep.subr.mxu0 0.0
    %540 = vmatpush1.msra.mxu0 %v81
    %541 = vmatprep.subr.mxu0 0.0
    %542 = vmatpush1.msra.mxu0 %v80
    %543 = vmatprep.subr.mxu0 0.0
    %544 = vmatpush1.msra.mxu0 %v79
    %545 = vmatprep.subr.mxu0 0.0
    %546 = vmatpush1.msra.mxu0 %v78
    %547 = vmatprep.subr.mxu0 0.0
    %548 = vmatpush1.msra.mxu0 %v77
    %549 = vmatprep.subr.mxu0 0.0
    %550 = vmatpush1.msra.mxu0 %v76
    %551 = vmatprep.subr.mxu0 0.0
    %552 = vmatpush1.msra.mxu0 %v75
    %553 = vmatprep.subr.mxu0 0.0
    %554 = vmatpush1.msra.mxu0 %v74
    %555 = vmatprep.subr.mxu0 0.0
    %556 = vmatpush1.msra.mxu0 %v73
    %557 = vmatprep.subr.mxu0 0.0
    %558 = vmatpush1.msra.mxu0 %v72
    %559 = vmatprep.subr.mxu0 0.0
    %560 = vmatpush1.msra.mxu0 %v71
    %561 = vmatprep.subr.mxu0 0.0
    %562 = vmatpush1.msra.mxu0 %v70
    %563 = vmatprep.subr.mxu0 0.0
    %564 = vmatpush2.msra.mxu0 0.0
    %565 = vmatprep.subr.mxu0 0.0
    %566 = vmatpush2.msra.mxu0 0.0
    %567 = vmatprep.subr.mxu0 0.0
    %568 = vmatpush2.msra.mxu0 0.0
    %569 = vmatprep.subr.mxu0 0.0
    %570 = vmatpush2.msra.mxu0 0.0
    %571 = vmatprep.subr.mxu0 0.0
    %572 = vmatpush2.msra.mxu0 0.0
    %573 = vmatprep.subr.mxu0 0.0
    %574 = vmatpush2.msra.mxu0 0.0
    %575 = vmatprep.subr.mxu0 0.0
    %576 = vmatpush2.msra.mxu0 0.0
    %577 = vmatprep.subr.mxu0 0.0
    %578 = vmatpush2.msra.mxu0 0.0
    %579 = vmatprep.subr.mxu0 0.0
    %580 = vmatpush2.msra.mxu0 %v93
    %581 = vmatprep.subr.mxu0 0.0
    %582 = vmatpush2.msra.mxu0 %v92
    %583 = vmatprep.subr.mxu0 0.0
    %584 = vmatpush2.msra.mxu0 %v91
    %585 = vmatprep.subr.mxu0 0.0
    %586 = vmatpush2.msra.mxu0 %v90
    %587 = vmatprep.subr.mxu0 0.0
    %588 = vmatpush2.msra.mxu0 %v89
    %589 = vmatprep.subr.mxu0 0.0
    %590 = vmatpush2.msra.mxu0 %v88
    %591 = vmatprep.subr.mxu0 0.0
    %592 = vmatpush2.msra.mxu0 %v87
    %593 = vmatprep.subr.mxu0 0.0
    %594 = vmatpush2.msra.mxu0 %v86
    %595 = vmatprep.mubr.f32.mxu0 %v520
    %596 = vmatmul.mubr.f32.gmra.mxu0 %v511
    %v597 = vpop.f32.mrf.mxu0
    %v598 = vadd.f32 0.0, %v597
    %v599 = vpop.f32.mrf.mxu0
    %600 = vmatprep.mubr.f32.mxu0 %v523
    %601 = vmatmul.mubr.f32.gmra.mxu0 %v513
    %v602 = vpop.f32.mrf.mxu0
    %v603 = vadd.f32 0.0, %v602
    %v604 = vpop.f32.mrf.mxu0
    %605 = vmatprep.mubr.f32.mxu0 %v526
    %606 = vmatmul.mubr.f32.gmra.mxu0 %v515
    %v607 = vpop.f32.mrf.mxu0
    %v608 = vadd.f32 0.0, %v607
    %v609 = vpop.f32.mrf.mxu0
    %610 = vmatprep.mubr.f32.mxu0 %v529
    %611 = vmatmul.mubr.f32.gmra.mxu0 %v517
    %v612 = vpop.f32.mrf.mxu0
    %v613 = vadd.f32 0.0, %v612
    %v614 = vpop.f32.mrf.mxu0
    %615 = vdwg.mxu0
    %s616 = scalar_lea.vmem %s2, 64
    %v617 = vld [vmem:[%s616] sm:$0xff]
    %v618 = vld [vmem:[%s616 + $0x8] sm:$0xff]
    %v619 = vld [vmem:[%s616 + $0x10] sm:$0xff]
    %v620 = vld [vmem:[%s616 + $0x18] sm:$0xff]
    %v622 = vsel %vm315, %v598, 0
    %v625 = vsel %vm315, %v603, 0
    %v628 = vsel %vm315, %v608, 0
    %v631 = vsel %vm315, %v613, 0
    %633 = vmatprep.subr.mxu0 0.0
    %634 = vmatpush1.msra.mxu0 0.0
    %635 = vmatprep.subr.mxu0 0.0
    %636 = vmatpush1.msra.mxu0 0.0
    %637 = vmatprep.subr.mxu0 0.0
    %638 = vmatpush1.msra.mxu0 0.0
    %639 = vmatprep.subr.mxu0 0.0
    %640 = vmatpush1.msra.mxu0 0.0
    %641 = vmatprep.subr.mxu0 0.0
    %642 = vmatpush1.msra.mxu0 0.0
    %643 = vmatprep.subr.mxu0 0.0
    %644 = vmatpush1.msra.mxu0 0.0
    %645 = vmatprep.subr.mxu0 0.0
    %646 = vmatpush1.msra.mxu0 0.0
    %647 = vmatprep.subr.mxu0 0.0
    %648 = vmatpush1.msra.mxu0 0.0
    %649 = vmatprep.subr.mxu0 0.0
    %650 = vmatpush1.msra.mxu0 0.0
    %651 = vmatprep.subr.mxu0 0.0
    %652 = vmatpush1.msra.mxu0 0.0
    %653 = vmatprep.subr.mxu0 0.0
    %654 = vmatpush1.msra.mxu0 0.0
    %655 = vmatprep.subr.mxu0 0.0
    %656 = vmatpush1.msra.mxu0 0.0
    %657 = vmatprep.subr.mxu0 0.0
    %658 = vmatpush1.msra.mxu0 %v620
    %659 = vmatprep.subr.mxu0 0.0
    %660 = vmatpush1.msra.mxu0 %v619
    %661 = vmatprep.subr.mxu0 0.0
    %662 = vmatpush1.msra.mxu0 %v618
    %663 = vmatprep.subr.mxu0 0.0
    %664 = vmatpush1.msra.mxu0 %v617
    %665 = vmatprep.subr.mxu0 0.0
    %666 = vmatpush2.msra.mxu0 0.0
    %667 = vmatprep.subr.mxu0 0.0
    %668 = vmatpush2.msra.mxu0 0.0
    %669 = vmatprep.subr.mxu0 0.0
    %670 = vmatpush2.msra.mxu0 0.0
    %671 = vmatprep.subr.mxu0 0.0
    %672 = vmatpush2.msra.mxu0 0.0
    %673 = vmatprep.subr.mxu0 0.0
    %674 = vmatpush2.msra.mxu0 0.0
    %675 = vmatprep.subr.mxu0 0.0
    %676 = vmatpush2.msra.mxu0 0.0
    %677 = vmatprep.subr.mxu0 0.0
    %678 = vmatpush2.msra.mxu0 0.0
    %679 = vmatprep.subr.mxu0 0.0
    %680 = vmatpush2.msra.mxu0 0.0
    %681 = vmatprep.subr.mxu0 0.0
    %682 = vmatpush2.msra.mxu0 0.0
    %683 = vmatprep.subr.mxu0 0.0
    %684 = vmatpush2.msra.mxu0 0.0
    %685 = vmatprep.subr.mxu0 0.0
    %686 = vmatpush2.msra.mxu0 0.0
    %687 = vmatprep.subr.mxu0 0.0
    %688 = vmatpush2.msra.mxu0 0.0
    %689 = vmatprep.subr.mxu0 0.0
    %690 = vmatpush2.msra.mxu0 0.0
    %691 = vmatprep.subr.mxu0 0.0
    %692 = vmatpush2.msra.mxu0 0.0
    %693 = vmatprep.subr.mxu0 0.0
    %694 = vmatpush2.msra.mxu0 0.0
    %695 = vmatprep.subr.mxu0 0.0
    %696 = vmatpush2.msra.mxu0 0.0
    %697 = vmatprep.mubr.f32.mxu0 0.0
    %698 = vmatmul.mubr.f32.gmra.mxu0 %v622
    %v699 = vpop.f32.mrf.mxu0
    %v700 = vadd.f32 0.0, %v699
    %v701 = vpop.f32.mrf.mxu0
    %702 = vmatprep.mubr.f32.mxu0 0.0
    %703 = vmatmul.mubr.f32.gmra.mxu0 %v625
    %v704 = vpop.f32.mrf.mxu0
    %v705 = vadd.f32 0.0, %v704
    %v706 = vpop.f32.mrf.mxu0
    %707 = vmatprep.mubr.f32.mxu0 0.0
    %708 = vmatmul.mubr.f32.gmra.mxu0 %v628
    %v709 = vpop.f32.mrf.mxu0
    %v710 = vadd.f32 0.0, %v709
    %v711 = vpop.f32.mrf.mxu0
    %712 = vmatprep.mubr.f32.mxu0 0.0
    %713 = vmatmul.mubr.f32.gmra.mxu0 %v631
    %v714 = vpop.f32.mrf.mxu0
    %v715 = vadd.f32 0.0, %v714
    %v716 = vpop.f32.mrf.mxu0
    %717 = vdwg.mxu0
    %v718 = vadd.f32 %v492, %v700
    %v719 = vadd.f32 %v497, %v705
    %v720 = vadd.f32 %v502, %v710
    %v721 = vadd.f32 %v507, %v715
    %s722 = scalar_lea.vmem %s1, 192
    %v723 = vld [vmem:[%s722] sm:$0xff]
    %v724 = vld [vmem:[%s722 + $0x8] sm:$0xff]
    %v725 = vld [vmem:[%s722 + $0x10] sm:$0xff]
    %v726 = vld [vmem:[%s722 + $0x18] sm:$0xff]
    %v727 = vld [vmem:[%s722 + $0x20] sm:$0xff]
    %v728 = vld [vmem:[%s722 + $0x28] sm:$0xff]
    %v729 = vld [vmem:[%s722 + $0x30] sm:$0x3f]
    %v730 = vld [vmem:[%s722 + $0x38] sm:$0x3f]
    %v732 = vsel %vm102, %v724, 0
    %v735 = vsel %vm102, %v726, 0
    %v738 = vsel %vm102, %v728, 0
    %v741 = vsel %vm102, %v730, 0
    %743 = vmatprep.subr.mxu0 0.0
    %744 = vmatpush1.msra.mxu0 %v85
    %745 = vmatprep.subr.mxu0 0.0
    %746 = vmatpush1.msra.mxu0 %v84
    %747 = vmatprep.subr.mxu0 0.0
    %748 = vmatpush1.msra.mxu0 %v83
    %749 = vmatprep.subr.mxu0 0.0
    %750 = vmatpush1.msra.mxu0 %v82
    %751 = vmatprep.subr.mxu0 0.0
    %752 = vmatpush1.msra.mxu0 %v81
    %753 = vmatprep.subr.mxu0 0.0
    %754 = vmatpush1.msra.mxu0 %v80
    %755 = vmatprep.subr.mxu0 0.0
    %756 = vmatpush1.msra.mxu0 %v79
    %757 = vmatprep.subr.mxu0 0.0
    %758 = vmatpush1.msra.mxu0 %v78
    %759 = vmatprep.subr.mxu0 0.0
    %760 = vmatpush1.msra.mxu0 %v77
    %761 = vmatprep.subr.mxu0 0.0
    %762 = vmatpush1.msra.mxu0 %v76
    %763 = vmatprep.subr.mxu0 0.0
    %764 = vmatpush1.msra.mxu0 %v75
    %765 = vmatprep.subr.mxu0 0.0
    %766 = vmatpush1.msra.mxu0 %v74
    %767 = vmatprep.subr.mxu0 0.0
    %768 = vmatpush1.msra.mxu0 %v73
    %769 = vmatprep.subr.mxu0 0.0
    %770 = vmatpush1.msra.mxu0 %v72
    %771 = vmatprep.subr.mxu0 0.0
    %772 = vmatpush1.msra.mxu0 %v71
    %773 = vmatprep.subr.mxu0 0.0
    %774 = vmatpush1.msra.mxu0 %v70
    %775 = vmatprep.subr.mxu0 0.0
    %776 = vmatpush2.msra.mxu0 0.0
    %777 = vmatprep.subr.mxu0 0.0
    %778 = vmatpush2.msra.mxu0 0.0
    %779 = vmatprep.subr.mxu0 0.0
    %780 = vmatpush2.msra.mxu0 0.0
    %781 = vmatprep.subr.mxu0 0.0
    %782 = vmatpush2.msra.mxu0 0.0
    %783 = vmatprep.subr.mxu0 0.0
    %784 = vmatpush2.msra.mxu0 0.0
    %785 = vmatprep.subr.mxu0 0.0
    %786 = vmatpush2.msra.mxu0 0.0
    %787 = vmatprep.subr.mxu0 0.0
    %788 = vmatpush2.msra.mxu0 0.0
    %789 = vmatprep.subr.mxu0 0.0
    %790 = vmatpush2.msra.mxu0 0.0
    %791 = vmatprep.subr.mxu0 0.0
    %792 = vmatpush2.msra.mxu0 %v93
    %793 = vmatprep.subr.mxu0 0.0
    %794 = vmatpush2.msra.mxu0 %v92
    %795 = vmatprep.subr.mxu0 0.0
    %796 = vmatpush2.msra.mxu0 %v91
    %797 = vmatprep.subr.mxu0 0.0
    %798 = vmatpush2.msra.mxu0 %v90
    %799 = vmatprep.subr.mxu0 0.0
    %800 = vmatpush2.msra.mxu0 %v89
    %801 = vmatprep.subr.mxu0 0.0
    %802 = vmatpush2.msra.mxu0 %v88
    %803 = vmatprep.subr.mxu0 0.0
    %804 = vmatpush2.msra.mxu0 %v87
    %805 = vmatprep.subr.mxu0 0.0
    %806 = vmatpush2.msra.mxu0 %v86
    %807 = vmatprep.mubr.f32.mxu0 %v732
    %808 = vmatmul.mubr.f32.gmra.mxu0 %v723
    %v809 = vpop.f32.mrf.mxu0
    %v810 = vadd.f32 0.0, %v809
    %v811 = vpop.f32.mrf.mxu0
    %812 = vmatprep.mubr.f32.mxu0 %v735
    %813 = vmatmul.mubr.f32.gmra.mxu0 %v725
    %v814 = vpop.f32.mrf.mxu0
    %v815 = vadd.f32 0.0, %v814
    %v816 = vpop.f32.mrf.mxu0
    %817 = vmatprep.mubr.f32.mxu0 %v738
    %818 = vmatmul.mubr.f32.gmra.mxu0 %v727
    %v819 = vpop.f32.mrf.mxu0
    %v820 = vadd.f32 0.0, %v819
    %v821 = vpop.f32.mrf.mxu0
    %822 = vmatprep.mubr.f32.mxu0 %v741
    %823 = vmatmul.mubr.f32.gmra.mxu0 %v729
    %v824 = vpop.f32.mrf.mxu0
    %v825 = vadd.f32 0.0, %v824
    %v826 = vpop.f32.mrf.mxu0
    %827 = vdwg.mxu0
    %s828 = scalar_lea.vmem %s2, 96
    %v829 = vld [vmem:[%s828] sm:$0xff]
    %v830 = vld [vmem:[%s828 + $0x8] sm:$0xff]
    %v831 = vld [vmem:[%s828 + $0x10] sm:$0xff]
    %v832 = vld [vmem:[%s828 + $0x18] sm:$0xff]
    %v834 = vsel %vm315, %v810, 0
    %v837 = vsel %vm315, %v815, 0
    %v840 = vsel %vm315, %v820, 0
    %v843 = vsel %vm315, %v825, 0
    %845 = vmatprep.subr.mxu0 0.0
    %846 = vmatpush1.msra.mxu0 0.0
    %847 = vmatprep.subr.mxu0 0.0
    %848 = vmatpush1.msra.mxu0 0.0
    %849 = vmatprep.subr.mxu0 0.0
    %850 = vmatpush1.msra.mxu0 0.0
    %851 = vmatprep.subr.mxu0 0.0
    %852 = vmatpush1.msra.mxu0 0.0
    %853 = vmatprep.subr.mxu0 0.0
    %854 = vmatpush1.msra.mxu0 0.0
    %855 = vmatprep.subr.mxu0 0.0
    %856 = vmatpush1.msra.mxu0 0.0
    %857 = vmatprep.subr.mxu0 0.0
    %858 = vmatpush1.msra.mxu0 0.0
    %859 = vmatprep.subr.mxu0 0.0
    %860 = vmatpush1.msra.mxu0 0.0
    %861 = vmatprep.subr.mxu0 0.0
    %862 = vmatpush1.msra.mxu0 0.0
    %863 = vmatprep.subr.mxu0 0.0
    %864 = vmatpush1.msra.mxu0 0.0
    %865 = vmatprep.subr.mxu0 0.0
    %866 = vmatpush1.msra.mxu0 0.0
    %867 = vmatprep.subr.mxu0 0.0
    %868 = vmatpush1.msra.mxu0 0.0
    %869 = vmatprep.subr.mxu0 0.0
    %870 = vmatpush1.msra.mxu0 %v832
    %871 = vmatprep.subr.mxu0 0.0
    %872 = vmatpush1.msra.mxu0 %v831
    %873 = vmatprep.subr.mxu0 0.0
    %874 = vmatpush1.msra.mxu0 %v830
    %875 = vmatprep.subr.mxu0 0.0
    %876 = vmatpush1.msra.mxu0 %v829
    %877 = vmatprep.subr.mxu0 0.0
    %878 = vmatpush2.msra.mxu0 0.0
    %879 = vmatprep.subr.mxu0 0.0
    %880 = vmatpush2.msra.mxu0 0.0
    %881 = vmatprep.subr.mxu0 0.0
    %882 = vmatpush2.msra.mxu0 0.0
    %883 = vmatprep.subr.mxu0 0.0
    %884 = vmatpush2.msra.mxu0 0.0
    %885 = vmatprep.subr.mxu0 0.0
    %886 = vmatpush2.msra.mxu0 0.0
    %887 = vmatprep.subr.mxu0 0.0
    %888 = vmatpush2.msra.mxu0 0.0
    %889 = vmatprep.subr.mxu0 0.0
    %890 = vmatpush2.msra.mxu0 0.0
    %891 = vmatprep.subr.mxu0 0.0
    %892 = vmatpush2.msra.mxu0 0.0
    %893 = vmatprep.subr.mxu0 0.0
    %894 = vmatpush2.msra.mxu0 0.0
    %895 = vmatprep.subr.mxu0 0.0
    %896 = vmatpush2.msra.mxu0 0.0
    %897 = vmatprep.subr.mxu0 0.0
    %898 = vmatpush2.msra.mxu0 0.0
    %899 = vmatprep.subr.mxu0 0.0
    %900 = vmatpush2.msra.mxu0 0.0
    %901 = vmatprep.subr.mxu0 0.0
    %902 = vmatpush2.msra.mxu0 0.0
    %903 = vmatprep.subr.mxu0 0.0
    %904 = vmatpush2.msra.mxu0 0.0
    %905 = vmatprep.subr.mxu0 0.0
    %906 = vmatpush2.msra.mxu0 0.0
    %907 = vmatprep.subr.mxu0 0.0
    %908 = vmatpush2.msra.mxu0 0.0
    %909 = vmatprep.mubr.f32.mxu0 0.0
    %910 = vmatmul.mubr.f32.gmra.mxu0 %v834
    %v911 = vpop.f32.mrf.mxu0
    %v912 = vadd.f32 0.0, %v911
    %v913 = vpop.f32.mrf.mxu0
    %914 = vmatprep.mubr.f32.mxu0 0.0
    %915 = vmatmul.mubr.f32.gmra.mxu0 %v837
    %v916 = vpop.f32.mrf.mxu0
    %v917 = vadd.f32 0.0, %v916
    %v918 = vpop.f32.mrf.mxu0
    %919 = vmatprep.mubr.f32.mxu0 0.0
    %920 = vmatmul.mubr.f32.gmra.mxu0 %v840
    %v921 = vpop.f32.mrf.mxu0
    %v922 = vadd.f32 0.0, %v921
    %v923 = vpop.f32.mrf.mxu0
    %924 = vmatprep.mubr.f32.mxu0 0.0
    %925 = vmatmul.mubr.f32.gmra.mxu0 %v843
    %v926 = vpop.f32.mrf.mxu0
    %v927 = vadd.f32 0.0, %v926
    %v928 = vpop.f32.mrf.mxu0
    %929 = vdwg.mxu0
    %v930 = vadd.f32 %v718, %v912
    %v931 = vadd.f32 %v719, %v917
    %v932 = vadd.f32 %v720, %v922
    %v933 = vadd.f32 %v721, %v927
    %s934 = scalar_lea.vmem %s1, 256
    %v935 = vld [vmem:[%s934] sm:$0xff]
    %v936 = vld [vmem:[%s934 + $0x8] sm:$0xff]
    %v937 = vld [vmem:[%s934 + $0x10] sm:$0xff]
    %v938 = vld [vmem:[%s934 + $0x18] sm:$0xff]
    %v939 = vld [vmem:[%s934 + $0x20] sm:$0xff]
    %v940 = vld [vmem:[%s934 + $0x28] sm:$0xff]
    %v941 = vld [vmem:[%s934 + $0x30] sm:$0x3f]
    %v942 = vld [vmem:[%s934 + $0x38] sm:$0x3f]
    %v944 = vsel %vm102, %v936, 0
    %v947 = vsel %vm102, %v938, 0
    %v950 = vsel %vm102, %v940, 0
    %v953 = vsel %vm102, %v942, 0
    %955 = vmatprep.subr.mxu0 0.0
    %956 = vmatpush1.msra.mxu0 %v85
    %957 = vmatprep.subr.mxu0 0.0
    %958 = vmatpush1.msra.mxu0 %v84
    %959 = vmatprep.subr.mxu0 0.0
    %960 = vmatpush1.msra.mxu0 %v83
    %961 = vmatprep.subr.mxu0 0.0
    %962 = vmatpush1.msra.mxu0 %v82
    %963 = vmatprep.subr.mxu0 0.0
    %964 = vmatpush1.msra.mxu0 %v81
    %965 = vmatprep.subr.mxu0 0.0
    %966 = vmatpush1.msra.mxu0 %v80
    %967 = vmatprep.subr.mxu0 0.0
    %968 = vmatpush1.msra.mxu0 %v79
    %969 = vmatprep.subr.mxu0 0.0
    %970 = vmatpush1.msra.mxu0 %v78
    %971 = vmatprep.subr.mxu0 0.0
    %972 = vmatpush1.msra.mxu0 %v77
    %973 = vmatprep.subr.mxu0 0.0
    %974 = vmatpush1.msra.mxu0 %v76
    %975 = vmatprep.subr.mxu0 0.0
    %976 = vmatpush1.msra.mxu0 %v75
    %977 = vmatprep.subr.mxu0 0.0
    %978 = vmatpush1.msra.mxu0 %v74
    %979 = vmatprep.subr.mxu0 0.0
    %980 = vmatpush1.msra.mxu0 %v73
    %981 = vmatprep.subr.mxu0 0.0
    %982 = vmatpush1.msra.mxu0 %v72
    %983 = vmatprep.subr.mxu0 0.0
    %984 = vmatpush1.msra.mxu0 %v71
    %985 = vmatprep.subr.mxu0 0.0
    %986 = vmatpush1.msra.mxu0 %v70
    %987 = vmatprep.subr.mxu0 0.0
    %988 = vmatpush2.msra.mxu0 0.0
    %989 = vmatprep.subr.mxu0 0.0
    %990 = vmatpush2.msra.mxu0 0.0
    %991 = vmatprep.subr.mxu0 0.0
    %992 = vmatpush2.msra.mxu0 0.0
    %993 = vmatprep.subr.mxu0 0.0
    %994 = vmatpush2.msra.mxu0 0.0
    %995 = vmatprep.subr.mxu0 0.0
    %996 = vmatpush2.msra.mxu0 0.0
    %997 = vmatprep.subr.mxu0 0.0
    %998 = vmatpush2.msra.mxu0 0.0
    %999 = vmatprep.subr.mxu0 0.0
    %1000 = vmatpush2.msra.mxu0 0.0
    %1001 = vmatprep.subr.mxu0 0.0
    %1002 = vmatpush2.msra.mxu0 0.0
    %1003 = vmatprep.subr.mxu0 0.0
    %1004 = vmatpush2.msra.mxu0 %v93
    %1005 = vmatprep.subr.mxu0 0.0
    %1006 = vmatpush2.msra.mxu0 %v92
    %1007 = vmatprep.subr.mxu0 0.0
    %1008 = vmatpush2.msra.mxu0 %v91
    %1009 = vmatprep.subr.mxu0 0.0
    %1010 = vmatpush2.msra.mxu0 %v90
    %1011 = vmatprep.subr.mxu0 0.0
    %1012 = vmatpush2.msra.mxu0 %v89
    %1013 = vmatprep.subr.mxu0 0.0
    %1014 = vmatpush2.msra.mxu0 %v88
    %1015 = vmatprep.subr.mxu0 0.0
    %1016 = vmatpush2.msra.mxu0 %v87
    %1017 = vmatprep.subr.mxu0 0.0
    %1018 = vmatpush2.msra.mxu0 %v86
    %1019 = vmatprep.mubr.f32.mxu0 %v944
    %1020 = vmatmul.mubr.f32.gmra.mxu0 %v935
    %v1021 = vpop.f32.mrf.mxu0
    %v1022 = vadd.f32 0.0, %v1021
    %v1023 = vpop.f32.mrf.mxu0
    %1024 = vmatprep.mubr.f32.mxu0 %v947
    %1025 = vmatmul.mubr.f32.gmra.mxu0 %v937
    %v1026 = vpop.f32.mrf.mxu0
    %v1027 = vadd.f32 0.0, %v1026
    %v1028 = vpop.f32.mrf.mxu0
    %1029 = vmatprep.mubr.f32.mxu0 %v950
    %1030 = vmatmul.mubr.f32.gmra.mxu0 %v939
    %v1031 = vpop.f32.mrf.mxu0
    %v1032 = vadd.f32 0.0, %v1031
    %v1033 = vpop.f32.mrf.mxu0
    %1034 = vmatprep.mubr.f32.mxu0 %v953
    %1035 = vmatmul.mubr.f32.gmra.mxu0 %v941
    %v1036 = vpop.f32.mrf.mxu0
    %v1037 = vadd.f32 0.0, %v1036
    %v1038 = vpop.f32.mrf.mxu0
    %1039 = vdwg.mxu0
    %s1040 = scalar_lea.vmem %s2, 128
    %v1041 = vld [vmem:[%s1040] sm:$0xff]
    %v1042 = vld [vmem:[%s1040 + $0x8] sm:$0xff]
    %v1043 = vld [vmem:[%s1040 + $0x10] sm:$0xff]
    %v1044 = vld [vmem:[%s1040 + $0x18] sm:$0xff]
    %v1046 = vsel %vm315, %v1022, 0
    %v1049 = vsel %vm315, %v1027, 0
    %v1052 = vsel %vm315, %v1032, 0
    %v1055 = vsel %vm315, %v1037, 0
    %1057 = vmatprep.subr.mxu0 0.0
    %1058 = vmatpush1.msra.mxu0 0.0
    %1059 = vmatprep.subr.mxu0 0.0
    %1060 = vmatpush1.msra.mxu0 0.0
    %1061 = vmatprep.subr.mxu0 0.0
    %1062 = vmatpush1.msra.mxu0 0.0
    %1063 = vmatprep.subr.mxu0 0.0
    %1064 = vmatpush1.msra.mxu0 0.0
    %1065 = vmatprep.subr.mxu0 0.0
    %1066 = vmatpush1.msra.mxu0 0.0
    %1067 = vmatprep.subr.mxu0 0.0
    %1068 = vmatpush1.msra.mxu0 0.0
    %1069 = vmatprep.subr.mxu0 0.0
    %1070 = vmatpush1.msra.mxu0 0.0
    %1071 = vmatprep.subr.mxu0 0.0
    %1072 = vmatpush1.msra.mxu0 0.0
    %1073 = vmatprep.subr.mxu0 0.0
    %1074 = vmatpush1.msra.mxu0 0.0
    %1075 = vmatprep.subr.mxu0 0.0
    %1076 = vmatpush1.msra.mxu0 0.0
    %1077 = vmatprep.subr.mxu0 0.0
    %1078 = vmatpush1.msra.mxu0 0.0
    %1079 = vmatprep.subr.mxu0 0.0
    %1080 = vmatpush1.msra.mxu0 0.0
    %1081 = vmatprep.subr.mxu0 0.0
    %1082 = vmatpush1.msra.mxu0 %v1044
    %1083 = vmatprep.subr.mxu0 0.0
    %1084 = vmatpush1.msra.mxu0 %v1043
    %1085 = vmatprep.subr.mxu0 0.0
    %1086 = vmatpush1.msra.mxu0 %v1042
    %1087 = vmatprep.subr.mxu0 0.0
    %1088 = vmatpush1.msra.mxu0 %v1041
    %1089 = vmatprep.subr.mxu0 0.0
    %1090 = vmatpush2.msra.mxu0 0.0
    %1091 = vmatprep.subr.mxu0 0.0
    %1092 = vmatpush2.msra.mxu0 0.0
    %1093 = vmatprep.subr.mxu0 0.0
    %1094 = vmatpush2.msra.mxu0 0.0
    %1095 = vmatprep.subr.mxu0 0.0
    %1096 = vmatpush2.msra.mxu0 0.0
    %1097 = vmatprep.subr.mxu0 0.0
    %1098 = vmatpush2.msra.mxu0 0.0
    %1099 = vmatprep.subr.mxu0 0.0
    %1100 = vmatpush2.msra.mxu0 0.0
    %1101 = vmatprep.subr.mxu0 0.0
    %1102 = vmatpush2.msra.mxu0 0.0
    %1103 = vmatprep.subr.mxu0 0.0
    %1104 = vmatpush2.msra.mxu0 0.0
    %1105 = vmatprep.subr.mxu0 0.0
    %1106 = vmatpush2.msra.mxu0 0.0
    %1107 = vmatprep.subr.mxu0 0.0
    %1108 = vmatpush2.msra.mxu0 0.0
    %1109 = vmatprep.subr.mxu0 0.0
    %1110 = vmatpush2.msra.mxu0 0.0
    %1111 = vmatprep.subr.mxu0 0.0
    %1112 = vmatpush2.msra.mxu0 0.0
    %1113 = vmatprep.subr.mxu0 0.0
    %1114 = vmatpush2.msra.mxu0 0.0
    %1115 = vmatprep.subr.mxu0 0.0
    %1116 = vmatpush2.msra.mxu0 0.0
    %1117 = vmatprep.subr.mxu0 0.0
    %1118 = vmatpush2.msra.mxu0 0.0
    %1119 = vmatprep.subr.mxu0 0.0
    %1120 = vmatpush2.msra.mxu0 0.0
    %1121 = vmatprep.mubr.f32.mxu0 0.0
    %1122 = vmatmul.mubr.f32.gmra.mxu0 %v1046
    %v1123 = vpop.f32.mrf.mxu0
    %v1124 = vadd.f32 0.0, %v1123
    %v1125 = vpop.f32.mrf.mxu0
    %1126 = vmatprep.mubr.f32.mxu0 0.0
    %1127 = vmatmul.mubr.f32.gmra.mxu0 %v1049
    %v1128 = vpop.f32.mrf.mxu0
    %v1129 = vadd.f32 0.0, %v1128
    %v1130 = vpop.f32.mrf.mxu0
    %1131 = vmatprep.mubr.f32.mxu0 0.0
    %1132 = vmatmul.mubr.f32.gmra.mxu0 %v1052
    %v1133 = vpop.f32.mrf.mxu0
    %v1134 = vadd.f32 0.0, %v1133
    %v1135 = vpop.f32.mrf.mxu0
    %1136 = vmatprep.mubr.f32.mxu0 0.0
    %1137 = vmatmul.mubr.f32.gmra.mxu0 %v1055
    %v1138 = vpop.f32.mrf.mxu0
    %v1139 = vadd.f32 0.0, %v1138
    %v1140 = vpop.f32.mrf.mxu0
    %1141 = vdwg.mxu0
    %v1142 = vadd.f32 %v930, %v1124
    %v1143 = vadd.f32 %v931, %v1129
    %v1144 = vadd.f32 %v932, %v1134
    %v1145 = vadd.f32 %v933, %v1139
    %s1146 = scalar_lea.vmem %s1, 320
    %v1147 = vld [vmem:[%s1146] sm:$0xff]
    %v1148 = vld [vmem:[%s1146 + $0x8] sm:$0xff]
    %v1149 = vld [vmem:[%s1146 + $0x10] sm:$0xff]
    %v1150 = vld [vmem:[%s1146 + $0x18] sm:$0xff]
    %v1151 = vld [vmem:[%s1146 + $0x20] sm:$0xff]
    %v1152 = vld [vmem:[%s1146 + $0x28] sm:$0xff]
    %v1153 = vld [vmem:[%s1146 + $0x30] sm:$0x3f]
    %v1154 = vld [vmem:[%s1146 + $0x38] sm:$0x3f]
    %v1156 = vsel %vm102, %v1148, 0
    %v1159 = vsel %vm102, %v1150, 0
    %v1162 = vsel %vm102, %v1152, 0
    %v1165 = vsel %vm102, %v1154, 0
    %1167 = vmatprep.subr.mxu0 0.0
    %1168 = vmatpush1.msra.mxu0 %v85
    %1169 = vmatprep.subr.mxu0 0.0
    %1170 = vmatpush1.msra.mxu0 %v84
    %1171 = vmatprep.subr.mxu0 0.0
    %1172 = vmatpush1.msra.mxu0 %v83
    %1173 = vmatprep.subr.mxu0 0.0
    %1174 = vmatpush1.msra.mxu0 %v82
    %1175 = vmatprep.subr.mxu0 0.0
    %1176 = vmatpush1.msra.mxu0 %v81
    %1177 = vmatprep.subr.mxu0 0.0
    %1178 = vmatpush1.msra.mxu0 %v80
    %1179 = vmatprep.subr.mxu0 0.0
    %1180 = vmatpush1.msra.mxu0 %v79
    %1181 = vmatprep.subr.mxu0 0.0
    %1182 = vmatpush1.msra.mxu0 %v78
    %1183 = vmatprep.subr.mxu0 0.0
    %1184 = vmatpush1.msra.mxu0 %v77
    %1185 = vmatprep.subr.mxu0 0.0
    %1186 = vmatpush1.msra.mxu0 %v76
    %1187 = vmatprep.subr.mxu0 0.0
    %1188 = vmatpush1.msra.mxu0 %v75
    %1189 = vmatprep.subr.mxu0 0.0
    %1190 = vmatpush1.msra.mxu0 %v74
    %1191 = vmatprep.subr.mxu0 0.0
    %1192 = vmatpush1.msra.mxu0 %v73
    %1193 = vmatprep.subr.mxu0 0.0
    %1194 = vmatpush1.msra.mxu0 %v72
    %1195 = vmatprep.subr.mxu0 0.0
    %1196 = vmatpush1.msra.mxu0 %v71
    %1197 = vmatprep.subr.mxu0 0.0
    %1198 = vmatpush1.msra.mxu0 %v70
    %1199 = vmatprep.subr.mxu0 0.0
    %1200 = vmatpush2.msra.mxu0 0.0
    %1201 = vmatprep.subr.mxu0 0.0
    %1202 = vmatpush2.msra.mxu0 0.0
    %1203 = vmatprep.subr.mxu0 0.0
    %1204 = vmatpush2.msra.mxu0 0.0
    %1205 = vmatprep.subr.mxu0 0.0
    %1206 = vmatpush2.msra.mxu0 0.0
    %1207 = vmatprep.subr.mxu0 0.0
    %1208 = vmatpush2.msra.mxu0 0.0
    %1209 = vmatprep.subr.mxu0 0.0
    %1210 = vmatpush2.msra.mxu0 0.0
    %1211 = vmatprep.subr.mxu0 0.0
    %1212 = vmatpush2.msra.mxu0 0.0
    %1213 = vmatprep.subr.mxu0 0.0
    %1214 = vmatpush2.msra.mxu0 0.0
    %1215 = vmatprep.subr.mxu0 0.0
    %1216 = vmatpush2.msra.mxu0 %v93
    %1217 = vmatprep.subr.mxu0 0.0
    %1218 = vmatpush2.msra.mxu0 %v92
    %1219 = vmatprep.subr.mxu0 0.0
    %1220 = vmatpush2.msra.mxu0 %v91
    %1221 = vmatprep.subr.mxu0 0.0
    %1222 = vmatpush2.msra.mxu0 %v90
    %1223 = vmatprep.subr.mxu0 0.0
    %1224 = vmatpush2.msra.mxu0 %v89
    %1225 = vmatprep.subr.mxu0 0.0
    %1226 = vmatpush2.msra.mxu0 %v88
    %1227 = vmatprep.subr.mxu0 0.0
    %1228 = vmatpush2.msra.mxu0 %v87
    %1229 = vmatprep.subr.mxu0 0.0
    %1230 = vmatpush2.msra.mxu0 %v86
    %1231 = vmatprep.mubr.f32.mxu0 %v1156
    %1232 = vmatmul.mubr.f32.gmra.mxu0 %v1147
    %v1233 = vpop.f32.mrf.mxu0
    %v1234 = vadd.f32 0.0, %v1233
    %v1235 = vpop.f32.mrf.mxu0
    %1236 = vmatprep.mubr.f32.mxu0 %v1159
    %1237 = vmatmul.mubr.f32.gmra.mxu0 %v1149
    %v1238 = vpop.f32.mrf.mxu0
    %v1239 = vadd.f32 0.0, %v1238
    %v1240 = vpop.f32.mrf.mxu0
    %1241 = vmatprep.mubr.f32.mxu0 %v1162
    %1242 = vmatmul.mubr.f32.gmra.mxu0 %v1151
    %v1243 = vpop.f32.mrf.mxu0
    %v1244 = vadd.f32 0.0, %v1243
    %v1245 = vpop.f32.mrf.mxu0
    %1246 = vmatprep.mubr.f32.mxu0 %v1165
    %1247 = vmatmul.mubr.f32.gmra.mxu0 %v1153
    %v1248 = vpop.f32.mrf.mxu0
    %v1249 = vadd.f32 0.0, %v1248
    %v1250 = vpop.f32.mrf.mxu0
    %1251 = vdwg.mxu0
    %s1252 = scalar_lea.vmem %s2, 160
    %v1253 = vld [vmem:[%s1252] sm:$0xff]
    %v1254 = vld [vmem:[%s1252 + $0x8] sm:$0xff]
    %v1255 = vld [vmem:[%s1252 + $0x10] sm:$0xff]
    %v1256 = vld [vmem:[%s1252 + $0x18] sm:$0xff]
    %v1258 = vsel %vm315, %v1234, 0
    %v1261 = vsel %vm315, %v1239, 0
    %v1264 = vsel %vm315, %v1244, 0
    %v1267 = vsel %vm315, %v1249, 0
    %1269 = vmatprep.subr.mxu0 0.0
    %1270 = vmatpush1.msra.mxu0 0.0
    %1271 = vmatprep.subr.mxu0 0.0
    %1272 = vmatpush1.msra.mxu0 0.0
    %1273 = vmatprep.subr.mxu0 0.0
    %1274 = vmatpush1.msra.mxu0 0.0
    %1275 = vmatprep.subr.mxu0 0.0
    %1276 = vmatpush1.msra.mxu0 0.0
    %1277 = vmatprep.subr.mxu0 0.0
    %1278 = vmatpush1.msra.mxu0 0.0
    %1279 = vmatprep.subr.mxu0 0.0
    %1280 = vmatpush1.msra.mxu0 0.0
    %1281 = vmatprep.subr.mxu0 0.0
    %1282 = vmatpush1.msra.mxu0 0.0
    %1283 = vmatprep.subr.mxu0 0.0
    %1284 = vmatpush1.msra.mxu0 0.0
    %1285 = vmatprep.subr.mxu0 0.0
    %1286 = vmatpush1.msra.mxu0 0.0
    %1287 = vmatprep.subr.mxu0 0.0
    %1288 = vmatpush1.msra.mxu0 0.0
    %1289 = vmatprep.subr.mxu0 0.0
    %1290 = vmatpush1.msra.mxu0 0.0
    %1291 = vmatprep.subr.mxu0 0.0
    %1292 = vmatpush1.msra.mxu0 0.0
    %1293 = vmatprep.subr.mxu0 0.0
    %1294 = vmatpush1.msra.mxu0 %v1256
    %1295 = vmatprep.subr.mxu0 0.0
    %1296 = vmatpush1.msra.mxu0 %v1255
    %1297 = vmatprep.subr.mxu0 0.0
    %1298 = vmatpush1.msra.mxu0 %v1254
    %1299 = vmatprep.subr.mxu0 0.0
    %1300 = vmatpush1.msra.mxu0 %v1253
    %1301 = vmatprep.subr.mxu0 0.0
    %1302 = vmatpush2.msra.mxu0 0.0
    %1303 = vmatprep.subr.mxu0 0.0
    %1304 = vmatpush2.msra.mxu0 0.0
    %1305 = vmatprep.subr.mxu0 0.0
    %1306 = vmatpush2.msra.mxu0 0.0
    %1307 = vmatprep.subr.mxu0 0.0
    %1308 = vmatpush2.msra.mxu0 0.0
    %1309 = vmatprep.subr.mxu0 0.0
    %1310 = vmatpush2.msra.mxu0 0.0
    %1311 = vmatprep.subr.mxu0 0.0
    %1312 = vmatpush2.msra.mxu0 0.0
    %1313 = vmatprep.subr.mxu0 0.0
    %1314 = vmatpush2.msra.mxu0 0.0
    %1315 = vmatprep.subr.mxu0 0.0
    %1316 = vmatpush2.msra.mxu0 0.0
    %1317 = vmatprep.subr.mxu0 0.0
    %1318 = vmatpush2.msra.mxu0 0.0
    %1319 = vmatprep.subr.mxu0 0.0
    %1320 = vmatpush2.msra.mxu0 0.0
    %1321 = vmatprep.subr.mxu0 0.0
    %1322 = vmatpush2.msra.mxu0 0.0
    %1323 = vmatprep.subr.mxu0 0.0
    %1324 = vmatpush2.msra.mxu0 0.0
    %1325 = vmatprep.subr.mxu0 0.0
    %1326 = vmatpush2.msra.mxu0 0.0
    %1327 = vmatprep.subr.mxu0 0.0
    %1328 = vmatpush2.msra.mxu0 0.0
    %1329 = vmatprep.subr.mxu0 0.0
    %1330 = vmatpush2.msra.mxu0 0.0
    %1331 = vmatprep.subr.mxu0 0.0
    %1332 = vmatpush2.msra.mxu0 0.0
    %1333 = vmatprep.mubr.f32.mxu0 0.0
    %1334 = vmatmul.mubr.f32.gmra.mxu0 %v1258
    %v1335 = vpop.f32.mrf.mxu0
    %v1336 = vadd.f32 0.0, %v1335
    %v1337 = vpop.f32.mrf.mxu0
    %1338 = vmatprep.mubr.f32.mxu0 0.0
    %1339 = vmatmul.mubr.f32.gmra.mxu0 %v1261
    %v1340 = vpop.f32.mrf.mxu0
    %v1341 = vadd.f32 0.0, %v1340
    %v1342 = vpop.f32.mrf.mxu0
    %1343 = vmatprep.mubr.f32.mxu0 0.0
    %1344 = vmatmul.mubr.f32.gmra.mxu0 %v1264
    %v1345 = vpop.f32.mrf.mxu0
    %v1346 = vadd.f32 0.0, %v1345
    %v1347 = vpop.f32.mrf.mxu0
    %1348 = vmatprep.mubr.f32.mxu0 0.0
    %1349 = vmatmul.mubr.f32.gmra.mxu0 %v1267
    %v1350 = vpop.f32.mrf.mxu0
    %v1351 = vadd.f32 0.0, %v1350
    %v1352 = vpop.f32.mrf.mxu0
    %1353 = vdwg.mxu0
    %v1354 = vadd.f32 %v1142, %v1336
    %v1355 = vadd.f32 %v1143, %v1341
    %v1356 = vadd.f32 %v1144, %v1346
    %v1357 = vadd.f32 %v1145, %v1351
    %s1358 = scalar_lea.vmem %s1, 384
    %v1359 = vld [vmem:[%s1358] sm:$0xff]
    %v1360 = vld [vmem:[%s1358 + $0x8] sm:$0xff]
    %v1361 = vld [vmem:[%s1358 + $0x10] sm:$0xff]
    %v1362 = vld [vmem:[%s1358 + $0x18] sm:$0xff]
    %v1363 = vld [vmem:[%s1358 + $0x20] sm:$0xff]
    %v1364 = vld [vmem:[%s1358 + $0x28] sm:$0xff]
    %v1365 = vld [vmem:[%s1358 + $0x30] sm:$0x3f]
    %v1366 = vld [vmem:[%s1358 + $0x38] sm:$0x3f]
    %v1368 = vsel %vm102, %v1360, 0
    %v1371 = vsel %vm102, %v1362, 0
    %v1374 = vsel %vm102, %v1364, 0
    %v1377 = vsel %vm102, %v1366, 0
    %1379 = vmatprep.subr.mxu0 0.0
    %1380 = vmatpush1.msra.mxu0 %v85
    %1381 = vmatprep.subr.mxu0 0.0
    %1382 = vmatpush1.msra.mxu0 %v84
    %1383 = vmatprep.subr.mxu0 0.0
    %1384 = vmatpush1.msra.mxu0 %v83
    %1385 = vmatprep.subr.mxu0 0.0
    %1386 = vmatpush1.msra.mxu0 %v82
    %1387 = vmatprep.subr.mxu0 0.0
    %1388 = vmatpush1.msra.mxu0 %v81
    %1389 = vmatprep.subr.mxu0 0.0
    %1390 = vmatpush1.msra.mxu0 %v80
    %1391 = vmatprep.subr.mxu0 0.0
    %1392 = vmatpush1.msra.mxu0 %v79
    %1393 = vmatprep.subr.mxu0 0.0
    %1394 = vmatpush1.msra.mxu0 %v78
    %1395 = vmatprep.subr.mxu0 0.0
    %1396 = vmatpush1.msra.mxu0 %v77
    %1397 = vmatprep.subr.mxu0 0.0
    %1398 = vmatpush1.msra.mxu0 %v76
    %1399 = vmatprep.subr.mxu0 0.0
    %1400 = vmatpush1.msra.mxu0 %v75
    %1401 = vmatprep.subr.mxu0 0.0
    %1402 = vmatpush1.msra.mxu0 %v74
    %1403 = vmatprep.subr.mxu0 0.0
    %1404 = vmatpush1.msra.mxu0 %v73
    %1405 = vmatprep.subr.mxu0 0.0
    %1406 = vmatpush1.msra.mxu0 %v72
    %1407 = vmatprep.subr.mxu0 0.0
    %1408 = vmatpush1.msra.mxu0 %v71
    %1409 = vmatprep.subr.mxu0 0.0
    %1410 = vmatpush1.msra.mxu0 %v70
    %1411 = vmatprep.subr.mxu0 0.0
    %1412 = vmatpush2.msra.mxu0 0.0
    %1413 = vmatprep.subr.mxu0 0.0
    %1414 = vmatpush2.msra.mxu0 0.0
    %1415 = vmatprep.subr.mxu0 0.0
    %1416 = vmatpush2.msra.mxu0 0.0
    %1417 = vmatprep.subr.mxu0 0.0
    %1418 = vmatpush2.msra.mxu0 0.0
    %1419 = vmatprep.subr.mxu0 0.0
    %1420 = vmatpush2.msra.mxu0 0.0
    %1421 = vmatprep.subr.mxu0 0.0
    %1422 = vmatpush2.msra.mxu0 0.0
    %1423 = vmatprep.subr.mxu0 0.0
    %1424 = vmatpush2.msra.mxu0 0.0
    %1425 = vmatprep.subr.mxu0 0.0
    %1426 = vmatpush2.msra.mxu0 0.0
    %1427 = vmatprep.subr.mxu0 0.0
    %1428 = vmatpush2.msra.mxu0 %v93
    %1429 = vmatprep.subr.mxu0 0.0
    %1430 = vmatpush2.msra.mxu0 %v92
    %1431 = vmatprep.subr.mxu0 0.0
    %1432 = vmatpush2.msra.mxu0 %v91
    %1433 = vmatprep.subr.mxu0 0.0
    %1434 = vmatpush2.msra.mxu0 %v90
    %1435 = vmatprep.subr.mxu0 0.0
    %1436 = vmatpush2.msra.mxu0 %v89
    %1437 = vmatprep.subr.mxu0 0.0
    %1438 = vmatpush2.msra.mxu0 %v88
    %1439 = vmatprep.subr.mxu0 0.0
    %1440 = vmatpush2.msra.mxu0 %v87
    %1441 = vmatprep.subr.mxu0 0.0
    %1442 = vmatpush2.msra.mxu0 %v86
    %1443 = vmatprep.mubr.f32.mxu0 %v1368
    %1444 = vmatmul.mubr.f32.gmra.mxu0 %v1359
    %v1445 = vpop.f32.mrf.mxu0
    %v1446 = vadd.f32 0.0, %v1445
    %v1447 = vpop.f32.mrf.mxu0
    %1448 = vmatprep.mubr.f32.mxu0 %v1371
    %1449 = vmatmul.mubr.f32.gmra.mxu0 %v1361
    %v1450 = vpop.f32.mrf.mxu0
    %v1451 = vadd.f32 0.0, %v1450
    %v1452 = vpop.f32.mrf.mxu0
    %1453 = vmatprep.mubr.f32.mxu0 %v1374
    %1454 = vmatmul.mubr.f32.gmra.mxu0 %v1363
    %v1455 = vpop.f32.mrf.mxu0
    %v1456 = vadd.f32 0.0, %v1455
    %v1457 = vpop.f32.mrf.mxu0
    %1458 = vmatprep.mubr.f32.mxu0 %v1377
    %1459 = vmatmul.mubr.f32.gmra.mxu0 %v1365
    %v1460 = vpop.f32.mrf.mxu0
    %v1461 = vadd.f32 0.0, %v1460
    %v1462 = vpop.f32.mrf.mxu0
    %1463 = vdwg.mxu0
    %s1464 = scalar_lea.vmem %s2, 192
    %v1465 = vld [vmem:[%s1464] sm:$0xff]
    %v1466 = vld [vmem:[%s1464 + $0x8] sm:$0xff]
    %v1467 = vld [vmem:[%s1464 + $0x10] sm:$0xff]
    %v1468 = vld [vmem:[%s1464 + $0x18] sm:$0xff]
    %v1470 = vsel %vm315, %v1446, 0
    %v1473 = vsel %vm315, %v1451, 0
    %v1476 = vsel %vm315, %v1456, 0
    %v1479 = vsel %vm315, %v1461, 0
    %1481 = vmatprep.subr.mxu0 0.0
    %1482 = vmatpush1.msra.mxu0 0.0
    %1483 = vmatprep.subr.mxu0 0.0
    %1484 = vmatpush1.msra.mxu0 0.0
    %1485 = vmatprep.subr.mxu0 0.0
    %1486 = vmatpush1.msra.mxu0 0.0
    %1487 = vmatprep.subr.mxu0 0.0
    %1488 = vmatpush1.msra.mxu0 0.0
    %1489 = vmatprep.subr.mxu0 0.0
    %1490 = vmatpush1.msra.mxu0 0.0
    %1491 = vmatprep.subr.mxu0 0.0
    %1492 = vmatpush1.msra.mxu0 0.0
    %1493 = vmatprep.subr.mxu0 0.0
    %1494 = vmatpush1.msra.mxu0 0.0
    %1495 = vmatprep.subr.mxu0 0.0
    %1496 = vmatpush1.msra.mxu0 0.0
    %1497 = vmatprep.subr.mxu0 0.0
    %1498 = vmatpush1.msra.mxu0 0.0
    %1499 = vmatprep.subr.mxu0 0.0
    %1500 = vmatpush1.msra.mxu0 0.0
    %1501 = vmatprep.subr.mxu0 0.0
    %1502 = vmatpush1.msra.mxu0 0.0
    %1503 = vmatprep.subr.mxu0 0.0
    %1504 = vmatpush1.msra.mxu0 0.0
    %1505 = vmatprep.subr.mxu0 0.0
    %1506 = vmatpush1.msra.mxu0 %v1468
    %1507 = vmatprep.subr.mxu0 0.0
    %1508 = vmatpush1.msra.mxu0 %v1467
    %1509 = vmatprep.subr.mxu0 0.0
    %1510 = vmatpush1.msra.mxu0 %v1466
    %1511 = vmatprep.subr.mxu0 0.0
    %1512 = vmatpush1.msra.mxu0 %v1465
    %1513 = vmatprep.subr.mxu0 0.0
    %1514 = vmatpush2.msra.mxu0 0.0
    %1515 = vmatprep.subr.mxu0 0.0
    %1516 = vmatpush2.msra.mxu0 0.0
    %1517 = vmatprep.subr.mxu0 0.0
    %1518 = vmatpush2.msra.mxu0 0.0
    %1519 = vmatprep.subr.mxu0 0.0
    %1520 = vmatpush2.msra.mxu0 0.0
    %1521 = vmatprep.subr.mxu0 0.0
    %1522 = vmatpush2.msra.mxu0 0.0
    %1523 = vmatprep.subr.mxu0 0.0
    %1524 = vmatpush2.msra.mxu0 0.0
    %1525 = vmatprep.subr.mxu0 0.0
    %1526 = vmatpush2.msra.mxu0 0.0
    %1527 = vmatprep.subr.mxu0 0.0
    %1528 = vmatpush2.msra.mxu0 0.0
    %1529 = vmatprep.subr.mxu0 0.0
    %1530 = vmatpush2.msra.mxu0 0.0
    %1531 = vmatprep.subr.mxu0 0.0
    %1532 = vmatpush2.msra.mxu0 0.0
    %1533 = vmatprep.subr.mxu0 0.0
    %1534 = vmatpush2.msra.mxu0 0.0
    %1535 = vmatprep.subr.mxu0 0.0
    %1536 = vmatpush2.msra.mxu0 0.0
    %1537 = vmatprep.subr.mxu0 0.0
    %1538 = vmatpush2.msra.mxu0 0.0
    %1539 = vmatprep.subr.mxu0 0.0
    %1540 = vmatpush2.msra.mxu0 0.0
    %1541 = vmatprep.subr.mxu0 0.0
    %1542 = vmatpush2.msra.mxu0 0.0
    %1543 = vmatprep.subr.mxu0 0.0
    %1544 = vmatpush2.msra.mxu0 0.0
    %1545 = vmatprep.mubr.f32.mxu0 0.0
    %1546 = vmatmul.mubr.f32.gmra.mxu0 %v1470
    %v1547 = vpop.f32.mrf.mxu0
    %v1548 = vadd.f32 0.0, %v1547
    %v1549 = vpop.f32.mrf.mxu0
    %1550 = vmatprep.mubr.f32.mxu0 0.0
    %1551 = vmatmul.mubr.f32.gmra.mxu0 %v1473
    %v1552 = vpop.f32.mrf.mxu0
    %v1553 = vadd.f32 0.0, %v1552
    %v1554 = vpop.f32.mrf.mxu0
    %1555 = vmatprep.mubr.f32.mxu0 0.0
    %1556 = vmatmul.mubr.f32.gmra.mxu0 %v1476
    %v1557 = vpop.f32.mrf.mxu0
    %v1558 = vadd.f32 0.0, %v1557
    %v1559 = vpop.f32.mrf.mxu0
    %1560 = vmatprep.mubr.f32.mxu0 0.0
    %1561 = vmatmul.mubr.f32.gmra.mxu0 %v1479
    %v1562 = vpop.f32.mrf.mxu0
    %v1563 = vadd.f32 0.0, %v1562
    %v1564 = vpop.f32.mrf.mxu0
    %1565 = vdwg.mxu0
    %v1566 = vadd.f32 %v1354, %v1548
    %v1567 = vadd.f32 %v1355, %v1553
    %v1568 = vadd.f32 %v1356, %v1558
    %v1569 = vadd.f32 %v1357, %v1563
    %s1570 = scalar_lea.vmem %s1, 448
    %v1571 = vld [vmem:[%s1570] sm:$0xff]
    %v1572 = vld [vmem:[%s1570 + $0x8] sm:$0xff]
    %v1573 = vld [vmem:[%s1570 + $0x10] sm:$0xff]
    %v1574 = vld [vmem:[%s1570 + $0x18] sm:$0xff]
    %v1575 = vld [vmem:[%s1570 + $0x20] sm:$0xff]
    %v1576 = vld [vmem:[%s1570 + $0x28] sm:$0xff]
    %v1577 = vld [vmem:[%s1570 + $0x30] sm:$0x3f]
    %v1578 = vld [vmem:[%s1570 + $0x38] sm:$0x3f]
    %v1580 = vsel %vm102, %v1572, 0
    %v1583 = vsel %vm102, %v1574, 0
    %v1586 = vsel %vm102, %v1576, 0
    %v1589 = vsel %vm102, %v1578, 0
    %1591 = vmatprep.subr.mxu0 0.0
    %1592 = vmatpush1.msra.mxu0 %v85
    %1593 = vmatprep.subr.mxu0 0.0
    %1594 = vmatpush1.msra.mxu0 %v84
    %1595 = vmatprep.subr.mxu0 0.0
    %1596 = vmatpush1.msra.mxu0 %v83
    %1597 = vmatprep.subr.mxu0 0.0
    %1598 = vmatpush1.msra.mxu0 %v82
    %1599 = vmatprep.subr.mxu0 0.0
    %1600 = vmatpush1.msra.mxu0 %v81
    %1601 = vmatprep.subr.mxu0 0.0
    %1602 = vmatpush1.msra.mxu0 %v80
    %1603 = vmatprep.subr.mxu0 0.0
    %1604 = vmatpush1.msra.mxu0 %v79
    %1605 = vmatprep.subr.mxu0 0.0
    %1606 = vmatpush1.msra.mxu0 %v78
    %1607 = vmatprep.subr.mxu0 0.0
    %1608 = vmatpush1.msra.mxu0 %v77
    %1609 = vmatprep.subr.mxu0 0.0
    %1610 = vmatpush1.msra.mxu0 %v76
    %1611 = vmatprep.subr.mxu0 0.0
    %1612 = vmatpush1.msra.mxu0 %v75
    %1613 = vmatprep.subr.mxu0 0.0
    %1614 = vmatpush1.msra.mxu0 %v74
    %1615 = vmatprep.subr.mxu0 0.0
    %1616 = vmatpush1.msra.mxu0 %v73
    %1617 = vmatprep.subr.mxu0 0.0
    %1618 = vmatpush1.msra.mxu0 %v72
    %1619 = vmatprep.subr.mxu0 0.0
    %1620 = vmatpush1.msra.mxu0 %v71
    %1621 = vmatprep.subr.mxu0 0.0
    %1622 = vmatpush1.msra.mxu0 %v70
    %1623 = vmatprep.subr.mxu0 0.0
    %1624 = vmatpush2.msra.mxu0 0.0
    %1625 = vmatprep.subr.mxu0 0.0
    %1626 = vmatpush2.msra.mxu0 0.0
    %1627 = vmatprep.subr.mxu0 0.0
    %1628 = vmatpush2.msra.mxu0 0.0
    %1629 = vmatprep.subr.mxu0 0.0
    %1630 = vmatpush2.msra.mxu0 0.0
    %1631 = vmatprep.subr.mxu0 0.0
    %1632 = vmatpush2.msra.mxu0 0.0
    %1633 = vmatprep.subr.mxu0 0.0
    %1634 = vmatpush2.msra.mxu0 0.0
    %1635 = vmatprep.subr.mxu0 0.0
    %1636 = vmatpush2.msra.mxu0 0.0
    %1637 = vmatprep.subr.mxu0 0.0
    %1638 = vmatpush2.msra.mxu0 0.0
    %1639 = vmatprep.subr.mxu0 0.0
    %1640 = vmatpush2.msra.mxu0 %v93
    %1641 = vmatprep.subr.mxu0 0.0
    %1642 = vmatpush2.msra.mxu0 %v92
    %1643 = vmatprep.subr.mxu0 0.0
    %1644 = vmatpush2.msra.mxu0 %v91
    %1645 = vmatprep.subr.mxu0 0.0
    %1646 = vmatpush2.msra.mxu0 %v90
    %1647 = vmatprep.subr.mxu0 0.0
    %1648 = vmatpush2.msra.mxu0 %v89
    %1649 = vmatprep.subr.mxu0 0.0
    %1650 = vmatpush2.msra.mxu0 %v88
    %1651 = vmatprep.subr.mxu0 0.0
    %1652 = vmatpush2.msra.mxu0 %v87
    %1653 = vmatprep.subr.mxu0 0.0
    %1654 = vmatpush2.msra.mxu0 %v86
    %1655 = vmatprep.mubr.f32.mxu0 %v1580
    %1656 = vmatmul.mubr.f32.gmra.mxu0 %v1571
    %v1657 = vpop.f32.mrf.mxu0
    %v1658 = vadd.f32 0.0, %v1657
    %v1659 = vpop.f32.mrf.mxu0
    %1660 = vmatprep.mubr.f32.mxu0 %v1583
    %1661 = vmatmul.mubr.f32.gmra.mxu0 %v1573
    %v1662 = vpop.f32.mrf.mxu0
    %v1663 = vadd.f32 0.0, %v1662
    %v1664 = vpop.f32.mrf.mxu0
    %1665 = vmatprep.mubr.f32.mxu0 %v1586
    %1666 = vmatmul.mubr.f32.gmra.mxu0 %v1575
    %v1667 = vpop.f32.mrf.mxu0
    %v1668 = vadd.f32 0.0, %v1667
    %v1669 = vpop.f32.mrf.mxu0
    %1670 = vmatprep.mubr.f32.mxu0 %v1589
    %1671 = vmatmul.mubr.f32.gmra.mxu0 %v1577
    %v1672 = vpop.f32.mrf.mxu0
    %v1673 = vadd.f32 0.0, %v1672
    %v1674 = vpop.f32.mrf.mxu0
    %1675 = vdwg.mxu0
    %s1676 = scalar_lea.vmem %s2, 224
    %v1677 = vld [vmem:[%s1676] sm:$0xff]
    %v1678 = vld [vmem:[%s1676 + $0x8] sm:$0xff]
    %v1679 = vld [vmem:[%s1676 + $0x10] sm:$0xff]
    %v1680 = vld [vmem:[%s1676 + $0x18] sm:$0xff]
    %v1682 = vsel %vm315, %v1658, 0
    %v1685 = vsel %vm315, %v1663, 0
    %v1688 = vsel %vm315, %v1668, 0
    %v1691 = vsel %vm315, %v1673, 0
    %1693 = vmatprep.subr.mxu0 0.0
    %1694 = vmatpush1.msra.mxu0 0.0
    %1695 = vmatprep.subr.mxu0 0.0
    %1696 = vmatpush1.msra.mxu0 0.0
    %1697 = vmatprep.subr.mxu0 0.0
    %1698 = vmatpush1.msra.mxu0 0.0
    %1699 = vmatprep.subr.mxu0 0.0
    %1700 = vmatpush1.msra.mxu0 0.0
    %1701 = vmatprep.subr.mxu0 0.0
    %1702 = vmatpush1.msra.mxu0 0.0
    %1703 = vmatprep.subr.mxu0 0.0
    %1704 = vmatpush1.msra.mxu0 0.0
    %1705 = vmatprep.subr.mxu0 0.0
    %1706 = vmatpush1.msra.mxu0 0.0
    %1707 = vmatprep.subr.mxu0 0.0
    %1708 = vmatpush1.msra.mxu0 0.0
    %1709 = vmatprep.subr.mxu0 0.0
    %1710 = vmatpush1.msra.mxu0 0.0
    %1711 = vmatprep.subr.mxu0 0.0
    %1712 = vmatpush1.msra.mxu0 0.0
    %1713 = vmatprep.subr.mxu0 0.0
    %1714 = vmatpush1.msra.mxu0 0.0
    %1715 = vmatprep.subr.mxu0 0.0
    %1716 = vmatpush1.msra.mxu0 0.0
    %1717 = vmatprep.subr.mxu0 0.0
    %1718 = vmatpush1.msra.mxu0 %v1680
    %1719 = vmatprep.subr.mxu0 0.0
    %1720 = vmatpush1.msra.mxu0 %v1679
    %1721 = vmatprep.subr.mxu0 0.0
    %1722 = vmatpush1.msra.mxu0 %v1678
    %1723 = vmatprep.subr.mxu0 0.0
    %1724 = vmatpush1.msra.mxu0 %v1677
    %1725 = vmatprep.subr.mxu0 0.0
    %1726 = vmatpush2.msra.mxu0 0.0
    %1727 = vmatprep.subr.mxu0 0.0
    %1728 = vmatpush2.msra.mxu0 0.0
    %1729 = vmatprep.subr.mxu0 0.0
    %1730 = vmatpush2.msra.mxu0 0.0
    %1731 = vmatprep.subr.mxu0 0.0
    %1732 = vmatpush2.msra.mxu0 0.0
    %1733 = vmatprep.subr.mxu0 0.0
    %1734 = vmatpush2.msra.mxu0 0.0
    %1735 = vmatprep.subr.mxu0 0.0
    %1736 = vmatpush2.msra.mxu0 0.0
    %1737 = vmatprep.subr.mxu0 0.0
    %1738 = vmatpush2.msra.mxu0 0.0
    %1739 = vmatprep.subr.mxu0 0.0
    %1740 = vmatpush2.msra.mxu0 0.0
    %1741 = vmatprep.subr.mxu0 0.0
    %1742 = vmatpush2.msra.mxu0 0.0
    %1743 = vmatprep.subr.mxu0 0.0
    %1744 = vmatpush2.msra.mxu0 0.0
    %1745 = vmatprep.subr.mxu0 0.0
    %1746 = vmatpush2.msra.mxu0 0.0
    %1747 = vmatprep.subr.mxu0 0.0
    %1748 = vmatpush2.msra.mxu0 0.0
    %1749 = vmatprep.subr.mxu0 0.0
    %1750 = vmatpush2.msra.mxu0 0.0
    %1751 = vmatprep.subr.mxu0 0.0
    %1752 = vmatpush2.msra.mxu0 0.0
    %1753 = vmatprep.subr.mxu0 0.0
    %1754 = vmatpush2.msra.mxu0 0.0
    %1755 = vmatprep.subr.mxu0 0.0
    %1756 = vmatpush2.msra.mxu0 0.0
    %1757 = vmatprep.mubr.f32.mxu0 0.0
    %1758 = vmatmul.mubr.f32.gmra.mxu0 %v1682
    %v1759 = vpop.f32.mrf.mxu0
    %v1760 = vadd.f32 0.0, %v1759
    %v1761 = vpop.f32.mrf.mxu0
    %1762 = vmatprep.mubr.f32.mxu0 0.0
    %1763 = vmatmul.mubr.f32.gmra.mxu0 %v1685
    %v1764 = vpop.f32.mrf.mxu0
    %v1765 = vadd.f32 0.0, %v1764
    %v1766 = vpop.f32.mrf.mxu0
    %1767 = vmatprep.mubr.f32.mxu0 0.0
    %1768 = vmatmul.mubr.f32.gmra.mxu0 %v1688
    %v1769 = vpop.f32.mrf.mxu0
    %v1770 = vadd.f32 0.0, %v1769
    %v1771 = vpop.f32.mrf.mxu0
    %1772 = vmatprep.mubr.f32.mxu0 0.0
    %1773 = vmatmul.mubr.f32.gmra.mxu0 %v1691
    %v1774 = vpop.f32.mrf.mxu0
    %v1775 = vadd.f32 0.0, %v1774
    %v1776 = vpop.f32.mrf.mxu0
    %1777 = vdwg.mxu0
    %v1778 = vadd.f32 %v1566, %v1760
    %v1779 = vadd.f32 %v1567, %v1765
    %v1780 = vadd.f32 %v1568, %v1770
    %v1781 = vadd.f32 %v1569, %v1775
    %s1782 = scalar_lea.vmem %s1, 512
    %v1783 = vld [vmem:[%s1782] sm:$0xff]
    %v1784 = vld [vmem:[%s1782 + $0x8] sm:$0xff]
    %v1785 = vld [vmem:[%s1782 + $0x10] sm:$0xff]
    %v1786 = vld [vmem:[%s1782 + $0x18] sm:$0xff]
    %v1787 = vld [vmem:[%s1782 + $0x20] sm:$0xff]
    %v1788 = vld [vmem:[%s1782 + $0x28] sm:$0xff]
    %v1789 = vld [vmem:[%s1782 + $0x30] sm:$0x3f]
    %v1790 = vld [vmem:[%s1782 + $0x38] sm:$0x3f]
    %v1792 = vsel %vm102, %v1784, 0
    %v1795 = vsel %vm102, %v1786, 0
    %v1798 = vsel %vm102, %v1788, 0
    %v1801 = vsel %vm102, %v1790, 0
    %1803 = vmatprep.subr.mxu0 0.0
    %1804 = vmatpush1.msra.mxu0 %v85
    %1805 = vmatprep.subr.mxu0 0.0
    %1806 = vmatpush1.msra.mxu0 %v84
    %1807 = vmatprep.subr.mxu0 0.0
    %1808 = vmatpush1.msra.mxu0 %v83
    %1809 = vmatprep.subr.mxu0 0.0
    %1810 = vmatpush1.msra.mxu0 %v82
    %1811 = vmatprep.subr.mxu0 0.0
    %1812 = vmatpush1.msra.mxu0 %v81
    %1813 = vmatprep.subr.mxu0 0.0
    %1814 = vmatpush1.msra.mxu0 %v80
    %1815 = vmatprep.subr.mxu0 0.0
    %1816 = vmatpush1.msra.mxu0 %v79
    %1817 = vmatprep.subr.mxu0 0.0
    %1818 = vmatpush1.msra.mxu0 %v78
    %1819 = vmatprep.subr.mxu0 0.0
    %1820 = vmatpush1.msra.mxu0 %v77
    %1821 = vmatprep.subr.mxu0 0.0
    %1822 = vmatpush1.msra.mxu0 %v76
    %1823 = vmatprep.subr.mxu0 0.0
    %1824 = vmatpush1.msra.mxu0 %v75
    %1825 = vmatprep.subr.mxu0 0.0
    %1826 = vmatpush1.msra.mxu0 %v74
    %1827 = vmatprep.subr.mxu0 0.0
    %1828 = vmatpush1.msra.mxu0 %v73
    %1829 = vmatprep.subr.mxu0 0.0
    %1830 = vmatpush1.msra.mxu0 %v72
    %1831 = vmatprep.subr.mxu0 0.0
    %1832 = vmatpush1.msra.mxu0 %v71
    %1833 = vmatprep.subr.mxu0 0.0
    %1834 = vmatpush1.msra.mxu0 %v70
    %1835 = vmatprep.subr.mxu0 0.0
    %1836 = vmatpush2.msra.mxu0 0.0
    %1837 = vmatprep.subr.mxu0 0.0
    %1838 = vmatpush2.msra.mxu0 0.0
    %1839 = vmatprep.subr.mxu0 0.0
    %1840 = vmatpush2.msra.mxu0 0.0
    %1841 = vmatprep.subr.mxu0 0.0
    %1842 = vmatpush2.msra.mxu0 0.0
    %1843 = vmatprep.subr.mxu0 0.0
    %1844 = vmatpush2.msra.mxu0 0.0
    %1845 = vmatprep.subr.mxu0 0.0
    %1846 = vmatpush2.msra.mxu0 0.0
    %1847 = vmatprep.subr.mxu0 0.0
    %1848 = vmatpush2.msra.mxu0 0.0
    %1849 = vmatprep.subr.mxu0 0.0
    %1850 = vmatpush2.msra.mxu0 0.0
    %1851 = vmatprep.subr.mxu0 0.0
    %1852 = vmatpush2.msra.mxu0 %v93
    %1853 = vmatprep.subr.mxu0 0.0
    %1854 = vmatpush2.msra.mxu0 %v92
    %1855 = vmatprep.subr.mxu0 0.0
    %1856 = vmatpush2.msra.mxu0 %v91
    %1857 = vmatprep.subr.mxu0 0.0
    %1858 = vmatpush2.msra.mxu0 %v90
    %1859 = vmatprep.subr.mxu0 0.0
    %1860 = vmatpush2.msra.mxu0 %v89
    %1861 = vmatprep.subr.mxu0 0.0
    %1862 = vmatpush2.msra.mxu0 %v88
    %1863 = vmatprep.subr.mxu0 0.0
    %1864 = vmatpush2.msra.mxu0 %v87
    %1865 = vmatprep.subr.mxu0 0.0
    %1866 = vmatpush2.msra.mxu0 %v86
    %1867 = vmatprep.mubr.f32.mxu0 %v1792
    %1868 = vmatmul.mubr.f32.gmra.mxu0 %v1783
    %v1869 = vpop.f32.mrf.mxu0
    %v1870 = vadd.f32 0.0, %v1869
    %v1871 = vpop.f32.mrf.mxu0
    %1872 = vmatprep.mubr.f32.mxu0 %v1795
    %1873 = vmatmul.mubr.f32.gmra.mxu0 %v1785
    %v1874 = vpop.f32.mrf.mxu0
    %v1875 = vadd.f32 0.0, %v1874
    %v1876 = vpop.f32.mrf.mxu0
    %1877 = vmatprep.mubr.f32.mxu0 %v1798
    %1878 = vmatmul.mubr.f32.gmra.mxu0 %v1787
    %v1879 = vpop.f32.mrf.mxu0
    %v1880 = vadd.f32 0.0, %v1879
    %v1881 = vpop.f32.mrf.mxu0
    %1882 = vmatprep.mubr.f32.mxu0 %v1801
    %1883 = vmatmul.mubr.f32.gmra.mxu0 %v1789
    %v1884 = vpop.f32.mrf.mxu0
    %v1885 = vadd.f32 0.0, %v1884
    %v1886 = vpop.f32.mrf.mxu0
    %1887 = vdwg.mxu0
    %s1888 = scalar_lea.vmem %s2, 256
    %v1889 = vld [vmem:[%s1888] sm:$0xff]
    %v1890 = vld [vmem:[%s1888 + $0x8] sm:$0xff]
    %v1891 = vld [vmem:[%s1888 + $0x10] sm:$0xff]
    %v1892 = vld [vmem:[%s1888 + $0x18] sm:$0xff]
    %v1894 = vsel %vm315, %v1870, 0
    %v1897 = vsel %vm315, %v1875, 0
    %v1900 = vsel %vm315, %v1880, 0
    %v1903 = vsel %vm315, %v1885, 0
    %1905 = vmatprep.subr.mxu0 0.0
    %1906 = vmatpush1.msra.mxu0 0.0
    %1907 = vmatprep.subr.mxu0 0.0
    %1908 = vmatpush1.msra.mxu0 0.0
    %1909 = vmatprep.subr.mxu0 0.0
    %1910 = vmatpush1.msra.mxu0 0.0
    %1911 = vmatprep.subr.mxu0 0.0
    %1912 = vmatpush1.msra.mxu0 0.0
    %1913 = vmatprep.subr.mxu0 0.0
    %1914 = vmatpush1.msra.mxu0 0.0
    %1915 = vmatprep.subr.mxu0 0.0
    %1916 = vmatpush1.msra.mxu0 0.0
    %1917 = vmatprep.subr.mxu0 0.0
    %1918 = vmatpush1.msra.mxu0 0.0
    %1919 = vmatprep.subr.mxu0 0.0
    %1920 = vmatpush1.msra.mxu0 0.0
    %1921 = vmatprep.subr.mxu0 0.0
    %1922 = vmatpush1.msra.mxu0 0.0
    %1923 = vmatprep.subr.mxu0 0.0
    %1924 = vmatpush1.msra.mxu0 0.0
    %1925 = vmatprep.subr.mxu0 0.0
    %1926 = vmatpush1.msra.mxu0 0.0
    %1927 = vmatprep.subr.mxu0 0.0
    %1928 = vmatpush1.msra.mxu0 0.0
    %1929 = vmatprep.subr.mxu0 0.0
    %1930 = vmatpush1.msra.mxu0 %v1892
    %1931 = vmatprep.subr.mxu0 0.0
    %1932 = vmatpush1.msra.mxu0 %v1891
    %1933 = vmatprep.subr.mxu0 0.0
    %1934 = vmatpush1.msra.mxu0 %v1890
    %1935 = vmatprep.subr.mxu0 0.0
    %1936 = vmatpush1.msra.mxu0 %v1889
    %1937 = vmatprep.subr.mxu0 0.0
    %1938 = vmatpush2.msra.mxu0 0.0
    %1939 = vmatprep.subr.mxu0 0.0
    %1940 = vmatpush2.msra.mxu0 0.0
    %1941 = vmatprep.subr.mxu0 0.0
    %1942 = vmatpush2.msra.mxu0 0.0
    %1943 = vmatprep.subr.mxu0 0.0
    %1944 = vmatpush2.msra.mxu0 0.0
    %1945 = vmatprep.subr.mxu0 0.0
    %1946 = vmatpush2.msra.mxu0 0.0
    %1947 = vmatprep.subr.mxu0 0.0
    %1948 = vmatpush2.msra.mxu0 0.0
    %1949 = vmatprep.subr.mxu0 0.0
    %1950 = vmatpush2.msra.mxu0 0.0
    %1951 = vmatprep.subr.mxu0 0.0
    %1952 = vmatpush2.msra.mxu0 0.0
    %1953 = vmatprep.subr.mxu0 0.0
    %1954 = vmatpush2.msra.mxu0 0.0
    %1955 = vmatprep.subr.mxu0 0.0
    %1956 = vmatpush2.msra.mxu0 0.0
    %1957 = vmatprep.subr.mxu0 0.0
    %1958 = vmatpush2.msra.mxu0 0.0
    %1959 = vmatprep.subr.mxu0 0.0
    %1960 = vmatpush2.msra.mxu0 0.0
    %1961 = vmatprep.subr.mxu0 0.0
    %1962 = vmatpush2.msra.mxu0 0.0
    %1963 = vmatprep.subr.mxu0 0.0
    %1964 = vmatpush2.msra.mxu0 0.0
    %1965 = vmatprep.subr.mxu0 0.0
    %1966 = vmatpush2.msra.mxu0 0.0
    %1967 = vmatprep.subr.mxu0 0.0
    %1968 = vmatpush2.msra.mxu0 0.0
    %1969 = vmatprep.mubr.f32.mxu0 0.0
    %1970 = vmatmul.mubr.f32.gmra.mxu0 %v1894
    %v1971 = vpop.f32.mrf.mxu0
    %v1972 = vadd.f32 0.0, %v1971
    %v1973 = vpop.f32.mrf.mxu0
    %1974 = vmatprep.mubr.f32.mxu0 0.0
    %1975 = vmatmul.mubr.f32.gmra.mxu0 %v1897
    %v1976 = vpop.f32.mrf.mxu0
    %v1977 = vadd.f32 0.0, %v1976
    %v1978 = vpop.f32.mrf.mxu0
    %1979 = vmatprep.mubr.f32.mxu0 0.0
    %1980 = vmatmul.mubr.f32.gmra.mxu0 %v1900
    %v1981 = vpop.f32.mrf.mxu0
    %v1982 = vadd.f32 0.0, %v1981
    %v1983 = vpop.f32.mrf.mxu0
    %1984 = vmatprep.mubr.f32.mxu0 0.0
    %1985 = vmatmul.mubr.f32.gmra.mxu0 %v1903
    %v1986 = vpop.f32.mrf.mxu0
    %v1987 = vadd.f32 0.0, %v1986
    %v1988 = vpop.f32.mrf.mxu0
    %1989 = vdwg.mxu0
    %v1990 = vadd.f32 %v1778, %v1972
    %v1991 = vadd.f32 %v1779, %v1977
    %v1992 = vadd.f32 %v1780, %v1982
    %v1993 = vadd.f32 %v1781, %v1987
    %v1994 = vld [vmem:[%s3] sm:$0x1]
    %v1996 = vlaneseq
    %v1997 = vshrl.u32 %v1996, 7
    %v1998 = vsub.s32 0, %v1997
    %v1999 = vrot.slane %v1994, %v1998
    %v2001 = vadd.f32 %v1990, %v1999
    %v2002 = vadd.f32 %v1991, %v1999
    %v2003 = vadd.f32 %v1992, %v1999
    %v2004 = vadd.f32 %v1993, %v1999
    %v2005 = vld [vmem:[#allocation2] sm:$0xff]
    %v2006 = vld [vmem:[#allocation2 + $0x8] sm:$0x3f]
    %vm2007 = vcmask 244736
    %v2009 = vsel %vm2007, %v2005, 0
    %v2012 = vsel %vm2007, %v2006, 0
    %vm2014 = vcmask 1045504
    %v2016 = vsel %vm2014, %v2004, 0
    %2018 = vmatprep.subr.mxu0 0.0
    %2019 = vmatpush1.msra.mxu0 0.0
    %2020 = vmatprep.subr.mxu0 0.0
    %2021 = vmatpush1.msra.mxu0 0.0
    %2022 = vmatprep.subr.mxu0 0.0
    %2023 = vmatpush1.msra.mxu0 0.0
    %2024 = vmatprep.subr.mxu0 0.0
    %2025 = vmatpush1.msra.mxu0 0.0
    %2026 = vmatprep.subr.mxu0 0.0
    %2027 = vmatpush1.msra.mxu0 0.0
    %2028 = vmatprep.subr.mxu0 0.0
    %2029 = vmatpush1.msra.mxu0 0.0
    %2030 = vmatprep.subr.mxu0 0.0
    %2031 = vmatpush1.msra.mxu0 0.0
    %2032 = vmatprep.subr.mxu0 0.0
    %2033 = vmatpush1.msra.mxu0 0.0
    %2034 = vmatprep.subr.mxu0 0.0
    %2035 = vmatpush1.msra.mxu0 0.0
    %2036 = vmatprep.subr.mxu0 0.0
    %2037 = vmatpush1.msra.mxu0 0.0
    %2038 = vmatprep.subr.mxu0 0.0
    %2039 = vmatpush1.msra.mxu0 0.0
    %2040 = vmatprep.subr.mxu0 0.0
    %2041 = vmatpush1.msra.mxu0 0.0
    %2042 = vmatprep.subr.mxu0 0.0
    %2043 = vmatpush1.msra.mxu0 %v2016
    %2044 = vmatprep.subr.mxu0 0.0
    %2045 = vmatpush1.msra.mxu0 %v2003
    %2046 = vmatprep.subr.mxu0 0.0
    %2047 = vmatpush1.msra.mxu0 %v2002
    %2048 = vmatprep.subr.mxu0 0.0
    %2049 = vmatpush1.msra.mxu0 %v2001
    %2050 = vmatprep.subr.mxu0 0.0
    %2051 = vmatpush2.msra.mxu0 0.0
    %2052 = vmatprep.subr.mxu0 0.0
    %2053 = vmatpush2.msra.mxu0 0.0
    %2054 = vmatprep.subr.mxu0 0.0
    %2055 = vmatpush2.msra.mxu0 0.0
    %2056 = vmatprep.subr.mxu0 0.0
    %2057 = vmatpush2.msra.mxu0 0.0
    %2058 = vmatprep.subr.mxu0 0.0
    %2059 = vmatpush2.msra.mxu0 0.0
    %2060 = vmatprep.subr.mxu0 0.0
    %2061 = vmatpush2.msra.mxu0 0.0
    %2062 = vmatprep.subr.mxu0 0.0
    %2063 = vmatpush2.msra.mxu0 0.0
    %2064 = vmatprep.subr.mxu0 0.0
    %2065 = vmatpush2.msra.mxu0 0.0
    %2066 = vmatprep.subr.mxu0 0.0
    %2067 = vmatpush2.msra.mxu0 0.0
    %2068 = vmatprep.subr.mxu0 0.0
    %2069 = vmatpush2.msra.mxu0 0.0
    %2070 = vmatprep.subr.mxu0 0.0
    %2071 = vmatpush2.msra.mxu0 0.0
    %2072 = vmatprep.subr.mxu0 0.0
    %2073 = vmatpush2.msra.mxu0 0.0
    %2074 = vmatprep.subr.mxu0 0.0
    %2075 = vmatpush2.msra.mxu0 0.0
    %2076 = vmatprep.subr.mxu0 0.0
    %2077 = vmatpush2.msra.mxu0 0.0
    %2078 = vmatprep.subr.mxu0 0.0
    %2079 = vmatpush2.msra.mxu0 0.0
    %2080 = vmatprep.subr.mxu0 0.0
    %2081 = vmatpush2.msra.mxu0 0.0
    %2082 = vmatprep.mubr.f32.mxu0 0.0
    %2083 = vmatmul.mubr.f32.gmra.mxu0 %v2009
    %v2084 = vpop.f32.mrf.mxu0
    %v2085 = vadd.f32 0.0, %v2084
    %v2086 = vpop.f32.mrf.mxu0
    %2087 = vmatprep.mubr.f32.mxu0 0.0
    %2088 = vmatmul.mubr.f32.gmra.mxu0 %v2012
    %v2089 = vpop.f32.mrf.mxu0
    %v2090 = vadd.f32 0.0, %v2089
    %v2091 = vpop.f32.mrf.mxu0
    %2092 = vdwg.mxu0
    %v2093 = vld [vmem:[%s5] sm:$0xff]
    %v2094 = vld [vmem:[%s5 + $0x8] sm:$0xff]
    %v2095 = vld [vmem:[%s5 + $0x10] sm:$0xff]
    %v2096 = vld [vmem:[%s5 + $0x18] sm:$0xff]
    %v2097 = vld [vmem:[%s5 + $0x20] sm:$0xff]
    %v2098 = vld [vmem:[%s5 + $0x28] sm:$0xff]
    %v2099 = vld [vmem:[%s5 + $0x30] sm:$0xff]
    %v2100 = vld [vmem:[%s5 + $0x38] sm:$0xf]
    %s2101 = scalar_lea.vmem [#allocation2], 16
    %v2102 = vld [vmem:[%s2101] sm:$0xff]
    %v2103 = vld [vmem:[%s2101 + $0x8] sm:$0x3f]
    %v2105 = vsel %vm2007, %v2102, 0
    %v2108 = vsel %vm2007, %v2103, 0
    %2110 = vmatprep.subr.mxu0 0.0
    %2111 = vmatpush1.msra.mxu0 0.0
    %2112 = vmatprep.subr.mxu0 0.0
    %2113 = vmatpush1.msra.mxu0 0.0
    %2114 = vmatprep.subr.mxu0 0.0
    %2115 = vmatpush1.msra.mxu0 0.0
    %2116 = vmatprep.subr.mxu0 0.0
    %2117 = vmatpush1.msra.mxu0 0.0
    %2118 = vmatprep.subr.mxu0 0.0
    %2119 = vmatpush1.msra.mxu0 0.0
    %2120 = vmatprep.subr.mxu0 0.0
    %2121 = vmatpush1.msra.mxu0 0.0
    %2122 = vmatprep.subr.mxu0 0.0
    %2123 = vmatpush1.msra.mxu0 0.0
    %2124 = vmatprep.subr.mxu0 0.0
    %2125 = vmatpush1.msra.mxu0 0.0
    %2126 = vmatprep.subr.mxu0 0.0
    %2127 = vmatpush1.msra.mxu0 0.0
    %2128 = vmatprep.subr.mxu0 0.0
    %2129 = vmatpush1.msra.mxu0 0.0
    %2130 = vmatprep.subr.mxu0 0.0
    %2131 = vmatpush1.msra.mxu0 0.0
    %2132 = vmatprep.subr.mxu0 0.0
    %2133 = vmatpush1.msra.mxu0 0.0
    %2134 = vmatprep.subr.mxu0 0.0
    %2135 = vmatpush1.msra.mxu0 %v2016
    %2136 = vmatprep.subr.mxu0 0.0
    %2137 = vmatpush1.msra.mxu0 %v2003
    %2138 = vmatprep.subr.mxu0 0.0
    %2139 = vmatpush1.msra.mxu0 %v2002
    %2140 = vmatprep.subr.mxu0 0.0
    %2141 = vmatpush1.msra.mxu0 %v2001
    %2142 = vmatprep.subr.mxu0 0.0
    %2143 = vmatpush2.msra.mxu0 0.0
    %2144 = vmatprep.subr.mxu0 0.0
    %2145 = vmatpush2.msra.mxu0 0.0
    %2146 = vmatprep.subr.mxu0 0.0
    %2147 = vmatpush2.msra.mxu0 0.0
    %2148 = vmatprep.subr.mxu0 0.0
    %2149 = vmatpush2.msra.mxu0 0.0
    %2150 = vmatprep.subr.mxu0 0.0
    %2151 = vmatpush2.msra.mxu0 0.0
    %2152 = vmatprep.subr.mxu0 0.0
    %2153 = vmatpush2.msra.mxu0 0.0
    %2154 = vmatprep.subr.mxu0 0.0
    %2155 = vmatpush2.msra.mxu0 0.0
    %2156 = vmatprep.subr.mxu0 0.0
    %2157 = vmatpush2.msra.mxu0 0.0
    %2158 = vmatprep.subr.mxu0 0.0
    %2159 = vmatpush2.msra.mxu0 0.0
    %2160 = vmatprep.subr.mxu0 0.0
    %2161 = vmatpush2.msra.mxu0 0.0
    %2162 = vmatprep.subr.mxu0 0.0
    %2163 = vmatpush2.msra.mxu0 0.0
    %2164 = vmatprep.subr.mxu0 0.0
    %2165 = vmatpush2.msra.mxu0 0.0
    %2166 = vmatprep.subr.mxu0 0.0
    %2167 = vmatpush2.msra.mxu0 0.0
    %2168 = vmatprep.subr.mxu0 0.0
    %2169 = vmatpush2.msra.mxu0 0.0
    %2170 = vmatprep.subr.mxu0 0.0
    %2171 = vmatpush2.msra.mxu0 0.0
    %2172 = vmatprep.subr.mxu0 0.0
    %2173 = vmatpush2.msra.mxu0 0.0
    %2174 = vmatprep.mubr.f32.mxu0 0.0
    %2175 = vmatmul.mubr.f32.gmra.mxu0 %v2105
    %v2176 = vpop.f32.mrf.mxu0
    %v2177 = vadd.f32 0.0, %v2176
    %v2178 = vpop.f32.mrf.mxu0
    %2179 = vmatprep.mubr.f32.mxu0 0.0
    %2180 = vmatmul.mubr.f32.gmra.mxu0 %v2108
    %v2181 = vpop.f32.mrf.mxu0
    %v2182 = vadd.f32 0.0, %v2181
    %v2183 = vpop.f32.mrf.mxu0
    %2184 = vdwg.mxu0
    %s2185 = scalar_lea.vmem %s5, 64
    %v2186 = vld [vmem:[%s2185] sm:$0xff]
    %v2187 = vld [vmem:[%s2185 + $0x8] sm:$0xff]
    %v2188 = vld [vmem:[%s2185 + $0x10] sm:$0xff]
    %v2189 = vld [vmem:[%s2185 + $0x18] sm:$0xff]
    %v2190 = vld [vmem:[%s2185 + $0x20] sm:$0xff]
    %v2191 = vld [vmem:[%s2185 + $0x28] sm:$0xff]
    %v2192 = vld [vmem:[%s2185 + $0x30] sm:$0xff]
    %v2193 = vld [vmem:[%s2185 + $0x38] sm:$0xf]
    %vm2194 = vcmask 490496
    %v2196 = vsel %vm2194, %v2177, 0
    %v2199 = vsel %vm2194, %v2182, 0
    %vm2201 = vcmask 1043456
    %v2203 = vsel %vm2201, %v2193, 0
    %2205 = vmatprep.subr.mxu0 0.0
    %2206 = vmatpush1.msra.mxu0 0.0
    %2207 = vmatprep.subr.mxu0 0.0
    %2208 = vmatpush1.msra.mxu0 0.0
    %2209 = vmatprep.subr.mxu0 0.0
    %2210 = vmatpush1.msra.mxu0 0.0
    %2211 = vmatprep.subr.mxu0 0.0
    %2212 = vmatpush1.msra.mxu0 0.0
    %2213 = vmatprep.subr.mxu0 0.0
    %2214 = vmatpush1.msra.mxu0 0.0
    %2215 = vmatprep.subr.mxu0 0.0
    %2216 = vmatpush1.msra.mxu0 0.0
    %2217 = vmatprep.subr.mxu0 0.0
    %2218 = vmatpush1.msra.mxu0 0.0
    %2219 = vmatprep.subr.mxu0 0.0
    %2220 = vmatpush1.msra.mxu0 0.0
    %2221 = vmatprep.subr.mxu0 0.0
    %2222 = vmatpush1.msra.mxu0 %v2203
    %2223 = vmatprep.subr.mxu0 0.0
    %2224 = vmatpush1.msra.mxu0 %v2192
    %2225 = vmatprep.subr.mxu0 0.0
    %2226 = vmatpush1.msra.mxu0 %v2191
    %2227 = vmatprep.subr.mxu0 0.0
    %2228 = vmatpush1.msra.mxu0 %v2190
    %2229 = vmatprep.subr.mxu0 0.0
    %2230 = vmatpush1.msra.mxu0 %v2189
    %2231 = vmatprep.subr.mxu0 0.0
    %2232 = vmatpush1.msra.mxu0 %v2188
    %2233 = vmatprep.subr.mxu0 0.0
    %2234 = vmatpush1.msra.mxu0 %v2187
    %2235 = vmatprep.subr.mxu0 0.0
    %2236 = vmatpush1.msra.mxu0 %v2186
    %2237 = vmatprep.subr.mxu0 0.0
    %2238 = vmatpush2.msra.mxu0 0.0
    %2239 = vmatprep.subr.mxu0 0.0
    %2240 = vmatpush2.msra.mxu0 0.0
    %2241 = vmatprep.subr.mxu0 0.0
    %2242 = vmatpush2.msra.mxu0 0.0
    %2243 = vmatprep.subr.mxu0 0.0
    %2244 = vmatpush2.msra.mxu0 0.0
    %2245 = vmatprep.subr.mxu0 0.0
    %2246 = vmatpush2.msra.mxu0 0.0
    %2247 = vmatprep.subr.mxu0 0.0
    %2248 = vmatpush2.msra.mxu0 0.0
    %2249 = vmatprep.subr.mxu0 0.0
    %2250 = vmatpush2.msra.mxu0 0.0
    %2251 = vmatprep.subr.mxu0 0.0
    %2252 = vmatpush2.msra.mxu0 0.0
    %2253 = vmatprep.subr.mxu0 0.0
    %2254 = vmatpush2.msra.mxu0 0.0
    %2255 = vmatprep.subr.mxu0 0.0
    %2256 = vmatpush2.msra.mxu0 0.0
    %2257 = vmatprep.subr.mxu0 0.0
    %2258 = vmatpush2.msra.mxu0 0.0
    %2259 = vmatprep.subr.mxu0 0.0
    %2260 = vmatpush2.msra.mxu0 0.0
    %2261 = vmatprep.subr.mxu0 0.0
    %2262 = vmatpush2.msra.mxu0 0.0
    %2263 = vmatprep.subr.mxu0 0.0
    %2264 = vmatpush2.msra.mxu0 0.0
    %2265 = vmatprep.subr.mxu0 0.0
    %2266 = vmatpush2.msra.mxu0 0.0
    %2267 = vmatprep.subr.mxu0 0.0
    %2268 = vmatpush2.msra.mxu0 0.0
    %2269 = vmatprep.mubr.f32.mxu0 0.0
    %2270 = vmatmul.mubr.f32.gmra.mxu0 %v2196
    %v2271 = vpop.f32.mrf.mxu0
    %v2272 = vadd.f32 0.0, %v2271
    %v2273 = vpop.f32.mrf.mxu0
    %2274 = vmatprep.mubr.f32.mxu0 0.0
    %2275 = vmatmul.mubr.f32.gmra.mxu0 %v2199
    %v2276 = vpop.f32.mrf.mxu0
    %v2277 = vadd.f32 0.0, %v2276
    %v2278 = vpop.f32.mrf.mxu0
    %2279 = vdwg.mxu0
    %v2281 = vsel %vm2194, %v2085, 0
    %v2284 = vsel %vm2194, %v2090, 0
    %v2287 = vsel %vm2201, %v2100, 0
    %2289 = vmatprep.subr.mxu0 0.0
    %2290 = vmatpush1.msra.mxu0 0.0
    %2291 = vmatprep.subr.mxu0 0.0
    %2292 = vmatpush1.msra.mxu0 0.0
    %2293 = vmatprep.subr.mxu0 0.0
    %2294 = vmatpush1.msra.mxu0 0.0
    %2295 = vmatprep.subr.mxu0 0.0
    %2296 = vmatpush1.msra.mxu0 0.0
    %2297 = vmatprep.subr.mxu0 0.0
    %2298 = vmatpush1.msra.mxu0 0.0
    %2299 = vmatprep.subr.mxu0 0.0
    %2300 = vmatpush1.msra.mxu0 0.0
    %2301 = vmatprep.subr.mxu0 0.0
    %2302 = vmatpush1.msra.mxu0 0.0
    %2303 = vmatprep.subr.mxu0 0.0
    %2304 = vmatpush1.msra.mxu0 0.0
    %2305 = vmatprep.subr.mxu0 0.0
    %2306 = vmatpush1.msra.mxu0 %v2287
    %2307 = vmatprep.subr.mxu0 0.0
    %2308 = vmatpush1.msra.mxu0 %v2099
    %2309 = vmatprep.subr.mxu0 0.0
    %2310 = vmatpush1.msra.mxu0 %v2098
    %2311 = vmatprep.subr.mxu0 0.0
    %2312 = vmatpush1.msra.mxu0 %v2097
    %2313 = vmatprep.subr.mxu0 0.0
    %2314 = vmatpush1.msra.mxu0 %v2096
    %2315 = vmatprep.subr.mxu0 0.0
    %2316 = vmatpush1.msra.mxu0 %v2095
    %2317 = vmatprep.subr.mxu0 0.0
    %2318 = vmatpush1.msra.mxu0 %v2094
    %2319 = vmatprep.subr.mxu0 0.0
    %2320 = vmatpush1.msra.mxu0 %v2093
    %2321 = vmatprep.subr.mxu0 0.0
    %2322 = vmatpush2.msra.mxu0 0.0
    %2323 = vmatprep.subr.mxu0 0.0
    %2324 = vmatpush2.msra.mxu0 0.0
    %2325 = vmatprep.subr.mxu0 0.0
    %2326 = vmatpush2.msra.mxu0 0.0
    %2327 = vmatprep.subr.mxu0 0.0
    %2328 = vmatpush2.msra.mxu0 0.0
    %2329 = vmatprep.subr.mxu0 0.0
    %2330 = vmatpush2.msra.mxu0 0.0
    %2331 = vmatprep.subr.mxu0 0.0
    %2332 = vmatpush2.msra.mxu0 0.0
    %2333 = vmatprep.subr.mxu0 0.0
    %2334 = vmatpush2.msra.mxu0 0.0
    %2335 = vmatprep.subr.mxu0 0.0
    %2336 = vmatpush2.msra.mxu0 0.0
    %2337 = vmatprep.subr.mxu0 0.0
    %2338 = vmatpush2.msra.mxu0 0.0
    %2339 = vmatprep.subr.mxu0 0.0
    %2340 = vmatpush2.msra.mxu0 0.0
    %2341 = vmatprep.subr.mxu0 0.0
    %2342 = vmatpush2.msra.mxu0 0.0
    %2343 = vmatprep.subr.mxu0 0.0
    %2344 = vmatpush2.msra.mxu0 0.0
    %2345 = vmatprep.subr.mxu0 0.0
    %2346 = vmatpush2.msra.mxu0 0.0
    %2347 = vmatprep.subr.mxu0 0.0
    %2348 = vmatpush2.msra.mxu0 0.0
    %2349 = vmatprep.subr.mxu0 0.0
    %2350 = vmatpush2.msra.mxu0 0.0
    %2351 = vmatprep.subr.mxu0 0.0
    %2352 = vmatpush2.msra.mxu0 0.0
    %2353 = vmatprep.mubr.f32.mxu0 0.0
    %2354 = vmatmul.mubr.f32.gmra.mxu0 %v2281
    %v2355 = vpop.f32.mrf.mxu0
    %v2356 = vadd.f32 %v2272, %v2355
    %v2357 = vpop.f32.mrf.mxu0
    %2358 = vmatprep.mubr.f32.mxu0 0.0
    %2359 = vmatmul.mubr.f32.gmra.mxu0 %v2284
    %v2360 = vpop.f32.mrf.mxu0
    %v2361 = vadd.f32 %v2277, %v2360
    %v2362 = vpop.f32.mrf.mxu0
    %2363 = vdwg.mxu0
    %s2364 = scalar_lea.vmem [#allocation2], 32
    %v2365 = vld [vmem:[%s2364] sm:$0xff]
    %v2366 = vld [vmem:[%s2364 + $0x8] sm:$0x3f]
    %v2368 = vsel %vm2007, %v2365, 0
    %v2371 = vsel %vm2007, %v2366, 0
    %2373 = vmatprep.subr.mxu0 0.0
    %2374 = vmatpush1.msra.mxu0 0.0
    %2375 = vmatprep.subr.mxu0 0.0
    %2376 = vmatpush1.msra.mxu0 0.0
    %2377 = vmatprep.subr.mxu0 0.0
    %2378 = vmatpush1.msra.mxu0 0.0
    %2379 = vmatprep.subr.mxu0 0.0
    %2380 = vmatpush1.msra.mxu0 0.0
    %2381 = vmatprep.subr.mxu0 0.0
    %2382 = vmatpush1.msra.mxu0 0.0
    %2383 = vmatprep.subr.mxu0 0.0
    %2384 = vmatpush1.msra.mxu0 0.0
    %2385 = vmatprep.subr.mxu0 0.0
    %2386 = vmatpush1.msra.mxu0 0.0
    %2387 = vmatprep.subr.mxu0 0.0
    %2388 = vmatpush1.msra.mxu0 0.0
    %2389 = vmatprep.subr.mxu0 0.0
    %2390 = vmatpush1.msra.mxu0 0.0
    %2391 = vmatprep.subr.mxu0 0.0
    %2392 = vmatpush1.msra.mxu0 0.0
    %2393 = vmatprep.subr.mxu0 0.0
    %2394 = vmatpush1.msra.mxu0 0.0
    %2395 = vmatprep.subr.mxu0 0.0
    %2396 = vmatpush1.msra.mxu0 0.0
    %2397 = vmatprep.subr.mxu0 0.0
    %2398 = vmatpush1.msra.mxu0 %v2016
    %2399 = vmatprep.subr.mxu0 0.0
    %2400 = vmatpush1.msra.mxu0 %v2003
    %2401 = vmatprep.subr.mxu0 0.0
    %2402 = vmatpush1.msra.mxu0 %v2002
    %2403 = vmatprep.subr.mxu0 0.0
    %2404 = vmatpush1.msra.mxu0 %v2001
    %2405 = vmatprep.subr.mxu0 0.0
    %2406 = vmatpush2.msra.mxu0 0.0
    %2407 = vmatprep.subr.mxu0 0.0
    %2408 = vmatpush2.msra.mxu0 0.0
    %2409 = vmatprep.subr.mxu0 0.0
    %2410 = vmatpush2.msra.mxu0 0.0
    %2411 = vmatprep.subr.mxu0 0.0
    %2412 = vmatpush2.msra.mxu0 0.0
    %2413 = vmatprep.subr.mxu0 0.0
    %2414 = vmatpush2.msra.mxu0 0.0
    %2415 = vmatprep.subr.mxu0 0.0
    %2416 = vmatpush2.msra.mxu0 0.0
    %2417 = vmatprep.subr.mxu0 0.0
    %2418 = vmatpush2.msra.mxu0 0.0
    %2419 = vmatprep.subr.mxu0 0.0
    %2420 = vmatpush2.msra.mxu0 0.0
    %2421 = vmatprep.subr.mxu0 0.0
    %2422 = vmatpush2.msra.mxu0 0.0
    %2423 = vmatprep.subr.mxu0 0.0
    %2424 = vmatpush2.msra.mxu0 0.0
    %2425 = vmatprep.subr.mxu0 0.0
    %2426 = vmatpush2.msra.mxu0 0.0
    %2427 = vmatprep.subr.mxu0 0.0
    %2428 = vmatpush2.msra.mxu0 0.0
    %2429 = vmatprep.subr.mxu0 0.0
    %2430 = vmatpush2.msra.mxu0 0.0
    %2431 = vmatprep.subr.mxu0 0.0
    %2432 = vmatpush2.msra.mxu0 0.0
    %2433 = vmatprep.subr.mxu0 0.0
    %2434 = vmatpush2.msra.mxu0 0.0
    %2435 = vmatprep.subr.mxu0 0.0
    %2436 = vmatpush2.msra.mxu0 0.0
    %2437 = vmatprep.mubr.f32.mxu0 0.0
    %2438 = vmatmul.mubr.f32.gmra.mxu0 %v2368
    %v2439 = vpop.f32.mrf.mxu0
    %v2440 = vadd.f32 0.0, %v2439
    %v2441 = vpop.f32.mrf.mxu0
    %2442 = vmatprep.mubr.f32.mxu0 0.0
    %2443 = vmatmul.mubr.f32.gmra.mxu0 %v2371
    %v2444 = vpop.f32.mrf.mxu0
    %v2445 = vadd.f32 0.0, %v2444
    %v2446 = vpop.f32.mrf.mxu0
    %2447 = vdwg.mxu0
    %s2448 = scalar_lea.vmem %s5, 128
    %v2449 = vld [vmem:[%s2448] sm:$0xff]
    %v2450 = vld [vmem:[%s2448 + $0x8] sm:$0xff]
    %v2451 = vld [vmem:[%s2448 + $0x10] sm:$0xff]
    %v2452 = vld [vmem:[%s2448 + $0x18] sm:$0xff]
    %v2453 = vld [vmem:[%s2448 + $0x20] sm:$0xff]
    %v2454 = vld [vmem:[%s2448 + $0x28] sm:$0xff]
    %v2455 = vld [vmem:[%s2448 + $0x30] sm:$0xff]
    %v2456 = vld [vmem:[%s2448 + $0x38] sm:$0xf]
    %v2458 = vsel %vm2194, %v2440, 0
    %v2461 = vsel %vm2194, %v2445, 0
    %v2464 = vsel %vm2201, %v2456, 0
    %2466 = vmatprep.subr.mxu0 0.0
    %2467 = vmatpush1.msra.mxu0 0.0
    %2468 = vmatprep.subr.mxu0 0.0
    %2469 = vmatpush1.msra.mxu0 0.0
    %2470 = vmatprep.subr.mxu0 0.0
    %2471 = vmatpush1.msra.mxu0 0.0
    %2472 = vmatprep.subr.mxu0 0.0
    %2473 = vmatpush1.msra.mxu0 0.0
    %2474 = vmatprep.subr.mxu0 0.0
    %2475 = vmatpush1.msra.mxu0 0.0
    %2476 = vmatprep.subr.mxu0 0.0
    %2477 = vmatpush1.msra.mxu0 0.0
    %2478 = vmatprep.subr.mxu0 0.0
    %2479 = vmatpush1.msra.mxu0 0.0
    %2480 = vmatprep.subr.mxu0 0.0
    %2481 = vmatpush1.msra.mxu0 0.0
    %2482 = vmatprep.subr.mxu0 0.0
    %2483 = vmatpush1.msra.mxu0 %v2464
    %2484 = vmatprep.subr.mxu0 0.0
    %2485 = vmatpush1.msra.mxu0 %v2455
    %2486 = vmatprep.subr.mxu0 0.0
    %2487 = vmatpush1.msra.mxu0 %v2454
    %2488 = vmatprep.subr.mxu0 0.0
    %2489 = vmatpush1.msra.mxu0 %v2453
    %2490 = vmatprep.subr.mxu0 0.0
    %2491 = vmatpush1.msra.mxu0 %v2452
    %2492 = vmatprep.subr.mxu0 0.0
    %2493 = vmatpush1.msra.mxu0 %v2451
    %2494 = vmatprep.subr.mxu0 0.0
    %2495 = vmatpush1.msra.mxu0 %v2450
    %2496 = vmatprep.subr.mxu0 0.0
    %2497 = vmatpush1.msra.mxu0 %v2449
    %2498 = vmatprep.subr.mxu0 0.0
    %2499 = vmatpush2.msra.mxu0 0.0
    %2500 = vmatprep.subr.mxu0 0.0
    %2501 = vmatpush2.msra.mxu0 0.0
    %2502 = vmatprep.subr.mxu0 0.0
    %2503 = vmatpush2.msra.mxu0 0.0
    %2504 = vmatprep.subr.mxu0 0.0
    %2505 = vmatpush2.msra.mxu0 0.0
    %2506 = vmatprep.subr.mxu0 0.0
    %2507 = vmatpush2.msra.mxu0 0.0
    %2508 = vmatprep.subr.mxu0 0.0
    %2509 = vmatpush2.msra.mxu0 0.0
    %2510 = vmatprep.subr.mxu0 0.0
    %2511 = vmatpush2.msra.mxu0 0.0
    %2512 = vmatprep.subr.mxu0 0.0
    %2513 = vmatpush2.msra.mxu0 0.0
    %2514 = vmatprep.subr.mxu0 0.0
    %2515 = vmatpush2.msra.mxu0 0.0
    %2516 = vmatprep.subr.mxu0 0.0
    %2517 = vmatpush2.msra.mxu0 0.0
    %2518 = vmatprep.subr.mxu0 0.0
    %2519 = vmatpush2.msra.mxu0 0.0
    %2520 = vmatprep.subr.mxu0 0.0
    %2521 = vmatpush2.msra.mxu0 0.0
    %2522 = vmatprep.subr.mxu0 0.0
    %2523 = vmatpush2.msra.mxu0 0.0
    %2524 = vmatprep.subr.mxu0 0.0
    %2525 = vmatpush2.msra.mxu0 0.0
    %2526 = vmatprep.subr.mxu0 0.0
    %2527 = vmatpush2.msra.mxu0 0.0
    %2528 = vmatprep.subr.mxu0 0.0
    %2529 = vmatpush2.msra.mxu0 0.0
    %2530 = vmatprep.mubr.f32.mxu0 0.0
    %2531 = vmatmul.mubr.f32.gmra.mxu0 %v2458
    %v2532 = vpop.f32.mrf.mxu0
    %v2533 = vadd.f32 0.0, %v2532
    %v2534 = vpop.f32.mrf.mxu0
    %2535 = vmatprep.mubr.f32.mxu0 0.0
    %2536 = vmatmul.mubr.f32.gmra.mxu0 %v2461
    %v2537 = vpop.f32.mrf.mxu0
    %v2538 = vadd.f32 0.0, %v2537
    %v2539 = vpop.f32.mrf.mxu0
    %2540 = vdwg.mxu0
    %v2541 = vadd.f32 %v2356, %v2533
    %v2542 = vadd.f32 %v2361, %v2538
    %v2543 = vld [vmem:[%s6] sm:$0x1]
    %v2545 = vlaneseq
    %v2546 = vshrl.u32 %v2545, 7
    %v2547 = vsub.s32 0, %v2546
    %v2548 = vrot.slane %v2543, %v2547
    %v2550 = vadd.f32 %v2541, %v2548
    %v2551 = vadd.f32 %v2542, %v2548
    %v2552 = vld [vmem:[#allocation5] sm:$0x3]
    %vm2553 = vcmask 113664
    %v2555 = vsel %vm2553, %v2552, 0
    %v2558 = vsel %vm2014, %v2551, 0
    %2560 = vmatprep.subr.mxu0 0.0
    %2561 = vmatpush1.msra.mxu0 0.0
    %2562 = vmatprep.subr.mxu0 0.0
    %2563 = vmatpush1.msra.mxu0 0.0
    %2564 = vmatprep.subr.mxu0 0.0
    %2565 = vmatpush1.msra.mxu0 0.0
    %2566 = vmatprep.subr.mxu0 0.0
    %2567 = vmatpush1.msra.mxu0 0.0
    %2568 = vmatprep.subr.mxu0 0.0
    %2569 = vmatpush1.msra.mxu0 0.0
    %2570 = vmatprep.subr.mxu0 0.0
    %2571 = vmatpush1.msra.mxu0 0.0
    %2572 = vmatprep.subr.mxu0 0.0
    %2573 = vmatpush1.msra.mxu0 0.0
    %2574 = vmatprep.subr.mxu0 0.0
    %2575 = vmatpush1.msra.mxu0 0.0
    %2576 = vmatprep.subr.mxu0 0.0
    %2577 = vmatpush1.msra.mxu0 0.0
    %2578 = vmatprep.subr.mxu0 0.0
    %2579 = vmatpush1.msra.mxu0 0.0
    %2580 = vmatprep.subr.mxu0 0.0
    %2581 = vmatpush1.msra.mxu0 0.0
    %2582 = vmatprep.subr.mxu0 0.0
    %2583 = vmatpush1.msra.mxu0 0.0
    %2584 = vmatprep.subr.mxu0 0.0
    %2585 = vmatpush1.msra.mxu0 0.0
    %2586 = vmatprep.subr.mxu0 0.0
    %2587 = vmatpush1.msra.mxu0 0.0
    %2588 = vmatprep.subr.mxu0 0.0
    %2589 = vmatpush1.msra.mxu0 %v2558
    %2590 = vmatprep.subr.mxu0 0.0
    %2591 = vmatpush1.msra.mxu0 %v2550
    %2592 = vmatprep.subr.mxu0 0.0
    %2593 = vmatpush2.msra.mxu0 0.0
    %2594 = vmatprep.subr.mxu0 0.0
    %2595 = vmatpush2.msra.mxu0 0.0
    %2596 = vmatprep.subr.mxu0 0.0
    %2597 = vmatpush2.msra.mxu0 0.0
    %2598 = vmatprep.subr.mxu0 0.0
    %2599 = vmatpush2.msra.mxu0 0.0
    %2600 = vmatprep.subr.mxu0 0.0
    %2601 = vmatpush2.msra.mxu0 0.0
    %2602 = vmatprep.subr.mxu0 0.0
    %2603 = vmatpush2.msra.mxu0 0.0
    %2604 = vmatprep.subr.mxu0 0.0
    %2605 = vmatpush2.msra.mxu0 0.0
    %2606 = vmatprep.subr.mxu0 0.0
    %2607 = vmatpush2.msra.mxu0 0.0
    %2608 = vmatprep.subr.mxu0 0.0
    %2609 = vmatpush2.msra.mxu0 0.0
    %2610 = vmatprep.subr.mxu0 0.0
    %2611 = vmatpush2.msra.mxu0 0.0
    %2612 = vmatprep.subr.mxu0 0.0
    %2613 = vmatpush2.msra.mxu0 0.0
    %2614 = vmatprep.subr.mxu0 0.0
    %2615 = vmatpush2.msra.mxu0 0.0
    %2616 = vmatprep.subr.mxu0 0.0
    %2617 = vmatpush2.msra.mxu0 0.0
    %2618 = vmatprep.subr.mxu0 0.0
    %2619 = vmatpush2.msra.mxu0 0.0
    %2620 = vmatprep.subr.mxu0 0.0
    %2621 = vmatpush2.msra.mxu0 0.0
    %2622 = vmatprep.subr.mxu0 0.0
    %2623 = vmatpush2.msra.mxu0 0.0
    %2624 = vmatprep.mubr.f32.mxu0 0.0
    %2625 = vmatmul.mubr.f32.gmra.mxu0 %v2555
    %v2626 = vpop.f32.mrf.mxu0
    %v2627 = vadd.f32 0.0, %v2626
    %v2628 = vpop.f32.mrf.mxu0
    %2629 = vdwg.mxu0
    %v2630 = vld [vmem:[%s8] sm:$0xff]
    %v2631 = vld [vmem:[%s8 + $0x8] sm:$0xff]
    %v2632 = vld [vmem:[%s8 + $0x10] sm:$0xff]
    %v2633 = vld [vmem:[%s8 + $0x18] sm:$0xf]
    %s2634 = scalar_lea.vmem [#allocation5], 2
    %v2635 = vld [vmem:[%s2634] sm:$0x3]
    %v2637 = vsel %vm2553, %v2635, 0
    %2639 = vmatprep.subr.mxu0 0.0
    %2640 = vmatpush1.msra.mxu0 0.0
    %2641 = vmatprep.subr.mxu0 0.0
    %2642 = vmatpush1.msra.mxu0 0.0
    %2643 = vmatprep.subr.mxu0 0.0
    %2644 = vmatpush1.msra.mxu0 0.0
    %2645 = vmatprep.subr.mxu0 0.0
    %2646 = vmatpush1.msra.mxu0 0.0
    %2647 = vmatprep.subr.mxu0 0.0
    %2648 = vmatpush1.msra.mxu0 0.0
    %2649 = vmatprep.subr.mxu0 0.0
    %2650 = vmatpush1.msra.mxu0 0.0
    %2651 = vmatprep.subr.mxu0 0.0
    %2652 = vmatpush1.msra.mxu0 0.0
    %2653 = vmatprep.subr.mxu0 0.0
    %2654 = vmatpush1.msra.mxu0 0.0
    %2655 = vmatprep.subr.mxu0 0.0
    %2656 = vmatpush1.msra.mxu0 0.0
    %2657 = vmatprep.subr.mxu0 0.0
    %2658 = vmatpush1.msra.mxu0 0.0
    %2659 = vmatprep.subr.mxu0 0.0
    %2660 = vmatpush1.msra.mxu0 0.0
    %2661 = vmatprep.subr.mxu0 0.0
    %2662 = vmatpush1.msra.mxu0 0.0
    %2663 = vmatprep.subr.mxu0 0.0
    %2664 = vmatpush1.msra.mxu0 0.0
    %2665 = vmatprep.subr.mxu0 0.0
    %2666 = vmatpush1.msra.mxu0 0.0
    %2667 = vmatprep.subr.mxu0 0.0
    %2668 = vmatpush1.msra.mxu0 %v2558
    %2669 = vmatprep.subr.mxu0 0.0
    %2670 = vmatpush1.msra.mxu0 %v2550
    %2671 = vmatprep.subr.mxu0 0.0
    %2672 = vmatpush2.msra.mxu0 0.0
    %2673 = vmatprep.subr.mxu0 0.0
    %2674 = vmatpush2.msra.mxu0 0.0
    %2675 = vmatprep.subr.mxu0 0.0
    %2676 = vmatpush2.msra.mxu0 0.0
    %2677 = vmatprep.subr.mxu0 0.0
    %2678 = vmatpush2.msra.mxu0 0.0
    %2679 = vmatprep.subr.mxu0 0.0
    %2680 = vmatpush2.msra.mxu0 0.0
    %2681 = vmatprep.subr.mxu0 0.0
    %2682 = vmatpush2.msra.mxu0 0.0
    %2683 = vmatprep.subr.mxu0 0.0
    %2684 = vmatpush2.msra.mxu0 0.0
    %2685 = vmatprep.subr.mxu0 0.0
    %2686 = vmatpush2.msra.mxu0 0.0
    %2687 = vmatprep.subr.mxu0 0.0
    %2688 = vmatpush2.msra.mxu0 0.0
    %2689 = vmatprep.subr.mxu0 0.0
    %2690 = vmatpush2.msra.mxu0 0.0
    %2691 = vmatprep.subr.mxu0 0.0
    %2692 = vmatpush2.msra.mxu0 0.0
    %2693 = vmatprep.subr.mxu0 0.0
    %2694 = vmatpush2.msra.mxu0 0.0
    %2695 = vmatprep.subr.mxu0 0.0
    %2696 = vmatpush2.msra.mxu0 0.0
    %2697 = vmatprep.subr.mxu0 0.0
    %2698 = vmatpush2.msra.mxu0 0.0
    %2699 = vmatprep.subr.mxu0 0.0
    %2700 = vmatpush2.msra.mxu0 0.0
    %2701 = vmatprep.subr.mxu0 0.0
    %2702 = vmatpush2.msra.mxu0 0.0
    %2703 = vmatprep.mubr.f32.mxu0 0.0
    %2704 = vmatmul.mubr.f32.gmra.mxu0 %v2637
    %v2705 = vpop.f32.mrf.mxu0
    %v2706 = vadd.f32 0.0, %v2705
    %v2707 = vpop.f32.mrf.mxu0
    %2708 = vdwg.mxu0
    %s2709 = scalar_lea.vmem %s8, 32
    %v2710 = vld [vmem:[%s2709] sm:$0xff]
    %v2711 = vld [vmem:[%s2709 + $0x8] sm:$0xff]
    %v2712 = vld [vmem:[%s2709 + $0x10] sm:$0xff]
    %v2713 = vld [vmem:[%s2709 + $0x18] sm:$0xf]
    %vm2714 = vcmask 228352
    %v2716 = vsel %vm2714, %v2706, 0
    %v2719 = vsel %vm2201, %v2713, 0
    %2721 = vmatprep.subr.mxu0 0.0
    %2722 = vmatpush1.msra.mxu0 0.0
    %2723 = vmatprep.subr.mxu0 0.0
    %2724 = vmatpush1.msra.mxu0 0.0
    %2725 = vmatprep.subr.mxu0 0.0
    %2726 = vmatpush1.msra.mxu0 0.0
    %2727 = vmatprep.subr.mxu0 0.0
    %2728 = vmatpush1.msra.mxu0 0.0
    %2729 = vmatprep.subr.mxu0 0.0
    %2730 = vmatpush1.msra.mxu0 0.0
    %2731 = vmatprep.subr.mxu0 0.0
    %2732 = vmatpush1.msra.mxu0 0.0
    %2733 = vmatprep.subr.mxu0 0.0
    %2734 = vmatpush1.msra.mxu0 0.0
    %2735 = vmatprep.subr.mxu0 0.0
    %2736 = vmatpush1.msra.mxu0 0.0
    %2737 = vmatprep.subr.mxu0 0.0
    %2738 = vmatpush1.msra.mxu0 0.0
    %2739 = vmatprep.subr.mxu0 0.0
    %2740 = vmatpush1.msra.mxu0 0.0
    %2741 = vmatprep.subr.mxu0 0.0
    %2742 = vmatpush1.msra.mxu0 0.0
    %2743 = vmatprep.subr.mxu0 0.0
    %2744 = vmatpush1.msra.mxu0 0.0
    %2745 = vmatprep.subr.mxu0 0.0
    %2746 = vmatpush1.msra.mxu0 %v2719
    %2747 = vmatprep.subr.mxu0 0.0
    %2748 = vmatpush1.msra.mxu0 %v2712
    %2749 = vmatprep.subr.mxu0 0.0
    %2750 = vmatpush1.msra.mxu0 %v2711
    %2751 = vmatprep.subr.mxu0 0.0
    %2752 = vmatpush1.msra.mxu0 %v2710
    %2753 = vmatprep.subr.mxu0 0.0
    %2754 = vmatpush2.msra.mxu0 0.0
    %2755 = vmatprep.subr.mxu0 0.0
    %2756 = vmatpush2.msra.mxu0 0.0
    %2757 = vmatprep.subr.mxu0 0.0
    %2758 = vmatpush2.msra.mxu0 0.0
    %2759 = vmatprep.subr.mxu0 0.0
    %2760 = vmatpush2.msra.mxu0 0.0
    %2761 = vmatprep.subr.mxu0 0.0
    %2762 = vmatpush2.msra.mxu0 0.0
    %2763 = vmatprep.subr.mxu0 0.0
    %2764 = vmatpush2.msra.mxu0 0.0
    %2765 = vmatprep.subr.mxu0 0.0
    %2766 = vmatpush2.msra.mxu0 0.0
    %2767 = vmatprep.subr.mxu0 0.0
    %2768 = vmatpush2.msra.mxu0 0.0
    %2769 = vmatprep.subr.mxu0 0.0
    %2770 = vmatpush2.msra.mxu0 0.0
    %2771 = vmatprep.subr.mxu0 0.0
    %2772 = vmatpush2.msra.mxu0 0.0
    %2773 = vmatprep.subr.mxu0 0.0
    %2774 = vmatpush2.msra.mxu0 0.0
    %2775 = vmatprep.subr.mxu0 0.0
    %2776 = vmatpush2.msra.mxu0 0.0
    %2777 = vmatprep.subr.mxu0 0.0
    %2778 = vmatpush2.msra.mxu0 0.0
    %2779 = vmatprep.subr.mxu0 0.0
    %2780 = vmatpush2.msra.mxu0 0.0
    %2781 = vmatprep.subr.mxu0 0.0
    %2782 = vmatpush2.msra.mxu0 0.0
    %2783 = vmatprep.subr.mxu0 0.0
    %2784 = vmatpush2.msra.mxu0 0.0
    %2785 = vmatprep.mubr.f32.mxu0 0.0
    %2786 = vmatmul.mubr.f32.gmra.mxu0 %v2716
    %v2787 = vpop.f32.mrf.mxu0
    %v2788 = vadd.f32 0.0, %v2787
    %v2789 = vpop.f32.mrf.mxu0
    %2790 = vdwg.mxu0
    %v2792 = vsel %vm2714, %v2627, 0
    %v2795 = vsel %vm2201, %v2633, 0
    %2797 = vmatprep.subr.mxu0 0.0
    %2798 = vmatpush1.msra.mxu0 0.0
    %2799 = vmatprep.subr.mxu0 0.0
    %2800 = vmatpush1.msra.mxu0 0.0
    %2801 = vmatprep.subr.mxu0 0.0
    %2802 = vmatpush1.msra.mxu0 0.0
    %2803 = vmatprep.subr.mxu0 0.0
    %2804 = vmatpush1.msra.mxu0 0.0
    %2805 = vmatprep.subr.mxu0 0.0
    %2806 = vmatpush1.msra.mxu0 0.0
    %2807 = vmatprep.subr.mxu0 0.0
    %2808 = vmatpush1.msra.mxu0 0.0
    %2809 = vmatprep.subr.mxu0 0.0
    %2810 = vmatpush1.msra.mxu0 0.0
    %2811 = vmatprep.subr.mxu0 0.0
    %2812 = vmatpush1.msra.mxu0 0.0
    %2813 = vmatprep.subr.mxu0 0.0
    %2814 = vmatpush1.msra.mxu0 0.0
    %2815 = vmatprep.subr.mxu0 0.0
    %2816 = vmatpush1.msra.mxu0 0.0
    %2817 = vmatprep.subr.mxu0 0.0
    %2818 = vmatpush1.msra.mxu0 0.0
    %2819 = vmatprep.subr.mxu0 0.0
    %2820 = vmatpush1.msra.mxu0 0.0
    %2821 = vmatprep.subr.mxu0 0.0
    %2822 = vmatpush1.msra.mxu0 %v2795
    %2823 = vmatprep.subr.mxu0 0.0
    %2824 = vmatpush1.msra.mxu0 %v2632
    %2825 = vmatprep.subr.mxu0 0.0
    %2826 = vmatpush1.msra.mxu0 %v2631
    %2827 = vmatprep.subr.mxu0 0.0
    %2828 = vmatpush1.msra.mxu0 %v2630
    %2829 = vmatprep.subr.mxu0 0.0
    %2830 = vmatpush2.msra.mxu0 0.0
    %2831 = vmatprep.subr.mxu0 0.0
    %2832 = vmatpush2.msra.mxu0 0.0
    %2833 = vmatprep.subr.mxu0 0.0
    %2834 = vmatpush2.msra.mxu0 0.0
    %2835 = vmatprep.subr.mxu0 0.0
    %2836 = vmatpush2.msra.mxu0 0.0
    %2837 = vmatprep.subr.mxu0 0.0
    %2838 = vmatpush2.msra.mxu0 0.0
    %2839 = vmatprep.subr.mxu0 0.0
    %2840 = vmatpush2.msra.mxu0 0.0
    %2841 = vmatprep.subr.mxu0 0.0
    %2842 = vmatpush2.msra.mxu0 0.0
    %2843 = vmatprep.subr.mxu0 0.0
    %2844 = vmatpush2.msra.mxu0 0.0
    %2845 = vmatprep.subr.mxu0 0.0
    %2846 = vmatpush2.msra.mxu0 0.0
    %2847 = vmatprep.subr.mxu0 0.0
    %2848 = vmatpush2.msra.mxu0 0.0
    %2849 = vmatprep.subr.mxu0 0.0
    %2850 = vmatpush2.msra.mxu0 0.0
    %2851 = vmatprep.subr.mxu0 0.0
    %2852 = vmatpush2.msra.mxu0 0.0
    %2853 = vmatprep.subr.mxu0 0.0
    %2854 = vmatpush2.msra.mxu0 0.0
    %2855 = vmatprep.subr.mxu0 0.0
    %2856 = vmatpush2.msra.mxu0 0.0
    %2857 = vmatprep.subr.mxu0 0.0
    %2858 = vmatpush2.msra.mxu0 0.0
    %2859 = vmatprep.subr.mxu0 0.0
    %2860 = vmatpush2.msra.mxu0 0.0
    %2861 = vmatprep.mubr.f32.mxu0 0.0
    %2862 = vmatmul.mubr.f32.gmra.mxu0 %v2792
    %v2863 = vpop.f32.mrf.mxu0
    %v2864 = vadd.f32 %v2788, %v2863
    %v2865 = vpop.f32.mrf.mxu0
    %2866 = vdwg.mxu0
    %s2867 = scalar_lea.vmem [#allocation5], 4
    %v2868 = vld [vmem:[%s2867] sm:$0x3]
    %v2870 = vsel %vm2553, %v2868, 0
    %2872 = vmatprep.subr.mxu0 0.0
    %2873 = vmatpush1.msra.mxu0 0.0
    %2874 = vmatprep.subr.mxu0 0.0
    %2875 = vmatpush1.msra.mxu0 0.0
    %2876 = vmatprep.subr.mxu0 0.0
    %2877 = vmatpush1.msra.mxu0 0.0
    %2878 = vmatprep.subr.mxu0 0.0
    %2879 = vmatpush1.msra.mxu0 0.0
    %2880 = vmatprep.subr.mxu0 0.0
    %2881 = vmatpush1.msra.mxu0 0.0
    %2882 = vmatprep.subr.mxu0 0.0
    %2883 = vmatpush1.msra.mxu0 0.0
    %2884 = vmatprep.subr.mxu0 0.0
    %2885 = vmatpush1.msra.mxu0 0.0
    %2886 = vmatprep.subr.mxu0 0.0
    %2887 = vmatpush1.msra.mxu0 0.0
    %2888 = vmatprep.subr.mxu0 0.0
    %2889 = vmatpush1.msra.mxu0 0.0
    %2890 = vmatprep.subr.mxu0 0.0
    %2891 = vmatpush1.msra.mxu0 0.0
    %2892 = vmatprep.subr.mxu0 0.0
    %2893 = vmatpush1.msra.mxu0 0.0
    %2894 = vmatprep.subr.mxu0 0.0
    %2895 = vmatpush1.msra.mxu0 0.0
    %2896 = vmatprep.subr.mxu0 0.0
    %2897 = vmatpush1.msra.mxu0 0.0
    %2898 = vmatprep.subr.mxu0 0.0
    %2899 = vmatpush1.msra.mxu0 0.0
    %2900 = vmatprep.subr.mxu0 0.0
    %2901 = vmatpush1.msra.mxu0 %v2558
    %2902 = vmatprep.subr.mxu0 0.0
    %2903 = vmatpush1.msra.mxu0 %v2550
    %2904 = vmatprep.subr.mxu0 0.0
    %2905 = vmatpush2.msra.mxu0 0.0
    %2906 = vmatprep.subr.mxu0 0.0
    %2907 = vmatpush2.msra.mxu0 0.0
    %2908 = vmatprep.subr.mxu0 0.0
    %2909 = vmatpush2.msra.mxu0 0.0
    %2910 = vmatprep.subr.mxu0 0.0
    %2911 = vmatpush2.msra.mxu0 0.0
    %2912 = vmatprep.subr.mxu0 0.0
    %2913 = vmatpush2.msra.mxu0 0.0
    %2914 = vmatprep.subr.mxu0 0.0
    %2915 = vmatpush2.msra.mxu0 0.0
    %2916 = vmatprep.subr.mxu0 0.0
    %2917 = vmatpush2.msra.mxu0 0.0
    %2918 = vmatprep.subr.mxu0 0.0
    %2919 = vmatpush2.msra.mxu0 0.0
    %2920 = vmatprep.subr.mxu0 0.0
    %2921 = vmatpush2.msra.mxu0 0.0
    %2922 = vmatprep.subr.mxu0 0.0
    %2923 = vmatpush2.msra.mxu0 0.0
    %2924 = vmatprep.subr.mxu0 0.0
    %2925 = vmatpush2.msra.mxu0 0.0
    %2926 = vmatprep.subr.mxu0 0.0
    %2927 = vmatpush2.msra.mxu0 0.0
    %2928 = vmatprep.subr.mxu0 0.0
    %2929 = vmatpush2.msra.mxu0 0.0
    %2930 = vmatprep.subr.mxu0 0.0
    %2931 = vmatpush2.msra.mxu0 0.0
    %2932 = vmatprep.subr.mxu0 0.0
    %2933 = vmatpush2.msra.mxu0 0.0
    %2934 = vmatprep.subr.mxu0 0.0
    %2935 = vmatpush2.msra.mxu0 0.0
    %2936 = vmatprep.mubr.f32.mxu0 0.0
    %2937 = vmatmul.mubr.f32.gmra.mxu0 %v2870
    %v2938 = vpop.f32.mrf.mxu0
    %v2939 = vadd.f32 0.0, %v2938
    %v2940 = vpop.f32.mrf.mxu0
    %2941 = vdwg.mxu0
    %s2942 = scalar_lea.vmem %s8, 64
    %v2943 = vld [vmem:[%s2942] sm:$0xff]
    %v2944 = vld [vmem:[%s2942 + $0x8] sm:$0xff]
    %v2945 = vld [vmem:[%s2942 + $0x10] sm:$0xff]
    %v2946 = vld [vmem:[%s2942 + $0x18] sm:$0xf]
    %v2948 = vsel %vm2714, %v2939, 0
    %v2951 = vsel %vm2201, %v2946, 0
    %2953 = vmatprep.subr.mxu0 0.0
    %2954 = vmatpush1.msra.mxu0 0.0
    %2955 = vmatprep.subr.mxu0 0.0
    %2956 = vmatpush1.msra.mxu0 0.0
    %2957 = vmatprep.subr.mxu0 0.0
    %2958 = vmatpush1.msra.mxu0 0.0
    %2959 = vmatprep.subr.mxu0 0.0
    %2960 = vmatpush1.msra.mxu0 0.0
    %2961 = vmatprep.subr.mxu0 0.0
    %2962 = vmatpush1.msra.mxu0 0.0
    %2963 = vmatprep.subr.mxu0 0.0
    %2964 = vmatpush1.msra.mxu0 0.0
    %2965 = vmatprep.subr.mxu0 0.0
    %2966 = vmatpush1.msra.mxu0 0.0
    %2967 = vmatprep.subr.mxu0 0.0
    %2968 = vmatpush1.msra.mxu0 0.0
    %2969 = vmatprep.subr.mxu0 0.0
    %2970 = vmatpush1.msra.mxu0 0.0
    %2971 = vmatprep.subr.mxu0 0.0
    %2972 = vmatpush1.msra.mxu0 0.0
    %2973 = vmatprep.subr.mxu0 0.0
    %2974 = vmatpush1.msra.mxu0 0.0
    %2975 = vmatprep.subr.mxu0 0.0
    %2976 = vmatpush1.msra.mxu0 0.0
    %2977 = vmatprep.subr.mxu0 0.0
    %2978 = vmatpush1.msra.mxu0 %v2951
    %2979 = vmatprep.subr.mxu0 0.0
    %2980 = vmatpush1.msra.mxu0 %v2945
    %2981 = vmatprep.subr.mxu0 0.0
    %2982 = vmatpush1.msra.mxu0 %v2944
    %2983 = vmatprep.subr.mxu0 0.0
    %2984 = vmatpush1.msra.mxu0 %v2943
    %2985 = vmatprep.subr.mxu0 0.0
    %2986 = vmatpush2.msra.mxu0 0.0
    %2987 = vmatprep.subr.mxu0 0.0
    %2988 = vmatpush2.msra.mxu0 0.0
    %2989 = vmatprep.subr.mxu0 0.0
    %2990 = vmatpush2.msra.mxu0 0.0
    %2991 = vmatprep.subr.mxu0 0.0
    %2992 = vmatpush2.msra.mxu0 0.0
    %2993 = vmatprep.subr.mxu0 0.0
    %2994 = vmatpush2.msra.mxu0 0.0
    %2995 = vmatprep.subr.mxu0 0.0
    %2996 = vmatpush2.msra.mxu0 0.0
    %2997 = vmatprep.subr.mxu0 0.0
    %2998 = vmatpush2.msra.mxu0 0.0
    %2999 = vmatprep.subr.mxu0 0.0
    %3000 = vmatpush2.msra.mxu0 0.0
    %3001 = vmatprep.subr.mxu0 0.0
    %3002 = vmatpush2.msra.mxu0 0.0
    %3003 = vmatprep.subr.mxu0 0.0
    %3004 = vmatpush2.msra.mxu0 0.0
    %3005 = vmatprep.subr.mxu0 0.0
    %3006 = vmatpush2.msra.mxu0 0.0
    %3007 = vmatprep.subr.mxu0 0.0
    %3008 = vmatpush2.msra.mxu0 0.0
    %3009 = vmatprep.subr.mxu0 0.0
    %3010 = vmatpush2.msra.mxu0 0.0
    %3011 = vmatprep.subr.mxu0 0.0
    %3012 = vmatpush2.msra.mxu0 0.0
    %3013 = vmatprep.subr.mxu0 0.0
    %3014 = vmatpush2.msra.mxu0 0.0
    %3015 = vmatprep.subr.mxu0 0.0
    %3016 = vmatpush2.msra.mxu0 0.0
    %3017 = vmatprep.mubr.f32.mxu0 0.0
    %3018 = vmatmul.mubr.f32.gmra.mxu0 %v2948
    %v3019 = vpop.f32.mrf.mxu0
    %v3020 = vadd.f32 0.0, %v3019
    %v3021 = vpop.f32.mrf.mxu0
    %3022 = vdwg.mxu0
    %v3023 = vadd.f32 %v2864, %v3020
    %s3024 = scalar_lea.vmem [#allocation5], 6
    %v3025 = vld [vmem:[%s3024] sm:$0x3]
    %v3027 = vsel %vm2553, %v3025, 0
    %3029 = vmatprep.subr.mxu0 0.0
    %3030 = vmatpush1.msra.mxu0 0.0
    %3031 = vmatprep.subr.mxu0 0.0
    %3032 = vmatpush1.msra.mxu0 0.0
    %3033 = vmatprep.subr.mxu0 0.0
    %3034 = vmatpush1.msra.mxu0 0.0
    %3035 = vmatprep.subr.mxu0 0.0
    %3036 = vmatpush1.msra.mxu0 0.0
    %3037 = vmatprep.subr.mxu0 0.0
    %3038 = vmatpush1.msra.mxu0 0.0
    %3039 = vmatprep.subr.mxu0 0.0
    %3040 = vmatpush1.msra.mxu0 0.0
    %3041 = vmatprep.subr.mxu0 0.0
    %3042 = vmatpush1.msra.mxu0 0.0
    %3043 = vmatprep.subr.mxu0 0.0
    %3044 = vmatpush1.msra.mxu0 0.0
    %3045 = vmatprep.subr.mxu0 0.0
    %3046 = vmatpush1.msra.mxu0 0.0
    %3047 = vmatprep.subr.mxu0 0.0
    %3048 = vmatpush1.msra.mxu0 0.0
    %3049 = vmatprep.subr.mxu0 0.0
    %3050 = vmatpush1.msra.mxu0 0.0
    %3051 = vmatprep.subr.mxu0 0.0
    %3052 = vmatpush1.msra.mxu0 0.0
    %3053 = vmatprep.subr.mxu0 0.0
    %3054 = vmatpush1.msra.mxu0 0.0
    %3055 = vmatprep.subr.mxu0 0.0
    %3056 = vmatpush1.msra.mxu0 0.0
    %3057 = vmatprep.subr.mxu0 0.0
    %3058 = vmatpush1.msra.mxu0 %v2558
    %3059 = vmatprep.subr.mxu0 0.0
    %3060 = vmatpush1.msra.mxu0 %v2550
    %3061 = vmatprep.subr.mxu0 0.0
    %3062 = vmatpush2.msra.mxu0 0.0
    %3063 = vmatprep.subr.mxu0 0.0
    %3064 = vmatpush2.msra.mxu0 0.0
    %3065 = vmatprep.subr.mxu0 0.0
    %3066 = vmatpush2.msra.mxu0 0.0
    %3067 = vmatprep.subr.mxu0 0.0
    %3068 = vmatpush2.msra.mxu0 0.0
    %3069 = vmatprep.subr.mxu0 0.0
    %3070 = vmatpush2.msra.mxu0 0.0
    %3071 = vmatprep.subr.mxu0 0.0
    %3072 = vmatpush2.msra.mxu0 0.0
    %3073 = vmatprep.subr.mxu0 0.0
    %3074 = vmatpush2.msra.mxu0 0.0
    %3075 = vmatprep.subr.mxu0 0.0
    %3076 = vmatpush2.msra.mxu0 0.0
    %3077 = vmatprep.subr.mxu0 0.0
    %3078 = vmatpush2.msra.mxu0 0.0
    %3079 = vmatprep.subr.mxu0 0.0
    %3080 = vmatpush2.msra.mxu0 0.0
    %3081 = vmatprep.subr.mxu0 0.0
    %3082 = vmatpush2.msra.mxu0 0.0
    %3083 = vmatprep.subr.mxu0 0.0
    %3084 = vmatpush2.msra.mxu0 0.0
    %3085 = vmatprep.subr.mxu0 0.0
    %3086 = vmatpush2.msra.mxu0 0.0
    %3087 = vmatprep.subr.mxu0 0.0
    %3088 = vmatpush2.msra.mxu0 0.0
    %3089 = vmatprep.subr.mxu0 0.0
    %3090 = vmatpush2.msra.mxu0 0.0
    %3091 = vmatprep.subr.mxu0 0.0
    %3092 = vmatpush2.msra.mxu0 0.0
    %3093 = vmatprep.mubr.f32.mxu0 0.0
    %3094 = vmatmul.mubr.f32.gmra.mxu0 %v3027
    %v3095 = vpop.f32.mrf.mxu0
    %v3096 = vadd.f32 0.0, %v3095
    %v3097 = vpop.f32.mrf.mxu0
    %3098 = vdwg.mxu0
    %s3099 = scalar_lea.vmem %s8, 96
    %v3100 = vld [vmem:[%s3099] sm:$0xff]
    %v3101 = vld [vmem:[%s3099 + $0x8] sm:$0xff]
    %v3102 = vld [vmem:[%s3099 + $0x10] sm:$0xff]
    %v3103 = vld [vmem:[%s3099 + $0x18] sm:$0xf]
    %v3105 = vsel %vm2714, %v3096, 0
    %v3108 = vsel %vm2201, %v3103, 0
    %3110 = vmatprep.subr.mxu0 0.0
    %3111 = vmatpush1.msra.mxu0 0.0
    %3112 = vmatprep.subr.mxu0 0.0
    %3113 = vmatpush1.msra.mxu0 0.0
    %3114 = vmatprep.subr.mxu0 0.0
    %3115 = vmatpush1.msra.mxu0 0.0
    %3116 = vmatprep.subr.mxu0 0.0
    %3117 = vmatpush1.msra.mxu0 0.0
    %3118 = vmatprep.subr.mxu0 0.0
    %3119 = vmatpush1.msra.mxu0 0.0
    %3120 = vmatprep.subr.mxu0 0.0
    %3121 = vmatpush1.msra.mxu0 0.0
    %3122 = vmatprep.subr.mxu0 0.0
    %3123 = vmatpush1.msra.mxu0 0.0
    %3124 = vmatprep.subr.mxu0 0.0
    %3125 = vmatpush1.msra.mxu0 0.0
    %3126 = vmatprep.subr.mxu0 0.0
    %3127 = vmatpush1.msra.mxu0 0.0
    %3128 = vmatprep.subr.mxu0 0.0
    %3129 = vmatpush1.msra.mxu0 0.0
    %3130 = vmatprep.subr.mxu0 0.0
    %3131 = vmatpush1.msra.mxu0 0.0
    %3132 = vmatprep.subr.mxu0 0.0
    %3133 = vmatpush1.msra.mxu0 0.0
    %3134 = vmatprep.subr.mxu0 0.0
    %3135 = vmatpush1.msra.mxu0 %v3108
    %3136 = vmatprep.subr.mxu0 0.0
    %3137 = vmatpush1.msra.mxu0 %v3102
    %3138 = vmatprep.subr.mxu0 0.0
    %3139 = vmatpush1.msra.mxu0 %v3101
    %3140 = vmatprep.subr.mxu0 0.0
    %3141 = vmatpush1.msra.mxu0 %v3100
    %3142 = vmatprep.subr.mxu0 0.0
    %3143 = vmatpush2.msra.mxu0 0.0
    %3144 = vmatprep.subr.mxu0 0.0
    %3145 = vmatpush2.msra.mxu0 0.0
    %3146 = vmatprep.subr.mxu0 0.0
    %3147 = vmatpush2.msra.mxu0 0.0
    %3148 = vmatprep.subr.mxu0 0.0
    %3149 = vmatpush2.msra.mxu0 0.0
    %3150 = vmatprep.subr.mxu0 0.0
    %3151 = vmatpush2.msra.mxu0 0.0
    %3152 = vmatprep.subr.mxu0 0.0
    %3153 = vmatpush2.msra.mxu0 0.0
    %3154 = vmatprep.subr.mxu0 0.0
    %3155 = vmatpush2.msra.mxu0 0.0
    %3156 = vmatprep.subr.mxu0 0.0
    %3157 = vmatpush2.msra.mxu0 0.0
    %3158 = vmatprep.subr.mxu0 0.0
    %3159 = vmatpush2.msra.mxu0 0.0
    %3160 = vmatprep.subr.mxu0 0.0
    %3161 = vmatpush2.msra.mxu0 0.0
    %3162 = vmatprep.subr.mxu0 0.0
    %3163 = vmatpush2.msra.mxu0 0.0
    %3164 = vmatprep.subr.mxu0 0.0
    %3165 = vmatpush2.msra.mxu0 0.0
    %3166 = vmatprep.subr.mxu0 0.0
    %3167 = vmatpush2.msra.mxu0 0.0
    %3168 = vmatprep.subr.mxu0 0.0
    %3169 = vmatpush2.msra.mxu0 0.0
    %3170 = vmatprep.subr.mxu0 0.0
    %3171 = vmatpush2.msra.mxu0 0.0
    %3172 = vmatprep.subr.mxu0 0.0
    %3173 = vmatpush2.msra.mxu0 0.0
    %3174 = vmatprep.mubr.f32.mxu0 0.0
    %3175 = vmatmul.mubr.f32.gmra.mxu0 %v3105
    %v3176 = vpop.f32.mrf.mxu0
    %v3177 = vadd.f32 0.0, %v3176
    %v3178 = vpop.f32.mrf.mxu0
    %3179 = vdwg.mxu0
    %v3180 = vadd.f32 %v3023, %v3177
    %s3181 = scalar_lea.vmem [#allocation5], 8
    %v3182 = vld [vmem:[%s3181] sm:$0x3]
    %v3184 = vsel %vm2553, %v3182, 0
    %3186 = vmatprep.subr.mxu0 0.0
    %3187 = vmatpush1.msra.mxu0 0.0
    %3188 = vmatprep.subr.mxu0 0.0
    %3189 = vmatpush1.msra.mxu0 0.0
    %3190 = vmatprep.subr.mxu0 0.0
    %3191 = vmatpush1.msra.mxu0 0.0
    %3192 = vmatprep.subr.mxu0 0.0
    %3193 = vmatpush1.msra.mxu0 0.0
    %3194 = vmatprep.subr.mxu0 0.0
    %3195 = vmatpush1.msra.mxu0 0.0
    %3196 = vmatprep.subr.mxu0 0.0
    %3197 = vmatpush1.msra.mxu0 0.0
    %3198 = vmatprep.subr.mxu0 0.0
    %3199 = vmatpush1.msra.mxu0 0.0
    %3200 = vmatprep.subr.mxu0 0.0
    %3201 = vmatpush1.msra.mxu0 0.0
    %3202 = vmatprep.subr.mxu0 0.0
    %3203 = vmatpush1.msra.mxu0 0.0
    %3204 = vmatprep.subr.mxu0 0.0
    %3205 = vmatpush1.msra.mxu0 0.0
    %3206 = vmatprep.subr.mxu0 0.0
    %3207 = vmatpush1.msra.mxu0 0.0
    %3208 = vmatprep.subr.mxu0 0.0
    %3209 = vmatpush1.msra.mxu0 0.0
    %3210 = vmatprep.subr.mxu0 0.0
    %3211 = vmatpush1.msra.mxu0 0.0
    %3212 = vmatprep.subr.mxu0 0.0
    %3213 = vmatpush1.msra.mxu0 0.0
    %3214 = vmatprep.subr.mxu0 0.0
    %3215 = vmatpush1.msra.mxu0 %v2558
    %3216 = vmatprep.subr.mxu0 0.0
    %3217 = vmatpush1.msra.mxu0 %v2550
    %3218 = vmatprep.subr.mxu0 0.0
    %3219 = vmatpush2.msra.mxu0 0.0
    %3220 = vmatprep.subr.mxu0 0.0
    %3221 = vmatpush2.msra.mxu0 0.0
    %3222 = vmatprep.subr.mxu0 0.0
    %3223 = vmatpush2.msra.mxu0 0.0
    %3224 = vmatprep.subr.mxu0 0.0
    %3225 = vmatpush2.msra.mxu0 0.0
    %3226 = vmatprep.subr.mxu0 0.0
    %3227 = vmatpush2.msra.mxu0 0.0
    %3228 = vmatprep.subr.mxu0 0.0
    %3229 = vmatpush2.msra.mxu0 0.0
    %3230 = vmatprep.subr.mxu0 0.0
    %3231 = vmatpush2.msra.mxu0 0.0
    %3232 = vmatprep.subr.mxu0 0.0
    %3233 = vmatpush2.msra.mxu0 0.0
    %3234 = vmatprep.subr.mxu0 0.0
    %3235 = vmatpush2.msra.mxu0 0.0
    %3236 = vmatprep.subr.mxu0 0.0
    %3237 = vmatpush2.msra.mxu0 0.0
    %3238 = vmatprep.subr.mxu0 0.0
    %3239 = vmatpush2.msra.mxu0 0.0
    %3240 = vmatprep.subr.mxu0 0.0
    %3241 = vmatpush2.msra.mxu0 0.0
    %3242 = vmatprep.subr.mxu0 0.0
    %3243 = vmatpush2.msra.mxu0 0.0
    %3244 = vmatprep.subr.mxu0 0.0
    %3245 = vmatpush2.msra.mxu0 0.0
    %3246 = vmatprep.subr.mxu0 0.0
    %3247 = vmatpush2.msra.mxu0 0.0
    %3248 = vmatprep.subr.mxu0 0.0
    %3249 = vmatpush2.msra.mxu0 0.0
    %3250 = vmatprep.mubr.f32.mxu0 0.0
    %3251 = vmatmul.mubr.f32.gmra.mxu0 %v3184
    %v3252 = vpop.f32.mrf.mxu0
    %v3253 = vadd.f32 0.0, %v3252
    %v3254 = vpop.f32.mrf.mxu0
    %3255 = vdwg.mxu0
    %s3256 = scalar_lea.vmem %s8, 128
    %v3257 = vld [vmem:[%s3256] sm:$0xff]
    %v3258 = vld [vmem:[%s3256 + $0x8] sm:$0xff]
    %v3259 = vld [vmem:[%s3256 + $0x10] sm:$0xff]
    %v3260 = vld [vmem:[%s3256 + $0x18] sm:$0xf]
    %v3262 = vsel %vm2714, %v3253, 0
    %v3265 = vsel %vm2201, %v3260, 0
    %3267 = vmatprep.subr.mxu0 0.0
    %3268 = vmatpush1.msra.mxu0 0.0
    %3269 = vmatprep.subr.mxu0 0.0
    %3270 = vmatpush1.msra.mxu0 0.0
    %3271 = vmatprep.subr.mxu0 0.0
    %3272 = vmatpush1.msra.mxu0 0.0
    %3273 = vmatprep.subr.mxu0 0.0
    %3274 = vmatpush1.msra.mxu0 0.0
    %3275 = vmatprep.subr.mxu0 0.0
    %3276 = vmatpush1.msra.mxu0 0.0
    %3277 = vmatprep.subr.mxu0 0.0
    %3278 = vmatpush1.msra.mxu0 0.0
    %3279 = vmatprep.subr.mxu0 0.0
    %3280 = vmatpush1.msra.mxu0 0.0
    %3281 = vmatprep.subr.mxu0 0.0
    %3282 = vmatpush1.msra.mxu0 0.0
    %3283 = vmatprep.subr.mxu0 0.0
    %3284 = vmatpush1.msra.mxu0 0.0
    %3285 = vmatprep.subr.mxu0 0.0
    %3286 = vmatpush1.msra.mxu0 0.0
    %3287 = vmatprep.subr.mxu0 0.0
    %3288 = vmatpush1.msra.mxu0 0.0
    %3289 = vmatprep.subr.mxu0 0.0
    %3290 = vmatpush1.msra.mxu0 0.0
    %3291 = vmatprep.subr.mxu0 0.0
    %3292 = vmatpush1.msra.mxu0 %v3265
    %3293 = vmatprep.subr.mxu0 0.0
    %3294 = vmatpush1.msra.mxu0 %v3259
    %3295 = vmatprep.subr.mxu0 0.0
    %3296 = vmatpush1.msra.mxu0 %v3258
    %3297 = vmatprep.subr.mxu0 0.0
    %3298 = vmatpush1.msra.mxu0 %v3257
    %3299 = vmatprep.subr.mxu0 0.0
    %3300 = vmatpush2.msra.mxu0 0.0
    %3301 = vmatprep.subr.mxu0 0.0
    %3302 = vmatpush2.msra.mxu0 0.0
    %3303 = vmatprep.subr.mxu0 0.0
    %3304 = vmatpush2.msra.mxu0 0.0
    %3305 = vmatprep.subr.mxu0 0.0
    %3306 = vmatpush2.msra.mxu0 0.0
    %3307 = vmatprep.subr.mxu0 0.0
    %3308 = vmatpush2.msra.mxu0 0.0
    %3309 = vmatprep.subr.mxu0 0.0
    %3310 = vmatpush2.msra.mxu0 0.0
    %3311 = vmatprep.subr.mxu0 0.0
    %3312 = vmatpush2.msra.mxu0 0.0
    %3313 = vmatprep.subr.mxu0 0.0
    %3314 = vmatpush2.msra.mxu0 0.0
    %3315 = vmatprep.subr.mxu0 0.0
    %3316 = vmatpush2.msra.mxu0 0.0
    %3317 = vmatprep.subr.mxu0 0.0
    %3318 = vmatpush2.msra.mxu0 0.0
    %3319 = vmatprep.subr.mxu0 0.0
    %3320 = vmatpush2.msra.mxu0 0.0
    %3321 = vmatprep.subr.mxu0 0.0
    %3322 = vmatpush2.msra.mxu0 0.0
    %3323 = vmatprep.subr.mxu0 0.0
    %3324 = vmatpush2.msra.mxu0 0.0
    %3325 = vmatprep.subr.mxu0 0.0
    %3326 = vmatpush2.msra.mxu0 0.0
    %3327 = vmatprep.subr.mxu0 0.0
    %3328 = vmatpush2.msra.mxu0 0.0
    %3329 = vmatprep.subr.mxu0 0.0
    %3330 = vmatpush2.msra.mxu0 0.0
    %3331 = vmatprep.mubr.f32.mxu0 0.0
    %3332 = vmatmul.mubr.f32.gmra.mxu0 %v3262
    %v3333 = vpop.f32.mrf.mxu0
    %v3334 = vadd.f32 0.0, %v3333
    %v3335 = vpop.f32.mrf.mxu0
    %3336 = vdwg.mxu0
    %v3337 = vadd.f32 %v3180, %v3334
    %s3338 = scalar_lea.vmem [#allocation5], 10
    %v3339 = vld [vmem:[%s3338] sm:$0x3]
    %v3341 = vsel %vm2553, %v3339, 0
    %3343 = vmatprep.subr.mxu0 0.0
    %3344 = vmatpush1.msra.mxu0 0.0
    %3345 = vmatprep.subr.mxu0 0.0
    %3346 = vmatpush1.msra.mxu0 0.0
    %3347 = vmatprep.subr.mxu0 0.0
    %3348 = vmatpush1.msra.mxu0 0.0
    %3349 = vmatprep.subr.mxu0 0.0
    %3350 = vmatpush1.msra.mxu0 0.0
    %3351 = vmatprep.subr.mxu0 0.0
    %3352 = vmatpush1.msra.mxu0 0.0
    %3353 = vmatprep.subr.mxu0 0.0
    %3354 = vmatpush1.msra.mxu0 0.0
    %3355 = vmatprep.subr.mxu0 0.0
    %3356 = vmatpush1.msra.mxu0 0.0
    %3357 = vmatprep.subr.mxu0 0.0
    %3358 = vmatpush1.msra.mxu0 0.0
    %3359 = vmatprep.subr.mxu0 0.0
    %3360 = vmatpush1.msra.mxu0 0.0
    %3361 = vmatprep.subr.mxu0 0.0
    %3362 = vmatpush1.msra.mxu0 0.0
    %3363 = vmatprep.subr.mxu0 0.0
    %3364 = vmatpush1.msra.mxu0 0.0
    %3365 = vmatprep.subr.mxu0 0.0
    %3366 = vmatpush1.msra.mxu0 0.0
    %3367 = vmatprep.subr.mxu0 0.0
    %3368 = vmatpush1.msra.mxu0 0.0
    %3369 = vmatprep.subr.mxu0 0.0
    %3370 = vmatpush1.msra.mxu0 0.0
    %3371 = vmatprep.subr.mxu0 0.0
    %3372 = vmatpush1.msra.mxu0 %v2558
    %3373 = vmatprep.subr.mxu0 0.0
    %3374 = vmatpush1.msra.mxu0 %v2550
    %3375 = vmatprep.subr.mxu0 0.0
    %3376 = vmatpush2.msra.mxu0 0.0
    %3377 = vmatprep.subr.mxu0 0.0
    %3378 = vmatpush2.msra.mxu0 0.0
    %3379 = vmatprep.subr.mxu0 0.0
    %3380 = vmatpush2.msra.mxu0 0.0
    %3381 = vmatprep.subr.mxu0 0.0
    %3382 = vmatpush2.msra.mxu0 0.0
    %3383 = vmatprep.subr.mxu0 0.0
    %3384 = vmatpush2.msra.mxu0 0.0
    %3385 = vmatprep.subr.mxu0 0.0
    %3386 = vmatpush2.msra.mxu0 0.0
    %3387 = vmatprep.subr.mxu0 0.0
    %3388 = vmatpush2.msra.mxu0 0.0
    %3389 = vmatprep.subr.mxu0 0.0
    %3390 = vmatpush2.msra.mxu0 0.0
    %3391 = vmatprep.subr.mxu0 0.0
    %3392 = vmatpush2.msra.mxu0 0.0
    %3393 = vmatprep.subr.mxu0 0.0
    %3394 = vmatpush2.msra.mxu0 0.0
    %3395 = vmatprep.subr.mxu0 0.0
    %3396 = vmatpush2.msra.mxu0 0.0
    %3397 = vmatprep.subr.mxu0 0.0
    %3398 = vmatpush2.msra.mxu0 0.0
    %3399 = vmatprep.subr.mxu0 0.0
    %3400 = vmatpush2.msra.mxu0 0.0
    %3401 = vmatprep.subr.mxu0 0.0
    %3402 = vmatpush2.msra.mxu0 0.0
    %3403 = vmatprep.subr.mxu0 0.0
    %3404 = vmatpush2.msra.mxu0 0.0
    %3405 = vmatprep.subr.mxu0 0.0
    %3406 = vmatpush2.msra.mxu0 0.0
    %3407 = vmatprep.mubr.f32.mxu0 0.0
    %3408 = vmatmul.mubr.f32.gmra.mxu0 %v3341
    %v3409 = vpop.f32.mrf.mxu0
    %v3410 = vadd.f32 0.0, %v3409
    %v3411 = vpop.f32.mrf.mxu0
    %3412 = vdwg.mxu0
    %s3413 = scalar_lea.vmem %s8, 160
    %v3414 = vld [vmem:[%s3413] sm:$0xff]
    %v3415 = vld [vmem:[%s3413 + $0x8] sm:$0xff]
    %v3416 = vld [vmem:[%s3413 + $0x10] sm:$0xff]
    %v3417 = vld [vmem:[%s3413 + $0x18] sm:$0xf]
    %v3419 = vsel %vm2714, %v3410, 0
    %v3422 = vsel %vm2201, %v3417, 0
    %3424 = vmatprep.subr.mxu0 0.0
    %3425 = vmatpush1.msra.mxu0 0.0
    %3426 = vmatprep.subr.mxu0 0.0
    %3427 = vmatpush1.msra.mxu0 0.0
    %3428 = vmatprep.subr.mxu0 0.0
    %3429 = vmatpush1.msra.mxu0 0.0
    %3430 = vmatprep.subr.mxu0 0.0
    %3431 = vmatpush1.msra.mxu0 0.0
    %3432 = vmatprep.subr.mxu0 0.0
    %3433 = vmatpush1.msra.mxu0 0.0
    %3434 = vmatprep.subr.mxu0 0.0
    %3435 = vmatpush1.msra.mxu0 0.0
    %3436 = vmatprep.subr.mxu0 0.0
    %3437 = vmatpush1.msra.mxu0 0.0
    %3438 = vmatprep.subr.mxu0 0.0
    %3439 = vmatpush1.msra.mxu0 0.0
    %3440 = vmatprep.subr.mxu0 0.0
    %3441 = vmatpush1.msra.mxu0 0.0
    %3442 = vmatprep.subr.mxu0 0.0
    %3443 = vmatpush1.msra.mxu0 0.0
    %3444 = vmatprep.subr.mxu0 0.0
    %3445 = vmatpush1.msra.mxu0 0.0
    %3446 = vmatprep.subr.mxu0 0.0
    %3447 = vmatpush1.msra.mxu0 0.0
    %3448 = vmatprep.subr.mxu0 0.0
    %3449 = vmatpush1.msra.mxu0 %v3422
    %3450 = vmatprep.subr.mxu0 0.0
    %3451 = vmatpush1.msra.mxu0 %v3416
    %3452 = vmatprep.subr.mxu0 0.0
    %3453 = vmatpush1.msra.mxu0 %v3415
    %3454 = vmatprep.subr.mxu0 0.0
    %3455 = vmatpush1.msra.mxu0 %v3414
    %3456 = vmatprep.subr.mxu0 0.0
    %3457 = vmatpush2.msra.mxu0 0.0
    %3458 = vmatprep.subr.mxu0 0.0
    %3459 = vmatpush2.msra.mxu0 0.0
    %3460 = vmatprep.subr.mxu0 0.0
    %3461 = vmatpush2.msra.mxu0 0.0
    %3462 = vmatprep.subr.mxu0 0.0
    %3463 = vmatpush2.msra.mxu0 0.0
    %3464 = vmatprep.subr.mxu0 0.0
    %3465 = vmatpush2.msra.mxu0 0.0
    %3466 = vmatprep.subr.mxu0 0.0
    %3467 = vmatpush2.msra.mxu0 0.0
    %3468 = vmatprep.subr.mxu0 0.0
    %3469 = vmatpush2.msra.mxu0 0.0
    %3470 = vmatprep.subr.mxu0 0.0
    %3471 = vmatpush2.msra.mxu0 0.0
    %3472 = vmatprep.subr.mxu0 0.0
    %3473 = vmatpush2.msra.mxu0 0.0
    %3474 = vmatprep.subr.mxu0 0.0
    %3475 = vmatpush2.msra.mxu0 0.0
    %3476 = vmatprep.subr.mxu0 0.0
    %3477 = vmatpush2.msra.mxu0 0.0
    %3478 = vmatprep.subr.mxu0 0.0
    %3479 = vmatpush2.msra.mxu0 0.0
    %3480 = vmatprep.subr.mxu0 0.0
    %3481 = vmatpush2.msra.mxu0 0.0
    %3482 = vmatprep.subr.mxu0 0.0
    %3483 = vmatpush2.msra.mxu0 0.0
    %3484 = vmatprep.subr.mxu0 0.0
    %3485 = vmatpush2.msra.mxu0 0.0
    %3486 = vmatprep.subr.mxu0 0.0
    %3487 = vmatpush2.msra.mxu0 0.0
    %3488 = vmatprep.mubr.f32.mxu0 0.0
    %3489 = vmatmul.mubr.f32.gmra.mxu0 %v3419
    %v3490 = vpop.f32.mrf.mxu0
    %v3491 = vadd.f32 0.0, %v3490
    %v3492 = vpop.f32.mrf.mxu0
    %3493 = vdwg.mxu0
    %v3494 = vadd.f32 %v3337, %v3491
    %s3495 = scalar_lea.vmem [#allocation5], 12
    %v3496 = vld [vmem:[%s3495] sm:$0x3]
    %v3498 = vsel %vm2553, %v3496, 0
    %3500 = vmatprep.subr.mxu0 0.0
    %3501 = vmatpush1.msra.mxu0 0.0
    %3502 = vmatprep.subr.mxu0 0.0
    %3503 = vmatpush1.msra.mxu0 0.0
    %3504 = vmatprep.subr.mxu0 0.0
    %3505 = vmatpush1.msra.mxu0 0.0
    %3506 = vmatprep.subr.mxu0 0.0
    %3507 = vmatpush1.msra.mxu0 0.0
    %3508 = vmatprep.subr.mxu0 0.0
    %3509 = vmatpush1.msra.mxu0 0.0
    %3510 = vmatprep.subr.mxu0 0.0
    %3511 = vmatpush1.msra.mxu0 0.0
    %3512 = vmatprep.subr.mxu0 0.0
    %3513 = vmatpush1.msra.mxu0 0.0
    %3514 = vmatprep.subr.mxu0 0.0
    %3515 = vmatpush1.msra.mxu0 0.0
    %3516 = vmatprep.subr.mxu0 0.0
    %3517 = vmatpush1.msra.mxu0 0.0
    %3518 = vmatprep.subr.mxu0 0.0
    %3519 = vmatpush1.msra.mxu0 0.0
    %3520 = vmatprep.subr.mxu0 0.0
    %3521 = vmatpush1.msra.mxu0 0.0
    %3522 = vmatprep.subr.mxu0 0.0
    %3523 = vmatpush1.msra.mxu0 0.0
    %3524 = vmatprep.subr.mxu0 0.0
    %3525 = vmatpush1.msra.mxu0 0.0
    %3526 = vmatprep.subr.mxu0 0.0
    %3527 = vmatpush1.msra.mxu0 0.0
    %3528 = vmatprep.subr.mxu0 0.0
    %3529 = vmatpush1.msra.mxu0 %v2558
    %3530 = vmatprep.subr.mxu0 0.0
    %3531 = vmatpush1.msra.mxu0 %v2550
    %3532 = vmatprep.subr.mxu0 0.0
    %3533 = vmatpush2.msra.mxu0 0.0
    %3534 = vmatprep.subr.mxu0 0.0
    %3535 = vmatpush2.msra.mxu0 0.0
    %3536 = vmatprep.subr.mxu0 0.0
    %3537 = vmatpush2.msra.mxu0 0.0
    %3538 = vmatprep.subr.mxu0 0.0
    %3539 = vmatpush2.msra.mxu0 0.0
    %3540 = vmatprep.subr.mxu0 0.0
    %3541 = vmatpush2.msra.mxu0 0.0
    %3542 = vmatprep.subr.mxu0 0.0
    %3543 = vmatpush2.msra.mxu0 0.0
    %3544 = vmatprep.subr.mxu0 0.0
    %3545 = vmatpush2.msra.mxu0 0.0
    %3546 = vmatprep.subr.mxu0 0.0
    %3547 = vmatpush2.msra.mxu0 0.0
    %3548 = vmatprep.subr.mxu0 0.0
    %3549 = vmatpush2.msra.mxu0 0.0
    %3550 = vmatprep.subr.mxu0 0.0
    %3551 = vmatpush2.msra.mxu0 0.0
    %3552 = vmatprep.subr.mxu0 0.0
    %3553 = vmatpush2.msra.mxu0 0.0
    %3554 = vmatprep.subr.mxu0 0.0
    %3555 = vmatpush2.msra.mxu0 0.0
    %3556 = vmatprep.subr.mxu0 0.0
    %3557 = vmatpush2.msra.mxu0 0.0
    %3558 = vmatprep.subr.mxu0 0.0
    %3559 = vmatpush2.msra.mxu0 0.0
    %3560 = vmatprep.subr.mxu0 0.0
    %3561 = vmatpush2.msra.mxu0 0.0
    %3562 = vmatprep.subr.mxu0 0.0
    %3563 = vmatpush2.msra.mxu0 0.0
    %3564 = vmatprep.mubr.f32.mxu0 0.0
    %3565 = vmatmul.mubr.f32.gmra.mxu0 %v3498
    %v3566 = vpop.f32.mrf.mxu0
    %v3567 = vadd.f32 0.0, %v3566
    %v3568 = vpop.f32.mrf.mxu0
    %3569 = vdwg.mxu0
    %s3570 = scalar_lea.vmem %s8, 192
    %v3571 = vld [vmem:[%s3570] sm:$0xff]
    %v3572 = vld [vmem:[%s3570 + $0x8] sm:$0xff]
    %v3573 = vld [vmem:[%s3570 + $0x10] sm:$0xff]
    %v3574 = vld [vmem:[%s3570 + $0x18] sm:$0xf]
    %v3576 = vsel %vm2714, %v3567, 0
    %v3579 = vsel %vm2201, %v3574, 0
    %3581 = vmatprep.subr.mxu0 0.0
    %3582 = vmatpush1.msra.mxu0 0.0
    %3583 = vmatprep.subr.mxu0 0.0
    %3584 = vmatpush1.msra.mxu0 0.0
    %3585 = vmatprep.subr.mxu0 0.0
    %3586 = vmatpush1.msra.mxu0 0.0
    %3587 = vmatprep.subr.mxu0 0.0
    %3588 = vmatpush1.msra.mxu0 0.0
    %3589 = vmatprep.subr.mxu0 0.0
    %3590 = vmatpush1.msra.mxu0 0.0
    %3591 = vmatprep.subr.mxu0 0.0
    %3592 = vmatpush1.msra.mxu0 0.0
    %3593 = vmatprep.subr.mxu0 0.0
    %3594 = vmatpush1.msra.mxu0 0.0
    %3595 = vmatprep.subr.mxu0 0.0
    %3596 = vmatpush1.msra.mxu0 0.0
    %3597 = vmatprep.subr.mxu0 0.0
    %3598 = vmatpush1.msra.mxu0 0.0
    %3599 = vmatprep.subr.mxu0 0.0
    %3600 = vmatpush1.msra.mxu0 0.0
    %3601 = vmatprep.subr.mxu0 0.0
    %3602 = vmatpush1.msra.mxu0 0.0
    %3603 = vmatprep.subr.mxu0 0.0
    %3604 = vmatpush1.msra.mxu0 0.0
    %3605 = vmatprep.subr.mxu0 0.0
    %3606 = vmatpush1.msra.mxu0 %v3579
    %3607 = vmatprep.subr.mxu0 0.0
    %3608 = vmatpush1.msra.mxu0 %v3573
    %3609 = vmatprep.subr.mxu0 0.0
    %3610 = vmatpush1.msra.mxu0 %v3572
    %3611 = vmatprep.subr.mxu0 0.0
    %3612 = vmatpush1.msra.mxu0 %v3571
    %3613 = vmatprep.subr.mxu0 0.0
    %3614 = vmatpush2.msra.mxu0 0.0
    %3615 = vmatprep.subr.mxu0 0.0
    %3616 = vmatpush2.msra.mxu0 0.0
    %3617 = vmatprep.subr.mxu0 0.0
    %3618 = vmatpush2.msra.mxu0 0.0
    %3619 = vmatprep.subr.mxu0 0.0
    %3620 = vmatpush2.msra.mxu0 0.0
    %3621 = vmatprep.subr.mxu0 0.0
    %3622 = vmatpush2.msra.mxu0 0.0
    %3623 = vmatprep.subr.mxu0 0.0
    %3624 = vmatpush2.msra.mxu0 0.0
    %3625 = vmatprep.subr.mxu0 0.0
    %3626 = vmatpush2.msra.mxu0 0.0
    %3627 = vmatprep.subr.mxu0 0.0
    %3628 = vmatpush2.msra.mxu0 0.0
    %3629 = vmatprep.subr.mxu0 0.0
    %3630 = vmatpush2.msra.mxu0 0.0
    %3631 = vmatprep.subr.mxu0 0.0
    %3632 = vmatpush2.msra.mxu0 0.0
    %3633 = vmatprep.subr.mxu0 0.0
    %3634 = vmatpush2.msra.mxu0 0.0
    %3635 = vmatprep.subr.mxu0 0.0
    %3636 = vmatpush2.msra.mxu0 0.0
    %3637 = vmatprep.subr.mxu0 0.0
    %3638 = vmatpush2.msra.mxu0 0.0
    %3639 = vmatprep.subr.mxu0 0.0
    %3640 = vmatpush2.msra.mxu0 0.0
    %3641 = vmatprep.subr.mxu0 0.0
    %3642 = vmatpush2.msra.mxu0 0.0
    %3643 = vmatprep.subr.mxu0 0.0
    %3644 = vmatpush2.msra.mxu0 0.0
    %3645 = vmatprep.mubr.f32.mxu0 0.0
    %3646 = vmatmul.mubr.f32.gmra.mxu0 %v3576
    %v3647 = vpop.f32.mrf.mxu0
    %v3648 = vadd.f32 0.0, %v3647
    %v3649 = vpop.f32.mrf.mxu0
    %3650 = vdwg.mxu0
    %v3651 = vadd.f32 %v3494, %v3648
    %v3652 = vld [vmem:[%s9] sm:$0x1]
    %v3654 = vlaneseq
    %v3655 = vshrl.u32 %v3654, 7
    %v3656 = vsub.s32 0, %v3655
    %v3657 = vrot.slane %v3652, %v3656
    %v3659 = vadd.f32 %v3651, %v3657
    %v3660 = vmax.f32 %v3659, 0.0
    %v3661 = vld [vmem:[%s10] sm:$0xff]
    %v3662 = vld [vmem:[%s10 + $0x8] sm:$0xff]
    %v3663 = vld [vmem:[%s10 + $0x10] sm:$0xf]
    %v3664 = vld [vmem:[%s11] sm:$0x1]
    %v3666 = vlaneseq
    %v3667 = vshrl.u32 %v3666, 7
    %v3668 = vsub.s32 0, %v3667
    %v3669 = vrot.slane %v3664, %v3668
    %vm3671 = vcmask 162816
    %v3673 = vsel %vm3671, %v3660, 0
    %v3676 = vsel %vm2201, %v3663, 0
    %3678 = vmatprep.subr.mxu0 0.0
    %3679 = vmatpush1.msra.mxu0 0.0
    %3680 = vmatprep.subr.mxu0 0.0
    %3681 = vmatpush1.msra.mxu0 0.0
    %3682 = vmatprep.subr.mxu0 0.0
    %3683 = vmatpush1.msra.mxu0 0.0
    %3684 = vmatprep.subr.mxu0 0.0
    %3685 = vmatpush1.msra.mxu0 0.0
    %3686 = vmatprep.subr.mxu0 0.0
    %3687 = vmatpush1.msra.mxu0 0.0
    %3688 = vmatprep.subr.mxu0 0.0
    %3689 = vmatpush1.msra.mxu0 0.0
    %3690 = vmatprep.subr.mxu0 0.0
    %3691 = vmatpush1.msra.mxu0 0.0
    %3692 = vmatprep.subr.mxu0 0.0
    %3693 = vmatpush1.msra.mxu0 0.0
    %3694 = vmatprep.subr.mxu0 0.0
    %3695 = vmatpush1.msra.mxu0 0.0
    %3696 = vmatprep.subr.mxu0 0.0
    %3697 = vmatpush1.msra.mxu0 0.0
    %3698 = vmatprep.subr.mxu0 0.0
    %3699 = vmatpush1.msra.mxu0 0.0
    %3700 = vmatprep.subr.mxu0 0.0
    %3701 = vmatpush1.msra.mxu0 0.0
    %3702 = vmatprep.subr.mxu0 0.0
    %3703 = vmatpush1.msra.mxu0 0.0
    %3704 = vmatprep.subr.mxu0 0.0
    %3705 = vmatpush1.msra.mxu0 %v3676
    %3706 = vmatprep.subr.mxu0 0.0
    %3707 = vmatpush1.msra.mxu0 %v3662
    %3708 = vmatprep.subr.mxu0 0.0
    %3709 = vmatpush1.msra.mxu0 %v3661
    %3710 = vmatprep.subr.mxu0 0.0
    %3711 = vmatpush2.msra.mxu0 0.0
    %3712 = vmatprep.subr.mxu0 0.0
    %3713 = vmatpush2.msra.mxu0 0.0
    %3714 = vmatprep.subr.mxu0 0.0
    %3715 = vmatpush2.msra.mxu0 0.0
    %3716 = vmatprep.subr.mxu0 0.0
    %3717 = vmatpush2.msra.mxu0 0.0
    %3718 = vmatprep.subr.mxu0 0.0
    %3719 = vmatpush2.msra.mxu0 0.0
    %3720 = vmatprep.subr.mxu0 0.0
    %3721 = vmatpush2.msra.mxu0 0.0
    %3722 = vmatprep.subr.mxu0 0.0
    %3723 = vmatpush2.msra.mxu0 0.0
    %3724 = vmatprep.subr.mxu0 0.0
    %3725 = vmatpush2.msra.mxu0 0.0
    %3726 = vmatprep.subr.mxu0 0.0
    %3727 = vmatpush2.msra.mxu0 0.0
    %3728 = vmatprep.subr.mxu0 0.0
    %3729 = vmatpush2.msra.mxu0 0.0
    %3730 = vmatprep.subr.mxu0 0.0
    %3731 = vmatpush2.msra.mxu0 0.0
    %3732 = vmatprep.subr.mxu0 0.0
    %3733 = vmatpush2.msra.mxu0 0.0
    %3734 = vmatprep.subr.mxu0 0.0
    %3735 = vmatpush2.msra.mxu0 0.0
    %3736 = vmatprep.subr.mxu0 0.0
    %3737 = vmatpush2.msra.mxu0 0.0
    %3738 = vmatprep.subr.mxu0 0.0
    %3739 = vmatpush2.msra.mxu0 0.0
    %3740 = vmatprep.subr.mxu0 0.0
    %3741 = vmatpush2.msra.mxu0 0.0
    %3742 = vmatprep.mubr.f32.mxu0 0.0
    %3743 = vmatmul.mubr.f32.gmra.mxu0 %v3673
    %v3744 = vpop.f32.mrf.mxu0
    %v3745 = vadd.f32 %v3669, %v3744
    %v3746 = vpop.f32.mrf.mxu0
    %3747 = vdwg.mxu0
    %vm3748 = vcmask 74752
    %3749 = vst.msk [vmem:[#allocation7] sm:$0x3] %vm3748, %v3745
    // Predicated region
    $region58: #{tpu_custom_call.1} parent=1 // pred_check
      _
    $region59: #{tpu_custom_call.1} parent=1 // pred_check_branch
      %3751 = sbr.rel (0) target = $region61
    $region60: #{tpu_custom_call.1} parent=1 // pred_region
      %s3753 = ssub.s32 32, 32
      %3754 = vsyncadd [#allocation4], %s3753
      %s3756 = sshll.u32 [#allocation7], 4
      %s3757 = int_to_ptr.vmem [resolvable:$true] %s3756
      %3759 = dma.vmem_to_hbm [thread:$0]  %s3757, 32, %s12, [#allocation4]
    $region61: #{tpu_custom_call.1} parent=1 // pred_fallthru
      _
    // Predicated region
    $region62: #{tpu_custom_call.1} parent=1 // pred_check
      _
    $region63: #{tpu_custom_call.1} parent=1 // pred_check_branch
      %3761 = sbr.rel (0) target = $region65
    $region64: #{tpu_custom_call.1} parent=1 // pred_region
      %3762 = dma.done [#allocation4], 32
    $region65: #{tpu_custom_call.1} parent=1 // pred_fallthru
      _
    %3763 = vsyncpa [#allocation3], 1
    %3764 = vsyncpa [#allocation6], 1
    %3765 = vsyncpa [#allocation4], 1

</llo_original>
